<compile_context>
chip_gen: v7x
topology: tpu7x:2x2x1
jax: 0.10.0
libtpu: 0.0.40
codegen_flags: <defaults>
</compile_context>

<pallas_src>
import jax
import jax.numpy as jnp
from jax.experimental import pallas as pl
from jax.experimental.pallas import tpu as pltpu


def _make_bn_fire_conv_kernel(H, W, KH, KW, PH, PW, HO, WO, cin, cout_tile):
    def kernel(x_ref, mean_ref, scale_ref, beta_ref, w_ref, b_ref,
               o_ref, spad_ref):
        j = pl.program_id(1)          # cout-tile index (inner, "arbitrary")

        # ---- BN(train) + fire, computed once per frame, reused for all cout tiles ----
        @pl.when(j == 0)
        def _():
            x = x_ref[0]                                          # (H, W, cin) f32
            bn = (x - mean_ref[...]) * scale_ref[...] + beta_ref[...]
            spike = (bn > 0.0).astype(jnp.bfloat16)               # exact {0, 1}
            spad_ref[...] = jnp.zeros_like(spad_ref)              # zero padding border
            spad_ref[pl.ds(PH, H), pl.ds(PW, W), :] = spike

        # ---- conv as KH*KW shifted matmuls (bf16 x bf16 -> f32 on the MXU) ----
        acc = jnp.zeros((HO * WO, cout_tile), jnp.float32)
        for kh in range(KH):                                      # static, unrolled
            for kw in range(KW):
                win = spad_ref[pl.ds(kh, HO), pl.ds(kw, WO), :]   # (HO, WO, cin) bf16
                win = win.reshape(HO * WO, cin)                   # layout-preserving (WO % 8 == 0)
                w_k = w_ref[kh * KW + kw]                         # (cout_tile, cin) bf16
                acc = acc + jax.lax.dot_general(
                    win, w_k,
                    dimension_numbers=(((1,), (1,)), ((), ())),   # contract cin with weight dim 1
                    preferred_element_type=jnp.float32)
        o_ref[0] = acc + b_ref[...]
    return kernel


def pack_conv_weight(weight_conv):
    """(cout, cin, KH, KW) f32 -> (KH*KW, cout, cin) bf16.

    Do this ONCE outside the per-step call path (weight-stationary MXU layout,
    halves weight HBM/VMEM traffic)."""
    cout, cin, KH, KW = weight_conv.shape
    w = jnp.transpose(weight_conv, (2, 3, 0, 1)).reshape(KH * KW, cout, cin)
    return w.astype(jnp.bfloat16)


def bn_fire_conv_dist(x, weight_bn, bias_bn, w_packed, bias_conv,
                      running_var, running_mean, *, eps_bn=1e-5,
                      kernel_size=(3, 3), stride=(1, 1), padding=(1, 1),
                      if_bias_conv=True):
    """Fused BN(train, distributed w/ world_size==1) -> fire -> conv2d.

    x: (T, N, cin, H, W) f32 (module's layout).  Returns
    (y (T, N, cout, HO, WO), new_running_var, new_running_mean).
    """
    T, N, cin, H, W = x.shape
    KH, KW = kernel_size
    PH, PW = padding
    taps, cout, cin_w = w_packed.shape
    assert taps == KH * KW and cin_w == cin
    # TODO(synk): general stride needs strided window slices; module default (1,1) implemented.
    assert tuple(stride) == (1, 1), "only stride=(1,1) implemented"
    B = T * N
    HO = H + 2 * PH - KH + 1
    WO = W + 2 * PW - KW + 1

    # --- distributed-BN statistics (single device: all_reduce(SUM)/world_size == identity) ---
    xf = x.astype(jnp.float32)
    mean = jnp.mean(xf, axis=(0, 1, 3, 4))
    mean_sq = jnp.mean(xf * xf, axis=(0, 1, 3, 4))
    var = mean_sq - mean * mean
    scale = weight_bn.astype(jnp.float32) * jax.lax.rsqrt(var + eps_bn)

    # Channels-last activation layout (lane axis = cin).
    x_l = jnp.transpose(xf.reshape(B, cin, H, W), (0, 2, 3, 1))   # (B, H, W, cin)

    bias = bias_conv if if_bias_conv else jnp.zeros_like(bias_conv)

    # cout tiling: small weight tiles stream double-buffered through VMEM while the
    # per-frame spike plane stays resident.  Sizes fit v7x's 64 MiB VMEM (32 MiB scoped
    # default) as well as v5e/v6e's 128 MiB.
    if cout % 256 == 0:
        cout_tile = 256
    elif cout % 128 == 0:
        cout_tile = 128
    else:
        cout_tile = cout
    n_ct = cout // cout_tile

    kernel = _make_bn_fire_conv_kernel(H, W, KH, KW, PH, PW, HO, WO, cin,
                                       cout_tile)

    cost = pl.CostEstimate(
        flops=2 * B * HO * WO * KH * KW * cin * cout,
        transcendentals=0,
        bytes_accessed=(x_l.size * 4 + w_packed.size * 2
                        + B * HO * WO * cout * 4))

    y = pl.pallas_call(
        kernel,
        out_shape=jax.ShapeDtypeStruct((B, HO * WO, cout), jnp.float32),
        grid_spec=pltpu.PrefetchScalarGridSpec(
            num_scalar_prefetch=0,
            grid=(B, n_ct),
            in_specs=[
                pl.BlockSpec((1, H, W, cin), lambda b, j: (b, 0, 0, 0)),
                pl.BlockSpec((1, cin), lambda b, j: (0, 0)),
                pl.BlockSpec((1, cin), lambda b, j: (0, 0)),
                pl.BlockSpec((1, cin), lambda b, j: (0, 0)),
                pl.BlockSpec((KH * KW, cout_tile, cin), lambda b, j: (0, j, 0)),
                pl.BlockSpec((1, cout_tile), lambda b, j: (0, j)),
            ],
            out_specs=pl.BlockSpec((1, HO * WO, cout_tile),
                                   lambda b, j: (b, 0, j)),
            scratch_shapes=[pltpu.VMEM((H + 2 * PH, W + 2 * PW, cin),
                                       jnp.bfloat16)],
        ),
        compiler_params=pltpu.CompilerParams(
            dimension_semantics=("parallel", "arbitrary")),
        cost_estimate=cost,
    )(x_l, mean.reshape(1, cin), scale.reshape(1, cin),
      bias_bn.reshape(1, cin).astype(jnp.float32),
      w_packed, bias.reshape(1, cout).astype(jnp.float32))

    y = jnp.transpose(y.reshape(B, HO, WO, cout), (0, 3, 1, 2))
    y = y.reshape(T, N, cout, HO, WO)

    # --- running-stat side effects (module requires numel/cin > 1) ---
    factor = x.size / cin
    factor = factor / (factor - 1.0)
    new_running_var = running_var * 0.95 + var * (0.05 * factor)
    new_running_mean = running_mean * 0.95 + mean * 0.05
    return y, new_running_var, new_running_mean


def _reference(x, weight_bn, bias_bn, weight_conv, bias_conv, eps_bn,
               stride, padding):
    T, N, C, H, W = x.shape
    mean = jnp.mean(x, axis=(0, 1, 3, 4))
    var = jnp.mean(x * x, axis=(0, 1, 3, 4)) - mean * mean
    xb = x.reshape(T * N, C, H, W)
    x_hat = (xb - mean[None, :, None, None]) * \
        jax.lax.rsqrt(var + eps_bn)[None, :, None, None]
    bn = x_hat * weight_bn[None, :, None, None] + bias_bn[None, :, None, None]
    spike = (bn > 0.0).astype(jnp.float32)
    y = jax.lax.conv_general_dilated(
        spike, weight_conv, window_strides=stride,
        padding=[(padding[0], padding[0]), (padding[1], padding[1])],
        dimension_numbers=('NCHW', 'OIHW', 'NCHW'))
    y = y + bias_conv[None, :, None, None]
    return y.reshape(T, N, weight_conv.shape[0], y.shape[-2], y.shape[-1])


if __name__ == "__main__":
    # Small shapes consistent with the module: x (T, N, cin, H, W), Conv2d(cin, cout, 3).
    T, N, CIN, COUT, H, W = 2, 2, 8, 16, 16, 16
    kernel_size, stride, padding, eps_bn = (3, 3), (1, 1), (1, 1), 1e-5

    key = jax.random.PRNGKey(0)
    kx, kw, kb = jax.random.split(key, 3)

    x = jax.random.normal(kx, (T, N, CIN, H, W), dtype=jnp.float32)

    # BN params as in __init__: ones / zeros.
    weight_bn = jnp.ones((CIN,), jnp.float32)
    bias_bn = jnp.zeros((CIN,), jnp.float32)
    running_var = jnp.ones((CIN,), jnp.float32)
    running_mean = jnp.zeros((CIN,), jnp.float32)

    # nn.Conv2d(cin, cout, 3) init: uniform(-1/sqrt(fan_in), 1/sqrt(fan_in)).
    fan_in = CIN * kernel_size[0] * kernel_size[1]
    bound = 1.0 / (fan_in ** 0.5)
    weight_conv = jax.random.uniform(kw, (COUT, CIN, kernel_size[0], kernel_size[1]),
                                     jnp.float32, -bound, bound)
    bias_conv = jax.random.uniform(kb, (COUT,), jnp.float32, -bound, bound)

    # Pack the conv weight ONCE, outside the per-step call path.
    w_packed = pack_conv_weight(weight_conv)

    y, rv, rm = bn_fire_conv_dist(
        x, weight_bn, bias_bn, w_packed, bias_conv,
        running_var, running_mean, eps_bn=eps_bn,
        kernel_size=kernel_size, stride=stride, padding=padding,
        if_bias_conv=True)
    jax.block_until_ready((y, rv, rm))

    # Tight check vs a reference using the same bf16-quantized weights (checks
    # BN/fire/conv structure), loose check vs the pure-f32 reference (bounds the
    # bf16 weight-quantization error; spike & accumulation stay f32-exact).
    y_ref_f32 = _reference(x, weight_bn, bias_bn, weight_conv, bias_conv,
                           eps_bn, stride, padding)
    wq = weight_conv.astype(jnp.bfloat16).astype(jnp.float32)
    y_ref_bf16w = _reference(x, weight_bn, bias_bn, wq, bias_conv,
                             eps_bn, stride, padding)
    assert y.shape == (T, N, COUT, H, W)
    assert jnp.allclose(y, y_ref_bf16w, atol=1e-4, rtol=1e-4), \
        "mismatch vs bf16-weight reference"
    assert jnp.allclose(y, y_ref_f32, atol=3e-2, rtol=3e-2), \
        "mismatch vs f32 reference"

    print("KERNEL_OK")
</pallas_src>

<mosaic_0001>
module attributes {stable_mosaic.version = 11 : i64} {
  func.func @kernel(%arg0: i32, %arg1: i32, %arg2: memref<1x16x16x8xf32, #tpu.memory_space<vmem>>, %arg3: memref<1x8xf32, #tpu.memory_space<vmem>>, %arg4: memref<1x8xf32, #tpu.memory_space<vmem>>, %arg5: memref<1x8xf32, #tpu.memory_space<vmem>>, %arg6: memref<9x16x8xbf16, #tpu.memory_space<vmem>>, %arg7: memref<1x16xf32, #tpu.memory_space<vmem>>, %arg8: memref<1x256x16xf32, #tpu.memory_space<vmem>>, %arg9: memref<18x18x8xbf16, #tpu.memory_space<vmem>>) attributes {dimension_semantics = [#tpu.dimension_semantics<parallel>, #tpu.dimension_semantics<arbitrary>], iteration_bounds = array<i64: 4, 1>, scalar_prefetch = 0 : i64, scratch_operands = 1 : i64, tpu.core_type = #tpu.core_type<tc>, window_params = [{transform_indices = @transform_0, window_bounds = array<i64: 1, 16, 16, 8>}, {pipeline_mode = #tpu.pipeline_mode<synchronous>, transform_indices = @transform_1, window_bounds = array<i64: 1, 8>}, {pipeline_mode = #tpu.pipeline_mode<synchronous>, transform_indices = @transform_2, window_bounds = array<i64: 1, 8>}, {pipeline_mode = #tpu.pipeline_mode<synchronous>, transform_indices = @transform_3, window_bounds = array<i64: 1, 8>}, {transform_indices = @transform_4, window_bounds = array<i64: 9, 16, 8>}, {transform_indices = @transform_5, window_bounds = array<i64: 1, 16>}, {transform_indices = @transform_6, window_bounds = array<i64: 1, 256, 16>}]} {
    %c0_i32 = arith.constant 0 : i32
    %0 = arith.cmpi eq, %arg1, %c0_i32 : i32
    %1 = arith.extui %0 : i1 to i32
    %c0_i32_0 = arith.constant 0 : i32
    %2 = arith.cmpi ne, %1, %c0_i32_0 : i32
    scf.if %2 {
      %c0_60 = arith.constant 0 : index
      %c0_61 = arith.constant 0 : index
      %c0_62 = arith.constant 0 : index
      %c0_63 = arith.constant 0 : index
      %64 = vector.load %arg2[%c0_60, %c0_61, %c0_62, %c0_63] : memref<1x16x16x8xf32, #tpu.memory_space<vmem>>, vector<1x16x16x8xf32>
      %65 = vector.shape_cast %64 : vector<1x16x16x8xf32> to vector<16x16x8xf32>
      %c0_64 = arith.constant 0 : index
      %c0_65 = arith.constant 0 : index
      %66 = vector.load %arg3[%c0_64, %c0_65] : memref<1x8xf32, #tpu.memory_space<vmem>>, vector<1x8xf32>
      %67 = vector.shape_cast %66 : vector<1x8xf32> to vector<1x1x8xf32>
      %68 = vector.broadcast %67 : vector<1x1x8xf32> to vector<16x16x8xf32>
      %69 = arith.subf %65, %68 : vector<16x16x8xf32>
      %c0_66 = arith.constant 0 : index
      %c0_67 = arith.constant 0 : index
      %70 = vector.load %arg4[%c0_66, %c0_67] : memref<1x8xf32, #tpu.memory_space<vmem>>, vector<1x8xf32>
      %71 = vector.shape_cast %70 : vector<1x8xf32> to vector<1x1x8xf32>
      %72 = vector.broadcast %71 : vector<1x1x8xf32> to vector<16x16x8xf32>
      %73 = arith.mulf %69, %72 : vector<16x16x8xf32>
      %c0_68 = arith.constant 0 : index
      %c0_69 = arith.constant 0 : index
      %74 = vector.load %arg5[%c0_68, %c0_69] : memref<1x8xf32, #tpu.memory_space<vmem>>, vector<1x8xf32>
      %75 = vector.shape_cast %74 : vector<1x8xf32> to vector<1x1x8xf32>
      %76 = vector.broadcast %75 : vector<1x1x8xf32> to vector<16x16x8xf32>
      %77 = arith.addf %73, %76 : vector<16x16x8xf32>
      %cst_70 = arith.constant 0.000000e+00 : f32
      %78 = vector.broadcast %cst_70 : f32 to vector<16x16x8xf32>
      %79 = arith.cmpf ogt, %77, %78 : vector<16x16x8xf32>
      %80 = arith.extui %79 : vector<16x16x8xi1> to vector<16x16x8xi32>
      %81 = arith.sitofp %80 : vector<16x16x8xi32> to vector<16x16x8xf32>
      %82 = arith.truncf %81 : vector<16x16x8xf32> to vector<16x16x8xbf16>
      %cst_71 = arith.constant 0.000000e+00 : bf16
      %83 = vector.broadcast %cst_71 : bf16 to vector<18x18x8xbf16>
      %c0_72 = arith.constant 0 : index
      %c0_73 = arith.constant 0 : index
      %c0_74 = arith.constant 0 : index
      %84 = vector.load %arg9[%c0_72, %c0_73, %c0_74] : memref<18x18x8xbf16, #tpu.memory_space<vmem>>, vector<18x18x8xbf16>
      tpu.vector_store %arg9[%c0_72, %c0_73, %c0_74], %83 {strides = array<i32>} : memref<18x18x8xbf16, #tpu.memory_space<vmem>>, vector<18x18x8xbf16>,
      %c1_75 = arith.constant 1 : index
      %c1_76 = arith.constant 1 : index
      %c0_77 = arith.constant 0 : index
      %85 = vector.load %arg9[%c1_75, %c1_76, %c0_77] : memref<18x18x8xbf16, #tpu.memory_space<vmem>>, vector<16x16x8xbf16>
      tpu.vector_store %arg9[%c1_75, %c1_76, %c0_77], %82 {strides = array<i32>} : memref<18x18x8xbf16, #tpu.memory_space<vmem>>, vector<16x16x8xbf16>,
    } else {
    }
    %cst = arith.constant 0.000000e+00 : f32
    %3 = vector.broadcast %cst : f32 to vector<256x16xf32>
    %c0 = arith.constant 0 : index
    %c0_1 = arith.constant 0 : index
    %c0_2 = arith.constant 0 : index
    %4 = vector.load %arg9[%c0, %c0_1, %c0_2] : memref<18x18x8xbf16, #tpu.memory_space<vmem>>, vector<16x16x8xbf16>
    %5 = vector.shape_cast %4 : vector<16x16x8xbf16> to vector<256x8xbf16>
    %c0_3 = arith.constant 0 : index
    %c0_4 = arith.constant 0 : index
    %c0_5 = arith.constant 0 : index
    %6 = vector.load %arg6[%c0_3, %c0_4, %c0_5] : memref<9x16x8xbf16, #tpu.memory_space<vmem>>, vector<1x16x8xbf16>
    %7 = vector.shape_cast %6 : vector<1x16x8xbf16> to vector<16x8xbf16>
    %cst_6 = arith.constant dense<0.000000e+00> : vector<256x16xf32>
    %8 = tpu.matmul %5, %7, %cst_6 {dimension_numbers = #tpu.dot_dimension_numbers<[1], [1], [0], [0], [0, 0, 1, 0], [], []>} : vector<256x8xbf16>, vector<16x8xbf16>, vector<256x16xf32> -> vector<256x16xf32>
    %9 = arith.addf %3, %8 : vector<256x16xf32>
    %c0_7 = arith.constant 0 : index
    %c1 = arith.constant 1 : index
    %c0_8 = arith.constant 0 : index
    %10 = vector.load %arg9[%c0_7, %c1, %c0_8] : memref<18x18x8xbf16, #tpu.memory_space<vmem>>, vector<16x16x8xbf16>
    %11 = vector.shape_cast %10 : vector<16x16x8xbf16> to vector<256x8xbf16>
    %c1_9 = arith.constant 1 : index
    %c0_10 = arith.constant 0 : index
    %c0_11 = arith.constant 0 : index
    %12 = vector.load %arg6[%c1_9, %c0_10, %c0_11] : memref<9x16x8xbf16, #tpu.memory_space<vmem>>, vector<1x16x8xbf16>
    %13 = vector.shape_cast %12 : vector<1x16x8xbf16> to vector<16x8xbf16>
    %cst_12 = arith.constant dense<0.000000e+00> : vector<256x16xf32>
    %14 = tpu.matmul %11, %13, %cst_12 {dimension_numbers = #tpu.dot_dimension_numbers<[1], [1], [0], [0], [0, 0, 1, 0], [], []>} : vector<256x8xbf16>, vector<16x8xbf16>, vector<256x16xf32> -> vector<256x16xf32>
    %15 = arith.addf %9, %14 : vector<256x16xf32>
    %c0_13 = arith.constant 0 : index
    %c2 = arith.constant 2 : index
    %c0_14 = arith.constant 0 : index
    %16 = vector.load %arg9[%c0_13, %c2, %c0_14] : memref<18x18x8xbf16, #tpu.memory_space<vmem>>, vector<16x16x8xbf16>
    %17 = vector.shape_cast %16 : vector<16x16x8xbf16> to vector<256x8xbf16>
    %c2_15 = arith.constant 2 : index
    %c0_16 = arith.constant 0 : index
    %c0_17 = arith.constant 0 : index
    %18 = vector.load %arg6[%c2_15, %c0_16, %c0_17] : memref<9x16x8xbf16, #tpu.memory_space<vmem>>, vector<1x16x8xbf16>
    %19 = vector.shape_cast %18 : vector<1x16x8xbf16> to vector<16x8xbf16>
    %cst_18 = arith.constant dense<0.000000e+00> : vector<256x16xf32>
    %20 = tpu.matmul %17, %19, %cst_18 {dimension_numbers = #tpu.dot_dimension_numbers<[1], [1], [0], [0], [0, 0, 1, 0], [], []>} : vector<256x8xbf16>, vector<16x8xbf16>, vector<256x16xf32> -> vector<256x16xf32>
    %21 = arith.addf %15, %20 : vector<256x16xf32>
    %c1_19 = arith.constant 1 : index
    %c0_20 = arith.constant 0 : index
    %c0_21 = arith.constant 0 : index
    %22 = vector.load %arg9[%c1_19, %c0_20, %c0_21] : memref<18x18x8xbf16, #tpu.memory_space<vmem>>, vector<16x16x8xbf16>
    %23 = vector.shape_cast %22 : vector<16x16x8xbf16> to vector<256x8xbf16>
    %c3 = arith.constant 3 : index
    %c0_22 = arith.constant 0 : index
    %c0_23 = arith.constant 0 : index
    %24 = vector.load %arg6[%c3, %c0_22, %c0_23] : memref<9x16x8xbf16, #tpu.memory_space<vmem>>, vector<1x16x8xbf16>
    %25 = vector.shape_cast %24 : vector<1x16x8xbf16> to vector<16x8xbf16>
    %cst_24 = arith.constant dense<0.000000e+00> : vector<256x16xf32>
    %26 = tpu.matmul %23, %25, %cst_24 {dimension_numbers = #tpu.dot_dimension_numbers<[1], [1], [0], [0], [0, 0, 1, 0], [], []>} : vector<256x8xbf16>, vector<16x8xbf16>, vector<256x16xf32> -> vector<256x16xf32>
    %27 = arith.addf %21, %26 : vector<256x16xf32>
    %c1_25 = arith.constant 1 : index
    %c1_26 = arith.constant 1 : index
    %c0_27 = arith.constant 0 : index
    %28 = vector.load %arg9[%c1_25, %c1_26, %c0_27] : memref<18x18x8xbf16, #tpu.memory_space<vmem>>, vector<16x16x8xbf16>
    %29 = vector.shape_cast %28 : vector<16x16x8xbf16> to vector<256x8xbf16>
    %c4 = arith.constant 4 : index
    %c0_28 = arith.constant 0 : index
    %c0_29 = arith.constant 0 : index
    %30 = vector.load %arg6[%c4, %c0_28, %c0_29] : memref<9x16x8xbf16, #tpu.memory_space<vmem>>, vector<1x16x8xbf16>
    %31 = vector.shape_cast %30 : vector<1x16x8xbf16> to vector<16x8xbf16>
    %cst_30 = arith.constant dense<0.000000e+00> : vector<256x16xf32>
    %32 = tpu.matmul %29, %31, %cst_30 {dimension_numbers = #tpu.dot_dimension_numbers<[1], [1], [0], [0], [0, 0, 1, 0], [], []>} : vector<256x8xbf16>, vector<16x8xbf16>, vector<256x16xf32> -> vector<256x16xf32>
    %33 = arith.addf %27, %32 : vector<256x16xf32>
    %c1_31 = arith.constant 1 : index
    %c2_32 = arith.constant 2 : index
    %c0_33 = arith.constant 0 : index
    %34 = vector.load %arg9[%c1_31, %c2_32, %c0_33] : memref<18x18x8xbf16, #tpu.memory_space<vmem>>, vector<16x16x8xbf16>
    %35 = vector.shape_cast %34 : vector<16x16x8xbf16> to vector<256x8xbf16>
    %c5 = arith.constant 5 : index
    %c0_34 = arith.constant 0 : index
    %c0_35 = arith.constant 0 : index
    %36 = vector.load %arg6[%c5, %c0_34, %c0_35] : memref<9x16x8xbf16, #tpu.memory_space<vmem>>, vector<1x16x8xbf16>
    %37 = vector.shape_cast %36 : vector<1x16x8xbf16> to vector<16x8xbf16>
    %cst_36 = arith.constant dense<0.000000e+00> : vector<256x16xf32>
    %38 = tpu.matmul %35, %37, %cst_36 {dimension_numbers = #tpu.dot_dimension_numbers<[1], [1], [0], [0], [0, 0, 1, 0], [], []>} : vector<256x8xbf16>, vector<16x8xbf16>, vector<256x16xf32> -> vector<256x16xf32>
    %39 = arith.addf %33, %38 : vector<256x16xf32>
    %c2_37 = arith.constant 2 : index
    %c0_38 = arith.constant 0 : index
    %c0_39 = arith.constant 0 : index
    %40 = vector.load %arg9[%c2_37, %c0_38, %c0_39] : memref<18x18x8xbf16, #tpu.memory_space<vmem>>, vector<16x16x8xbf16>
    %41 = vector.shape_cast %40 : vector<16x16x8xbf16> to vector<256x8xbf16>
    %c6 = arith.constant 6 : index
    %c0_40 = arith.constant 0 : index
    %c0_41 = arith.constant 0 : index
    %42 = vector.load %arg6[%c6, %c0_40, %c0_41] : memref<9x16x8xbf16, #tpu.memory_space<vmem>>, vector<1x16x8xbf16>
    %43 = vector.shape_cast %42 : vector<1x16x8xbf16> to vector<16x8xbf16>
    %cst_42 = arith.constant dense<0.000000e+00> : vector<256x16xf32>
    %44 = tpu.matmul %41, %43, %cst_42 {dimension_numbers = #tpu.dot_dimension_numbers<[1], [1], [0], [0], [0, 0, 1, 0], [], []>} : vector<256x8xbf16>, vector<16x8xbf16>, vector<256x16xf32> -> vector<256x16xf32>
    %45 = arith.addf %39, %44 : vector<256x16xf32>
    %c2_43 = arith.constant 2 : index
    %c1_44 = arith.constant 1 : index
    %c0_45 = arith.constant 0 : index
    %46 = vector.load %arg9[%c2_43, %c1_44, %c0_45] : memref<18x18x8xbf16, #tpu.memory_space<vmem>>, vector<16x16x8xbf16>
    %47 = vector.shape_cast %46 : vector<16x16x8xbf16> to vector<256x8xbf16>
    %c7 = arith.constant 7 : index
    %c0_46 = arith.constant 0 : index
    %c0_47 = arith.constant 0 : index
    %48 = vector.load %arg6[%c7, %c0_46, %c0_47] : memref<9x16x8xbf16, #tpu.memory_space<vmem>>, vector<1x16x8xbf16>
    %49 = vector.shape_cast %48 : vector<1x16x8xbf16> to vector<16x8xbf16>
    %cst_48 = arith.constant dense<0.000000e+00> : vector<256x16xf32>
    %50 = tpu.matmul %47, %49, %cst_48 {dimension_numbers = #tpu.dot_dimension_numbers<[1], [1], [0], [0], [0, 0, 1, 0], [], []>} : vector<256x8xbf16>, vector<16x8xbf16>, vector<256x16xf32> -> vector<256x16xf32>
    %51 = arith.addf %45, %50 : vector<256x16xf32>
    %c2_49 = arith.constant 2 : index
    %c2_50 = arith.constant 2 : index
    %c0_51 = arith.constant 0 : index
    %52 = vector.load %arg9[%c2_49, %c2_50, %c0_51] : memref<18x18x8xbf16, #tpu.memory_space<vmem>>, vector<16x16x8xbf16>
    %53 = vector.shape_cast %52 : vector<16x16x8xbf16> to vector<256x8xbf16>
    %c8 = arith.constant 8 : index
    %c0_52 = arith.constant 0 : index
    %c0_53 = arith.constant 0 : index
    %54 = vector.load %arg6[%c8, %c0_52, %c0_53] : memref<9x16x8xbf16, #tpu.memory_space<vmem>>, vector<1x16x8xbf16>
    %55 = vector.shape_cast %54 : vector<1x16x8xbf16> to vector<16x8xbf16>
    %cst_54 = arith.constant dense<0.000000e+00> : vector<256x16xf32>
    %56 = tpu.matmul %53, %55, %cst_54 {dimension_numbers = #tpu.dot_dimension_numbers<[1], [1], [0], [0], [0, 0, 1, 0], [], []>} : vector<256x8xbf16>, vector<16x8xbf16>, vector<256x16xf32> -> vector<256x16xf32>
    %57 = arith.addf %51, %56 : vector<256x16xf32>
    %c0_55 = arith.constant 0 : index
    %c0_56 = arith.constant 0 : index
    %58 = vector.load %arg7[%c0_55, %c0_56] : memref<1x16xf32, #tpu.memory_space<vmem>>, vector<1x16xf32>
    %59 = vector.broadcast %58 : vector<1x16xf32> to vector<256x16xf32>
    %60 = arith.addf %57, %59 : vector<256x16xf32>
    %c0_57 = arith.constant 0 : index
    %c0_58 = arith.constant 0 : index
    %c0_59 = arith.constant 0 : index
    %61 = vector.load %arg8[%c0_57, %c0_58, %c0_59] : memref<1x256x16xf32, #tpu.memory_space<vmem>>, vector<1x256x16xf32>
    %62 = vector.shape_cast %61 : vector<1x256x16xf32> to vector<256x16xf32>
    %63 = vector.shape_cast %60 : vector<256x16xf32> to vector<1x256x16xf32>
    tpu.vector_store %arg8[%c0_57, %c0_58, %c0_59], %63 {strides = array<i32>} : memref<1x256x16xf32, #tpu.memory_space<vmem>>, vector<1x256x16xf32>,
    return
  }
  func.func @transform_0(%arg0: i32, %arg1: i32) -> (i32, i32, i32, i32) {
    %c0_i32 = arith.constant 0 : i32
    %c0_i32_0 = arith.constant 0 : i32
    %c0_i32_1 = arith.constant 0 : i32
    %c0_i32_2 = arith.constant 0 : i32
    return %arg0, %c0_i32, %c0_i32_0, %c0_i32_1 : i32, i32, i32, i32
  }
  func.func @transform_1(%arg0: i32, %arg1: i32) -> (i32, i32) {
    %c0_i32 = arith.constant 0 : i32
    %c0_i32_0 = arith.constant 0 : i32
    %c0_i32_1 = arith.constant 0 : i32
    return %c0_i32, %c0_i32_0 : i32, i32
  }
  func.func @transform_2(%arg0: i32, %arg1: i32) -> (i32, i32) {
    %c0_i32 = arith.constant 0 : i32
    %c0_i32_0 = arith.constant 0 : i32
    %c0_i32_1 = arith.constant 0 : i32
    return %c0_i32, %c0_i32_0 : i32, i32
  }
  func.func @transform_3(%arg0: i32, %arg1: i32) -> (i32, i32) {
    %c0_i32 = arith.constant 0 : i32
    %c0_i32_0 = arith.constant 0 : i32
    %c0_i32_1 = arith.constant 0 : i32
    return %c0_i32, %c0_i32_0 : i32, i32
  }
  func.func @transform_4(%arg0: i32, %arg1: i32) -> (i32, i32, i32) {
    %c0_i32 = arith.constant 0 : i32
    %c0_i32_0 = arith.constant 0 : i32
    %c0_i32_1 = arith.constant 0 : i32
    return %c0_i32, %arg1, %c0_i32_0 : i32, i32, i32
  }
  func.func @transform_5(%arg0: i32, %arg1: i32) -> (i32, i32) {
    %c0_i32 = arith.constant 0 : i32
    %c0_i32_0 = arith.constant 0 : i32
    return %c0_i32, %arg1 : i32, i32
  }
  func.func @transform_6(%arg0: i32, %arg1: i32) -> (i32, i32, i32) {
    %c0_i32 = arith.constant 0 : i32
    %c0_i32_0 = arith.constant 0 : i32
    return %arg0, %c0_i32, %arg1 : i32, i32, i32
  }
}

</mosaic_0001>

<llo_original>
// kernel: tpu_custom_call.1
$region0: #{tpu_custom_call.1}
  #allocation0 [shape = 'u32[]', space=smem, size = 0x4, offset = 0x4, fixed_abs, tag = 'smem constant byte address 0x4 - core index']
  #allocation1 [shape = 'u32[144,128]{1,0:T(1,128)}', space=vmem, size = 0x12000, scoped, tag = 'internal scratch']
  #allocation2 [shape = 'bf16[18,18,8]{2,1,0:T(8,128)(2,1)}', space=vmem, size = 0x1b000, scoped, tag = 'scratch operand']
  %s0 = inlined_call_operand.vmem [shape: f32[4,16,16,8], index: 0, kind: input, shape index: {}]
  %s1 = inlined_call_operand.vmem [shape: f32[1,8], index: 1, kind: input, shape index: {}]
  %s2 = inlined_call_operand.vmem [shape: f32[1,8], index: 2, kind: input, shape index: {}]
  %s3 = inlined_call_operand.vmem [shape: f32[1,8], index: 3, kind: input, shape index: {}]
  %s4 = inlined_call_operand.vmem [shape: bf16[9,16,8], index: 4, kind: input, shape index: {}]
  %s5 = inlined_call_operand.vmem [shape: f32[1,16], index: 5, kind: input, shape index: {}]
  %s6 = inlined_call_operand.vmem [shape: f32[4,256,16], index: 6, kind: output, shape index: {}]
  %s7 = sld [smem:[#allocation0]]
  $region61: #{tpu_custom_call.1} parent=0
    _
  %s9 = ssub.s32 1, %s7
  %s10 = scalar_select 0, %s9, %s7
  loop: start=0, step=1, limit=6
  $region2: #{tpu_custom_call.1} parent=0 // loop_pre_header
    _
  $region3: #{tpu_custom_call.1} parent=0 // loop_header
    %s12 = sphi 0, %s16
    %p13 = scmp.ge.s32.totalorder %s12, 6
    %s19 = sphi 0, %s31
    %s20 = sphi 0, %s27
    %s21 = sphi 0, %s19
    %s22 = sphi 0, %s20
    %s23 = sphi 0, %s21
    %s24 = sphi 0, %s22
    %s34 = sphi 0, %s36
    %s37 = sphi 0, %s34
    %s38 = sphi 0, %s37
    %s54 = sphi 0, %s38
    %s58 = sphi 0, %s58
    %s60 = sphi 0, %s58
    %s61 = sphi 0, %s60
    %s75 = sphi 0, %s61
    %s79 = sphi 0, %s79
    %s81 = sphi 0, %s79
    %s82 = sphi 0, %s81
    %s96 = sphi 0, %s82
    %s100 = sphi 0, %s100
    %s102 = sphi 0, %s100
    %s103 = sphi 0, %s102
    %s117 = sphi 0, %s103
    %s123 = sphi 0, %s125
    %s126 = sphi 0, %s123
    %s127 = sphi 0, %s126
    %s143 = sphi 0, %s127
    %s149 = sphi 0, %s151
    %s152 = sphi 0, %s149
    %s153 = sphi 0, %s152
    %s169 = sphi 0, %s153
    %s177 = sphi 0, %s179
    %s180 = sphi 0, %s177
    %s181 = sphi 0, %s180
    %s197 = sphi 0, %s181
  $region4: #{tpu_custom_call.1} parent=0 // loop_header_branch
    %15 = sbr.rel (%p13) target = $region8
  $region5: #{tpu_custom_call.1} parent=0 // loop_body
    %s17 = ssub.s32 %s12, 1
    %s18 = ssub.s32 %s12, 2
    %s25 = sadd.s32 1, %s20
    %p26 = scmp.ge.s32.totalorder %s25, 1
    %s27 = scalar_select %p26, 0, %s25
    %s28 = sadd.s32 1, %s19
    %s29 = scalar_select %p26, %s28, %s19
    %p30 = scmp.ge.s32.totalorder %s29, 4
    %s31 = scalar_select %p30, 0, %s29
    %s32 = ssub.s32 %s19, %s31
    %p33 = scmp.eq.s32.totalorder %s32, 0
    %s35 = sadd.s32 %s34, 1
    %s36 = scalar_select %p33, %s34, %s35
    %p39 = pneg %p33
    %p40 = scmp.eq.s32.totalorder %s12, 3
    %p41 = por %p39, %p40
    %p42 = scmp.ne.s32.totalorder %s34, %s37
    %p43 = scmp.eq.s32.totalorder %s12, 0
    %p44 = por %p42, %p43
    %p45 = scmp.ne.s32.totalorder %s34, %s37
    %p46 = scmp.eq.s32.totalorder %s17, 3
    %p47 = por %p45, %p46
    %p48 = scmp.ne.s32.totalorder %s37, %s38
    %p49 = scmp.eq.s32.totalorder %s17, 0
    %p50 = por %p48, %p49
    %p51 = scmp.ne.s32.totalorder %s37, %s38
    %p52 = scmp.eq.s32.totalorder %s18, 3
    %p53 = por %p51, %p52
    %p55 = scmp.ne.s32.totalorder %s38, %s54
    %p56 = scmp.eq.s32.totalorder %s18, 0
    %p57 = por %p55, %p56
    %s59 = sadd.s32 %s58, 1
    %p62 = scmp.eq.s32.totalorder %s12, 3
    %p63 = scmp.ne.s32.totalorder %s58, %s60
    %p64 = scmp.eq.s32.totalorder %s12, 0
    %p65 = por %p63, %p64
    %p66 = scmp.ne.s32.totalorder %s58, %s60
    %p67 = scmp.eq.s32.totalorder %s17, 3
    %p68 = por %p66, %p67
    %p69 = scmp.ne.s32.totalorder %s60, %s61
    %p70 = scmp.eq.s32.totalorder %s17, 0
    %p71 = por %p69, %p70
    %p72 = scmp.ne.s32.totalorder %s60, %s61
    %p73 = scmp.eq.s32.totalorder %s18, 3
    %p74 = por %p72, %p73
    %p76 = scmp.ne.s32.totalorder %s61, %s75
    %p77 = scmp.eq.s32.totalorder %s18, 0
    %p78 = por %p76, %p77
    %s80 = sadd.s32 %s79, 1
    %p83 = scmp.eq.s32.totalorder %s12, 3
    %p84 = scmp.ne.s32.totalorder %s79, %s81
    %p85 = scmp.eq.s32.totalorder %s12, 0
    %p86 = por %p84, %p85
    %p87 = scmp.ne.s32.totalorder %s79, %s81
    %p88 = scmp.eq.s32.totalorder %s17, 3
    %p89 = por %p87, %p88
    %p90 = scmp.ne.s32.totalorder %s81, %s82
    %p91 = scmp.eq.s32.totalorder %s17, 0
    %p92 = por %p90, %p91
    %p93 = scmp.ne.s32.totalorder %s81, %s82
    %p94 = scmp.eq.s32.totalorder %s18, 3
    %p95 = por %p93, %p94
    %p97 = scmp.ne.s32.totalorder %s82, %s96
    %p98 = scmp.eq.s32.totalorder %s18, 0
    %p99 = por %p97, %p98
    %s101 = sadd.s32 %s100, 1
    %p104 = scmp.eq.s32.totalorder %s12, 3
    %p105 = scmp.ne.s32.totalorder %s100, %s102
    %p106 = scmp.eq.s32.totalorder %s12, 0
    %p107 = por %p105, %p106
    %p108 = scmp.ne.s32.totalorder %s100, %s102
    %p109 = scmp.eq.s32.totalorder %s17, 3
    %p110 = por %p108, %p109
    %p111 = scmp.ne.s32.totalorder %s102, %s103
    %p112 = scmp.eq.s32.totalorder %s17, 0
    %p113 = por %p111, %p112
    %p114 = scmp.ne.s32.totalorder %s102, %s103
    %p115 = scmp.eq.s32.totalorder %s18, 3
    %p116 = por %p114, %p115
    %p118 = scmp.ne.s32.totalorder %s103, %s117
    %p119 = scmp.eq.s32.totalorder %s18, 0
    %p120 = por %p118, %p119
    %s121 = ssub.s32 %s20, %s27
    %p122 = scmp.eq.s32.totalorder %s121, 0
    %s124 = sadd.s32 %s123, 1
    %s125 = scalar_select %p122, %s123, %s124
    %p128 = pneg %p122
    %p129 = scmp.eq.s32.totalorder %s12, 3
    %p130 = por %p128, %p129
    %p131 = scmp.ne.s32.totalorder %s123, %s126
    %p132 = scmp.eq.s32.totalorder %s12, 0
    %p133 = por %p131, %p132
    %p134 = scmp.ne.s32.totalorder %s123, %s126
    %p135 = scmp.eq.s32.totalorder %s17, 3
    %p136 = por %p134, %p135
    %p137 = scmp.ne.s32.totalorder %s126, %s127
    %p138 = scmp.eq.s32.totalorder %s17, 0
    %p139 = por %p137, %p138
    %p140 = scmp.ne.s32.totalorder %s126, %s127
    %p141 = scmp.eq.s32.totalorder %s18, 3
    %p142 = por %p140, %p141
    %p144 = scmp.ne.s32.totalorder %s127, %s143
    %p145 = scmp.eq.s32.totalorder %s18, 0
    %p146 = por %p144, %p145
    %s147 = ssub.s32 %s20, %s27
    %p148 = scmp.eq.s32.totalorder %s147, 0
    %s150 = sadd.s32 %s149, 1
    %s151 = scalar_select %p148, %s149, %s150
    %p154 = pneg %p148
    %p155 = scmp.eq.s32.totalorder %s12, 3
    %p156 = por %p154, %p155
    %p157 = scmp.ne.s32.totalorder %s149, %s152
    %p158 = scmp.eq.s32.totalorder %s12, 0
    %p159 = por %p157, %p158
    %p160 = scmp.ne.s32.totalorder %s149, %s152
    %p161 = scmp.eq.s32.totalorder %s17, 3
    %p162 = por %p160, %p161
    %p163 = scmp.ne.s32.totalorder %s152, %s153
    %p164 = scmp.eq.s32.totalorder %s17, 0
    %p165 = por %p163, %p164
    %p166 = scmp.ne.s32.totalorder %s152, %s153
    %p167 = scmp.eq.s32.totalorder %s18, 3
    %p168 = por %p166, %p167
    %p170 = scmp.ne.s32.totalorder %s153, %s169
    %p171 = scmp.eq.s32.totalorder %s18, 0
    %p172 = por %p170, %p171
    %s173 = ssub.s32 %s19, %s31
    %s174 = ssub.s32 %s20, %s27
    %s175 = sor.u32 %s173, %s174
    %p176 = scmp.eq.s32.totalorder %s175, 0
    %s178 = sadd.s32 %s177, 1
    %s179 = scalar_select %p176, %s177, %s178
    %p182 = pneg %p176
    %p183 = scmp.eq.s32.totalorder %s12, 3
    %p184 = por %p182, %p183
    %p185 = scmp.ne.s32.totalorder %s177, %s180
    %p186 = scmp.eq.s32.totalorder %s12, 0
    %p187 = por %p185, %p186
    %p188 = scmp.ne.s32.totalorder %s177, %s180
    %p189 = scmp.eq.s32.totalorder %s17, 3
    %p190 = por %p188, %p189
    %p191 = scmp.ne.s32.totalorder %s180, %s181
    %p192 = scmp.eq.s32.totalorder %s17, 0
    %p193 = por %p191, %p192
    %p194 = scmp.ne.s32.totalorder %s180, %s181
    %p195 = scmp.eq.s32.totalorder %s18, 3
    %p196 = por %p194, %p195
    %p198 = scmp.ne.s32.totalorder %s181, %s197
    %p199 = scmp.eq.s32.totalorder %s18, 0
    %p200 = por %p198, %p199
    %p201 = scmp.le.s32.totalorder 1, %s12
    %p202 = scmp.lt.s32.totalorder %s12, 5
    %p203 = pnand %p201, %p202
    %p204 = pneg %p203
    // Predicated region
    $region9: #{tpu_custom_call.1} parent=5 // pred_check
      _
    $region10: #{tpu_custom_call.1} parent=5 // pred_check_branch
      %206 = sbr.rel (%p203) target = $region12
    $region11: #{tpu_custom_call.1} parent=5 // pred_region
      %s207 = ssub.s32 %s12, 1
      // Predicated region
      $region13: #{tpu_custom_call.1} parent=11 // pred_check
        %p208 = pneg %p71
      $region14: #{tpu_custom_call.1} parent=11 // pred_check_branch
        %210 = sbr.rel (%p208) target = $region16
      $region15: #{tpu_custom_call.1} parent=11 // pred_region
        _
      $region16: #{tpu_custom_call.1} parent=11 // pred_fallthru
        _
      // Predicated region
      $region17: #{tpu_custom_call.1} parent=11 // pred_check
        %p211 = pneg %p92
      $region18: #{tpu_custom_call.1} parent=11 // pred_check_branch
        %213 = sbr.rel (%p211) target = $region20
      $region19: #{tpu_custom_call.1} parent=11 // pred_region
        _
      $region20: #{tpu_custom_call.1} parent=11 // pred_fallthru
        _
      // Predicated region
      $region21: #{tpu_custom_call.1} parent=11 // pred_check
        %p214 = pneg %p113
      $region22: #{tpu_custom_call.1} parent=11 // pred_check_branch
        %216 = sbr.rel (%p214) target = $region24
      $region23: #{tpu_custom_call.1} parent=11 // pred_region
        _
      $region24: #{tpu_custom_call.1} parent=11 // pred_fallthru
        _
      // Predicated region
      $region25: #{tpu_custom_call.1} parent=11 // pred_check
        %p217 = pneg %p139
      $region26: #{tpu_custom_call.1} parent=11 // pred_check_branch
        %219 = sbr.rel (%p217) target = $region28
      $region27: #{tpu_custom_call.1} parent=11 // pred_region
        %s220 = smul.u32 2, %s22
        %p221 = scmp.lt.s32.totalorder %s220, 1
        %s222 = scalar_select %p221, %s220, 1
        %s223 = smul.addr %s222, 4
        %s224 = scalar_lea.vmem %s4, %s223
        %s225 = smul.u32 2, %s22
      $region28: #{tpu_custom_call.1} parent=11 // pred_fallthru
        _
      // Predicated region
      $region29: #{tpu_custom_call.1} parent=11 // pred_check
        %p226 = pneg %p165
      $region30: #{tpu_custom_call.1} parent=11 // pred_check_branch
        %228 = sbr.rel (%p226) target = $region32
      $region31: #{tpu_custom_call.1} parent=11 // pred_region
        %p229 = scmp.lt.s32.totalorder %s22, 0
        %s230 = scalar_select %p229, %s22, 0
        %s231 = scalar_lea.vmem %s5, %s230
      $region32: #{tpu_custom_call.1} parent=11 // pred_fallthru
        _
    $region12: #{tpu_custom_call.1} parent=5 // pred_fallthru
      _
    %p232 = scmp.lt.s32.totalorder %s12, 4
    // Predicated region
    $region33: #{tpu_custom_call.1} parent=5 // pred_check
      %p233 = pneg %p232
    $region34: #{tpu_custom_call.1} parent=5 // pred_check_branch
      %235 = sbr.rel (%p233) target = $region36
    $region35: #{tpu_custom_call.1} parent=5 // pred_region
      // Predicated region
      $region37: #{tpu_custom_call.1} parent=35 // pred_check
        %p236 = pneg %p44
      $region38: #{tpu_custom_call.1} parent=35 // pred_check_branch
        %238 = sbr.rel (%p236) target = $region40
      $region39: #{tpu_custom_call.1} parent=35 // pred_region
        %p239 = scmp.lt.s32.totalorder %s19, 3
        %s240 = scalar_select %p239, %s19, 3
        %s241 = smul.addr %s240, 32
        %s242 = smul.addr %s241, 8
        %s243 = scalar_lea.vmem %s0, %s242
      $region40: #{tpu_custom_call.1} parent=35 // pred_fallthru
        _
    $region36: #{tpu_custom_call.1} parent=5 // pred_fallthru
      _
    %p244 = scmp.le.s32.totalorder 1, %s12
    %p245 = scmp.lt.s32.totalorder %s12, 5
    %p246 = pnand %p244, %p245
    %p247 = pneg %p246
    // Predicated region
    $region41: #{tpu_custom_call.1} parent=5 // pred_check
      _
    $region42: #{tpu_custom_call.1} parent=5 // pred_check_branch
      %249 = sbr.rel (%p246) target = $region44
    $region43: #{tpu_custom_call.1} parent=5 // pred_region
      %s250 = ssub.s32 %s12, 1
      %p251 = scmp.lt.s32.totalorder %s21, 3
      %s252 = scalar_select %p251, %s21, 3
      %s253 = smul.addr %s252, 32
      %s254 = smul.addr %s253, 8
      %s255 = scalar_lea.vmem %s0, %s254
      %p256 = pneg %p50
      %p257 = pneg %p47
      %p258 = pneg %p71
      %p259 = pneg %p68
      %p260 = pneg %p92
      %p261 = pneg %p89
      %p262 = pneg %p113
      %p263 = pneg %p110
      %s264 = smul.u32 2, %s22
      %p265 = scmp.lt.s32.totalorder %s264, 1
      %s266 = scalar_select %p265, %s264, 1
      %s267 = smul.addr %s266, 4
      %s268 = scalar_lea.vmem %s4, %s267
      %p269 = pneg %p139
      %p270 = pneg %p136
      %p271 = scmp.lt.s32.totalorder %s22, 0
      %s272 = scalar_select %p271, %s22, 0
      %s273 = scalar_lea.vmem %s5, %s272
      %p274 = pneg %p165
      %p275 = pneg %p162
      %p276 = pneg %p193
      %p277 = pneg %p190
      %p278 = scmp.lt.s32.totalorder %s21, 3
      %s279 = scalar_select %p278, %s21, 3
      %p280 = scmp.lt.s32.totalorder %s22, 0
      %s281 = scalar_select %p280, %s22, 0
      %s282 = smul.addr %s279, 32
      %s283 = sadd.s32 %s281, %s282
      %s284 = smul.addr %s283, 8
      %s285 = scalar_lea.vmem %s6, %s284
      %p286 = scmp.lt.s32.totalorder %s21, 3
      %s287 = scalar_select %p286, %s21, 3
      %s288 = smul.addr %s287, 32
      %s289 = smul.addr %s288, 8
      %s290 = scalar_lea.vmem %s0, %s289
      %s291 = smul.u32 2, %s22
      %p292 = scmp.lt.s32.totalorder %s291, 1
      %s293 = scalar_select %p292, %s291, 1
      %s294 = smul.addr %s293, 4
      %s295 = scalar_lea.vmem %s4, %s294
      %s296 = smul.u32 2, %s22
      %p297 = scmp.lt.s32.totalorder %s22, 0
      %s298 = scalar_select %p297, %s22, 0
      %s299 = scalar_lea.vmem %s5, %s298
      %p300 = scmp.lt.s32.totalorder %s21, 3
      %s301 = scalar_select %p300, %s21, 3
      %p302 = scmp.lt.s32.totalorder %s22, 0
      %s303 = scalar_select %p302, %s22, 0
      %s304 = smul.addr %s301, 32
      %s305 = sadd.s32 %s303, %s304
      %s306 = smul.addr %s305, 8
      %s307 = scalar_lea.vmem %s6, %s306
      %p309 = scmp.eq.s32.totalorder %s22, 0
      // Predicated region
      $region45: #{tpu_custom_call.1} parent=43 // pred_check
        %p310 = pneg %p309
      $region46: #{tpu_custom_call.1} parent=43 // pred_check_branch
        %312 = sbr.rel (%p310) target = $region48
      $region47: #{tpu_custom_call.1} parent=43 // pred_region
        %v313 = vld [vmem:[%s290] sm:$0xff]
        %v314 = vld [vmem:[%s290 + $0x8] sm:$0xff]
        %v315 = vld [vmem:[%s290 + $0x10] sm:$0xff]
        %v316 = vld [vmem:[%s290 + $0x18] sm:$0xff]
        %v317 = vld [vmem:[%s290 + $0x20] sm:$0xff]
        %v318 = vld [vmem:[%s290 + $0x28] sm:$0xff]
        %v319 = vld [vmem:[%s290 + $0x30] sm:$0xff]
        %v320 = vld [vmem:[%s290 + $0x38] sm:$0xff]
        %v321 = vld [vmem:[%s290 + $0x40] sm:$0xff]
        %v322 = vld [vmem:[%s290 + $0x48] sm:$0xff]
        %v323 = vld [vmem:[%s290 + $0x50] sm:$0xff]
        %v324 = vld [vmem:[%s290 + $0x58] sm:$0xff]
        %v325 = vld [vmem:[%s290 + $0x60] sm:$0xff]
        %v326 = vld [vmem:[%s290 + $0x68] sm:$0xff]
        %v327 = vld [vmem:[%s290 + $0x70] sm:$0xff]
        %v328 = vld [vmem:[%s290 + $0x78] sm:$0xff]
        %v329 = vld [vmem:[%s290 + $0x80] sm:$0xff]
        %v330 = vld [vmem:[%s290 + $0x88] sm:$0xff]
        %v331 = vld [vmem:[%s290 + $0x90] sm:$0xff]
        %v332 = vld [vmem:[%s290 + $0x98] sm:$0xff]
        %v333 = vld [vmem:[%s290 + $0xa0] sm:$0xff]
        %v334 = vld [vmem:[%s290 + $0xa8] sm:$0xff]
        %v335 = vld [vmem:[%s290 + $0xb0] sm:$0xff]
        %v336 = vld [vmem:[%s290 + $0xb8] sm:$0xff]
        %v337 = vld [vmem:[%s290 + $0xc0] sm:$0xff]
        %v338 = vld [vmem:[%s290 + $0xc8] sm:$0xff]
        %v339 = vld [vmem:[%s290 + $0xd0] sm:$0xff]
        %v340 = vld [vmem:[%s290 + $0xd8] sm:$0xff]
        %v341 = vld [vmem:[%s290 + $0xe0] sm:$0xff]
        %v342 = vld [vmem:[%s290 + $0xe8] sm:$0xff]
        %v343 = vld [vmem:[%s290 + $0xf0] sm:$0xff]
        %v344 = vld [vmem:[%s290 + $0xf8] sm:$0xff]
        %v345 = vld [vmem:[%s1] sm:$0x1]
        %v347 = vlaneseq
        %v348 = vshrl.u32 %v347, 7
        %v349 = vsub.s32 0, %v348
        %v350 = vrot.slane %v345, %v349
        %v352 = vsub.f32 %v313, %v350
        %v353 = vsub.f32 %v314, %v350
        %v354 = vsub.f32 %v315, %v350
        %v355 = vsub.f32 %v316, %v350
        %v356 = vsub.f32 %v317, %v350
        %v357 = vsub.f32 %v318, %v350
        %v358 = vsub.f32 %v319, %v350
        %v359 = vsub.f32 %v320, %v350
        %v360 = vsub.f32 %v321, %v350
        %v361 = vsub.f32 %v322, %v350
        %v362 = vsub.f32 %v323, %v350
        %v363 = vsub.f32 %v324, %v350
        %v364 = vsub.f32 %v325, %v350
        %v365 = vsub.f32 %v326, %v350
        %v366 = vsub.f32 %v327, %v350
        %v367 = vsub.f32 %v328, %v350
        %v368 = vsub.f32 %v329, %v350
        %v369 = vsub.f32 %v330, %v350
        %v370 = vsub.f32 %v331, %v350
        %v371 = vsub.f32 %v332, %v350
        %v372 = vsub.f32 %v333, %v350
        %v373 = vsub.f32 %v334, %v350
        %v374 = vsub.f32 %v335, %v350
        %v375 = vsub.f32 %v336, %v350
        %v376 = vsub.f32 %v337, %v350
        %v377 = vsub.f32 %v338, %v350
        %v378 = vsub.f32 %v339, %v350
        %v379 = vsub.f32 %v340, %v350
        %v380 = vsub.f32 %v341, %v350
        %v381 = vsub.f32 %v342, %v350
        %v382 = vsub.f32 %v343, %v350
        %v383 = vsub.f32 %v344, %v350
        %v384 = vld [vmem:[%s2] sm:$0x1]
        %v386 = vlaneseq
        %v387 = vshrl.u32 %v386, 7
        %v388 = vsub.s32 0, %v387
        %v389 = vrot.slane %v384, %v388
        %v391 = vmul.f32 %v352, %v389
        %v392 = vmul.f32 %v353, %v389
        %v393 = vmul.f32 %v354, %v389
        %v394 = vmul.f32 %v355, %v389
        %v395 = vmul.f32 %v356, %v389
        %v396 = vmul.f32 %v357, %v389
        %v397 = vmul.f32 %v358, %v389
        %v398 = vmul.f32 %v359, %v389
        %v399 = vmul.f32 %v360, %v389
        %v400 = vmul.f32 %v361, %v389
        %v401 = vmul.f32 %v362, %v389
        %v402 = vmul.f32 %v363, %v389
        %v403 = vmul.f32 %v364, %v389
        %v404 = vmul.f32 %v365, %v389
        %v405 = vmul.f32 %v366, %v389
        %v406 = vmul.f32 %v367, %v389
        %v407 = vmul.f32 %v368, %v389
        %v408 = vmul.f32 %v369, %v389
        %v409 = vmul.f32 %v370, %v389
        %v410 = vmul.f32 %v371, %v389
        %v411 = vmul.f32 %v372, %v389
        %v412 = vmul.f32 %v373, %v389
        %v413 = vmul.f32 %v374, %v389
        %v414 = vmul.f32 %v375, %v389
        %v415 = vmul.f32 %v376, %v389
        %v416 = vmul.f32 %v377, %v389
        %v417 = vmul.f32 %v378, %v389
        %v418 = vmul.f32 %v379, %v389
        %v419 = vmul.f32 %v380, %v389
        %v420 = vmul.f32 %v381, %v389
        %v421 = vmul.f32 %v382, %v389
        %v422 = vmul.f32 %v383, %v389
        %v423 = vld [vmem:[%s3] sm:$0x1]
        %v425 = vlaneseq
        %v426 = vshrl.u32 %v425, 7
        %v427 = vsub.s32 0, %v426
        %v428 = vrot.slane %v423, %v427
        %v430 = vadd.f32 %v391, %v428
        %v431 = vadd.f32 %v392, %v428
        %v432 = vadd.f32 %v393, %v428
        %v433 = vadd.f32 %v394, %v428
        %v434 = vadd.f32 %v395, %v428
        %v435 = vadd.f32 %v396, %v428
        %v436 = vadd.f32 %v397, %v428
        %v437 = vadd.f32 %v398, %v428
        %v438 = vadd.f32 %v399, %v428
        %v439 = vadd.f32 %v400, %v428
        %v440 = vadd.f32 %v401, %v428
        %v441 = vadd.f32 %v402, %v428
        %v442 = vadd.f32 %v403, %v428
        %v443 = vadd.f32 %v404, %v428
        %v444 = vadd.f32 %v405, %v428
        %v445 = vadd.f32 %v406, %v428
        %v446 = vadd.f32 %v407, %v428
        %v447 = vadd.f32 %v408, %v428
        %v448 = vadd.f32 %v409, %v428
        %v449 = vadd.f32 %v410, %v428
        %v450 = vadd.f32 %v411, %v428
        %v451 = vadd.f32 %v412, %v428
        %v452 = vadd.f32 %v413, %v428
        %v453 = vadd.f32 %v414, %v428
        %v454 = vadd.f32 %v415, %v428
        %v455 = vadd.f32 %v416, %v428
        %v456 = vadd.f32 %v417, %v428
        %v457 = vadd.f32 %v418, %v428
        %v458 = vadd.f32 %v419, %v428
        %v459 = vadd.f32 %v420, %v428
        %v460 = vadd.f32 %v421, %v428
        %v461 = vadd.f32 %v422, %v428
        %vm462 = vcmp.gt.f32.partialorder %v430, 0.0
        %vm463 = vcmp.gt.f32.partialorder %v431, 0.0
        %vm464 = vcmp.gt.f32.partialorder %v432, 0.0
        %vm465 = vcmp.gt.f32.partialorder %v433, 0.0
        %vm466 = vcmp.gt.f32.partialorder %v434, 0.0
        %vm467 = vcmp.gt.f32.partialorder %v435, 0.0
        %vm468 = vcmp.gt.f32.partialorder %v436, 0.0
        %vm469 = vcmp.gt.f32.partialorder %v437, 0.0
        %vm470 = vcmp.gt.f32.partialorder %v438, 0.0
        %vm471 = vcmp.gt.f32.partialorder %v439, 0.0
        %vm472 = vcmp.gt.f32.partialorder %v440, 0.0
        %vm473 = vcmp.gt.f32.partialorder %v441, 0.0
        %vm474 = vcmp.gt.f32.partialorder %v442, 0.0
        %vm475 = vcmp.gt.f32.partialorder %v443, 0.0
        %vm476 = vcmp.gt.f32.partialorder %v444, 0.0
        %vm477 = vcmp.gt.f32.partialorder %v445, 0.0
        %vm478 = vcmp.gt.f32.partialorder %v446, 0.0
        %vm479 = vcmp.gt.f32.partialorder %v447, 0.0
        %vm480 = vcmp.gt.f32.partialorder %v448, 0.0
        %vm481 = vcmp.gt.f32.partialorder %v449, 0.0
        %vm482 = vcmp.gt.f32.partialorder %v450, 0.0
        %vm483 = vcmp.gt.f32.partialorder %v451, 0.0
        %vm484 = vcmp.gt.f32.partialorder %v452, 0.0
        %vm485 = vcmp.gt.f32.partialorder %v453, 0.0
        %vm486 = vcmp.gt.f32.partialorder %v454, 0.0
        %vm487 = vcmp.gt.f32.partialorder %v455, 0.0
        %vm488 = vcmp.gt.f32.partialorder %v456, 0.0
        %vm489 = vcmp.gt.f32.partialorder %v457, 0.0
        %vm490 = vcmp.gt.f32.partialorder %v458, 0.0
        %vm491 = vcmp.gt.f32.partialorder %v459, 0.0
        %vm492 = vcmp.gt.f32.partialorder %v460, 0.0
        %vm493 = vcmp.gt.f32.partialorder %v461, 0.0
        %v494 = vsel %vm462, 1, 0
        %v495 = vsel %vm463, 1, 0
        %v496 = vsel %vm464, 1, 0
        %v497 = vsel %vm465, 1, 0
        %v498 = vsel %vm466, 1, 0
        %v499 = vsel %vm467, 1, 0
        %v500 = vsel %vm468, 1, 0
        %v501 = vsel %vm469, 1, 0
        %v502 = vsel %vm470, 1, 0
        %v503 = vsel %vm471, 1, 0
        %v504 = vsel %vm472, 1, 0
        %v505 = vsel %vm473, 1, 0
        %v506 = vsel %vm474, 1, 0
        %v507 = vsel %vm475, 1, 0
        %v508 = vsel %vm476, 1, 0
        %v509 = vsel %vm477, 1, 0
        %v510 = vsel %vm478, 1, 0
        %v511 = vsel %vm479, 1, 0
        %v512 = vsel %vm480, 1, 0
        %v513 = vsel %vm481, 1, 0
        %v514 = vsel %vm482, 1, 0
        %v515 = vsel %vm483, 1, 0
        %v516 = vsel %vm484, 1, 0
        %v517 = vsel %vm485, 1, 0
        %v518 = vsel %vm486, 1, 0
        %v519 = vsel %vm487, 1, 0
        %v520 = vsel %vm488, 1, 0
        %v521 = vsel %vm489, 1, 0
        %v522 = vsel %vm490, 1, 0
        %v523 = vsel %vm491, 1, 0
        %v524 = vsel %vm492, 1, 0
        %v525 = vsel %vm493, 1, 0
        %v526 = vcvt.s32.f32 %v494
        %v527 = vcvt.s32.f32 %v495
        %v528 = vcvt.s32.f32 %v496
        %v529 = vcvt.s32.f32 %v497
        %v530 = vcvt.s32.f32 %v498
        %v531 = vcvt.s32.f32 %v499
        %v532 = vcvt.s32.f32 %v500
        %v533 = vcvt.s32.f32 %v501
        %v534 = vcvt.s32.f32 %v502
        %v535 = vcvt.s32.f32 %v503
        %v536 = vcvt.s32.f32 %v504
        %v537 = vcvt.s32.f32 %v505
        %v538 = vcvt.s32.f32 %v506
        %v539 = vcvt.s32.f32 %v507
        %v540 = vcvt.s32.f32 %v508
        %v541 = vcvt.s32.f32 %v509
        %v542 = vcvt.s32.f32 %v510
        %v543 = vcvt.s32.f32 %v511
        %v544 = vcvt.s32.f32 %v512
        %v545 = vcvt.s32.f32 %v513
        %v546 = vcvt.s32.f32 %v514
        %v547 = vcvt.s32.f32 %v515
        %v548 = vcvt.s32.f32 %v516
        %v549 = vcvt.s32.f32 %v517
        %v550 = vcvt.s32.f32 %v518
        %v551 = vcvt.s32.f32 %v519
        %v552 = vcvt.s32.f32 %v520
        %v553 = vcvt.s32.f32 %v521
        %v554 = vcvt.s32.f32 %v522
        %v555 = vcvt.s32.f32 %v523
        %v556 = vcvt.s32.f32 %v524
        %v557 = vcvt.s32.f32 %v525
        %v558 = vpack.c.bf16 %v527, %v526
        %v559 = vpack.c.bf16 %v529, %v528
        %v560 = vpack.c.bf16 %v531, %v530
        %v561 = vpack.c.bf16 %v533, %v532
        %v562 = vpack.c.bf16 %v535, %v534
        %v563 = vpack.c.bf16 %v537, %v536
        %v564 = vpack.c.bf16 %v539, %v538
        %v565 = vpack.c.bf16 %v541, %v540
        %v566 = vpack.c.bf16 %v543, %v542
        %v567 = vpack.c.bf16 %v545, %v544
        %v568 = vpack.c.bf16 %v547, %v546
        %v569 = vpack.c.bf16 %v549, %v548
        %v570 = vpack.c.bf16 %v551, %v550
        %v571 = vpack.c.bf16 %v553, %v552
        %v572 = vpack.c.bf16 %v555, %v554
        %v573 = vpack.c.bf16 %v557, %v556
        %vm574 = vcmask 60416
        %575 = vst.msk [vmem:[#allocation2] sm:$0xf] %vm574, 0
        %576 = vst.msk [vmem:[#allocation2 + $0x4] sm:$0xf] %vm574, 0
        %vm577 = vcmask 57344
        %578 = vst.msk [vmem:[#allocation2 + $0x8] sm:$0x1] %vm577, 0
        %579 = vst.msk [vmem:[#allocation2 + $0xc] sm:$0xf] %vm574, 0
        %580 = vst.msk [vmem:[#allocation2 + $0x10] sm:$0xf] %vm574, 0
        %581 = vst.msk [vmem:[#allocation2 + $0x14] sm:$0x1] %vm577, 0
        %582 = vst.msk [vmem:[#allocation2 + $0x18] sm:$0xf] %vm574, 0
        %583 = vst.msk [vmem:[#allocation2 + $0x1c] sm:$0xf] %vm574, 0
        %584 = vst.msk [vmem:[#allocation2 + $0x20] sm:$0x1] %vm577, 0
        %585 = vst.msk [vmem:[#allocation2 + $0x24] sm:$0xf] %vm574, 0
        %586 = vst.msk [vmem:[#allocation2 + $0x28] sm:$0xf] %vm574, 0
        %587 = vst.msk [vmem:[#allocation2 + $0x2c] sm:$0x1] %vm577, 0
        %588 = vst.msk [vmem:[#allocation2 + $0x30] sm:$0xf] %vm574, 0
        %589 = vst.msk [vmem:[#allocation2 + $0x34] sm:$0xf] %vm574, 0
        %590 = vst.msk [vmem:[#allocation2 + $0x38] sm:$0x1] %vm577, 0
        %591 = vst.msk [vmem:[#allocation2 + $0x3c] sm:$0xf] %vm574, 0
        %592 = vst.msk [vmem:[#allocation2 + $0x40] sm:$0xf] %vm574, 0
        %593 = vst.msk [vmem:[#allocation2 + $0x44] sm:$0x1] %vm577, 0
        %594 = vst.msk [vmem:[#allocation2 + $0x48] sm:$0xf] %vm574, 0
        %595 = vst.msk [vmem:[#allocation2 + $0x4c] sm:$0xf] %vm574, 0
        %596 = vst.msk [vmem:[#allocation2 + $0x50] sm:$0x1] %vm577, 0
        %597 = vst.msk [vmem:[#allocation2 + $0x54] sm:$0xf] %vm574, 0
        %598 = vst.msk [vmem:[#allocation2 + $0x58] sm:$0xf] %vm574, 0
        %599 = vst.msk [vmem:[#allocation2 + $0x5c] sm:$0x1] %vm577, 0
        %600 = vst.msk [vmem:[#allocation2 + $0x60] sm:$0xf] %vm574, 0
        %601 = vst.msk [vmem:[#allocation2 + $0x64] sm:$0xf] %vm574, 0
        %602 = vst.msk [vmem:[#allocation2 + $0x68] sm:$0x1] %vm577, 0
        %603 = vst.msk [vmem:[#allocation2 + $0x6c] sm:$0xf] %vm574, 0
        %604 = vst.msk [vmem:[#allocation2 + $0x70] sm:$0xf] %vm574, 0
        %605 = vst.msk [vmem:[#allocation2 + $0x74] sm:$0x1] %vm577, 0
        %606 = vst.msk [vmem:[#allocation2 + $0x78] sm:$0xf] %vm574, 0
        %607 = vst.msk [vmem:[#allocation2 + $0x7c] sm:$0xf] %vm574, 0
        %608 = vst.msk [vmem:[#allocation2 + $0x80] sm:$0x1] %vm577, 0
        %609 = vst.msk [vmem:[#allocation2 + $0x84] sm:$0xf] %vm574, 0
        %610 = vst.msk [vmem:[#allocation2 + $0x88] sm:$0xf] %vm574, 0
        %611 = vst.msk [vmem:[#allocation2 + $0x8c] sm:$0x1] %vm577, 0
        %612 = vst.msk [vmem:[#allocation2 + $0x90] sm:$0xf] %vm574, 0
        %613 = vst.msk [vmem:[#allocation2 + $0x94] sm:$0xf] %vm574, 0
        %614 = vst.msk [vmem:[#allocation2 + $0x98] sm:$0x1] %vm577, 0
        %615 = vst.msk [vmem:[#allocation2 + $0x9c] sm:$0xf] %vm574, 0
        %616 = vst.msk [vmem:[#allocation2 + $0xa0] sm:$0xf] %vm574, 0
        %617 = vst.msk [vmem:[#allocation2 + $0xa4] sm:$0x1] %vm577, 0
        %618 = vst.msk [vmem:[#allocation2 + $0xa8] sm:$0xf] %vm574, 0
        %619 = vst.msk [vmem:[#allocation2 + $0xac] sm:$0xf] %vm574, 0
        %620 = vst.msk [vmem:[#allocation2 + $0xb0] sm:$0x1] %vm577, 0
        %621 = vst.msk [vmem:[#allocation2 + $0xb4] sm:$0xf] %vm574, 0
        %622 = vst.msk [vmem:[#allocation2 + $0xb8] sm:$0xf] %vm574, 0
        %623 = vst.msk [vmem:[#allocation2 + $0xbc] sm:$0x1] %vm577, 0
        %624 = vst.msk [vmem:[#allocation2 + $0xc0] sm:$0xf] %vm574, 0
        %625 = vst.msk [vmem:[#allocation2 + $0xc4] sm:$0xf] %vm574, 0
        %626 = vst.msk [vmem:[#allocation2 + $0xc8] sm:$0x1] %vm577, 0
        %627 = vst.msk [vmem:[#allocation2 + $0xcc] sm:$0xf] %vm574, 0
        %628 = vst.msk [vmem:[#allocation2 + $0xd0] sm:$0xf] %vm574, 0
        %629 = vst.msk [vmem:[#allocation2 + $0xd4] sm:$0x1] %vm577, 0
        %v646 = vunpack.c.l.b16 %v558
        %v647 = vunpack.c.h.b16 %v558
        %v648 = vunpack.c.l.b16 %v559
        %v649 = vunpack.c.h.b16 %v559
        %v650 = vunpack.c.l.b16 %v560
        %v651 = vunpack.c.h.b16 %v560
        %v652 = vunpack.c.l.b16 %v561
        %v653 = vunpack.c.h.b16 %v561
        %v654 = vunpack.c.l.b16 %v562
        %v655 = vunpack.c.h.b16 %v562
        %v656 = vunpack.c.l.b16 %v563
        %v657 = vunpack.c.h.b16 %v563
        %v658 = vunpack.c.l.b16 %v564
        %v659 = vunpack.c.h.b16 %v564
        %v660 = vunpack.c.l.b16 %v565
        %v661 = vunpack.c.h.b16 %v565
        %v662 = vunpack.c.l.b16 %v566
        %v663 = vunpack.c.h.b16 %v566
        %v664 = vunpack.c.l.b16 %v567
        %v665 = vunpack.c.h.b16 %v567
        %v666 = vunpack.c.l.b16 %v568
        %v667 = vunpack.c.h.b16 %v568
        %v668 = vunpack.c.l.b16 %v569
        %v669 = vunpack.c.h.b16 %v569
        %v670 = vunpack.c.l.b16 %v570
        %v671 = vunpack.c.h.b16 %v570
        %v672 = vunpack.c.l.b16 %v571
        %v673 = vunpack.c.h.b16 %v571
        %v674 = vunpack.c.l.b16 %v572
        %v675 = vunpack.c.h.b16 %v572
        %v676 = vunpack.c.l.b16 %v573
        %v677 = vunpack.c.h.b16 %v573
        %v678 = vpack.c.b16 %v646, %v646
        %v679 = vpack.c.b16 %v647, %v647
        %v680 = vpack.c.b16 %v648, %v648
        %v681 = vpack.c.b16 %v649, %v649
        %v682 = vpack.c.b16 %v650, %v650
        %v683 = vpack.c.b16 %v651, %v651
        %v684 = vpack.c.b16 %v652, %v652
        %v685 = vpack.c.b16 %v653, %v653
        %v686 = vpack.c.b16 %v654, %v654
        %v687 = vpack.c.b16 %v655, %v655
        %v688 = vpack.c.b16 %v656, %v656
        %v689 = vpack.c.b16 %v657, %v657
        %v690 = vpack.c.b16 %v658, %v658
        %v691 = vpack.c.b16 %v659, %v659
        %v692 = vpack.c.b16 %v660, %v660
        %v693 = vpack.c.b16 %v661, %v661
        %v694 = vpack.c.b16 %v662, %v662
        %v695 = vpack.c.b16 %v663, %v663
        %v696 = vpack.c.b16 %v664, %v664
        %v697 = vpack.c.b16 %v665, %v665
        %v698 = vpack.c.b16 %v666, %v666
        %v699 = vpack.c.b16 %v667, %v667
        %v700 = vpack.c.b16 %v668, %v668
        %v701 = vpack.c.b16 %v669, %v669
        %v702 = vpack.c.b16 %v670, %v670
        %v703 = vpack.c.b16 %v671, %v671
        %v704 = vpack.c.b16 %v672, %v672
        %v705 = vpack.c.b16 %v673, %v673
        %v706 = vpack.c.b16 %v674, %v674
        %v707 = vpack.c.b16 %v675, %v675
        %v708 = vpack.c.b16 %v676, %v676
        %v709 = vpack.c.b16 %v677, %v677
        %vm710 = vsmask.f32 256
        %vm711 = vsmask.f32 4368
        %vm712 = vmor %vm710, %vm711
        %v714 = vshrl.u32 %v678, 16
        %v716 = vrot.slane %v714, 7
        %v717 = vshll.u32 %v678, 16
        %v719 = vor.u32 %v716, %v717
        %v720 = vrot.slane %v716, 4
        %v722 = vshrl.u32 %v679, 16
        %v724 = vrot.slane %v722, 7
        %v725 = vshll.u32 %v679, 16
        %v727 = vor.u32 %v724, %v725
        %v728 = vsel %vm712, %v720, %v727
        %v729 = vrot.slane %v724, 4
        %v731 = vshrl.u32 %v680, 16
        %v733 = vrot.slane %v731, 7
        %v734 = vshll.u32 %v680, 16
        %v736 = vor.u32 %v733, %v734
        %v737 = vrot.slane %v733, 4
        %v739 = vshrl.u32 %v681, 16
        %v741 = vrot.slane %v739, 7
        %v742 = vshll.u32 %v681, 16
        %v744 = vor.u32 %v741, %v742
        %v745 = vsel %vm712, %v737, %v744
        %v746 = vrot.slane %v741, 4
        %v748 = vshrl.u32 %v682, 16
        %v750 = vrot.slane %v748, 7
        %v751 = vshll.u32 %v682, 16
        %v753 = vor.u32 %v750, %v751
        %v754 = vrot.slane %v750, 4
        %v756 = vshrl.u32 %v683, 16
        %v758 = vrot.slane %v756, 7
        %v759 = vshll.u32 %v683, 16
        %v761 = vor.u32 %v758, %v759
        %v762 = vsel %vm712, %v754, %v761
        %v763 = vrot.slane %v758, 4
        %v765 = vshrl.u32 %v684, 16
        %v767 = vrot.slane %v765, 7
        %v768 = vshll.u32 %v684, 16
        %v770 = vor.u32 %v767, %v768
        %v771 = vrot.slane %v767, 4
        %v773 = vshrl.u32 %v685, 16
        %v775 = vrot.slane %v773, 7
        %v776 = vshll.u32 %v685, 16
        %v778 = vor.u32 %v775, %v776
        %v779 = vsel %vm712, %v771, %v778
        %v780 = vrot.slane %v775, 4
        %v782 = vshrl.u32 %v686, 16
        %v784 = vrot.slane %v782, 7
        %v785 = vshll.u32 %v686, 16
        %v787 = vor.u32 %v784, %v785
        %v788 = vrot.slane %v784, 4
        %v790 = vshrl.u32 %v687, 16
        %v792 = vrot.slane %v790, 7
        %v793 = vshll.u32 %v687, 16
        %v795 = vor.u32 %v792, %v793
        %v796 = vsel %vm712, %v788, %v795
        %v797 = vrot.slane %v792, 4
        %v799 = vshrl.u32 %v688, 16
        %v801 = vrot.slane %v799, 7
        %v802 = vshll.u32 %v688, 16
        %v804 = vor.u32 %v801, %v802
        %v805 = vrot.slane %v801, 4
        %v807 = vshrl.u32 %v689, 16
        %v809 = vrot.slane %v807, 7
        %v810 = vshll.u32 %v689, 16
        %v812 = vor.u32 %v809, %v810
        %v813 = vsel %vm712, %v805, %v812
        %v814 = vrot.slane %v809, 4
        %v816 = vshrl.u32 %v690, 16
        %v818 = vrot.slane %v816, 7
        %v819 = vshll.u32 %v690, 16
        %v821 = vor.u32 %v818, %v819
        %v822 = vrot.slane %v818, 4
        %v824 = vshrl.u32 %v691, 16
        %v826 = vrot.slane %v824, 7
        %v827 = vshll.u32 %v691, 16
        %v829 = vor.u32 %v826, %v827
        %v830 = vsel %vm712, %v822, %v829
        %v831 = vrot.slane %v826, 4
        %v833 = vshrl.u32 %v692, 16
        %v835 = vrot.slane %v833, 7
        %v836 = vshll.u32 %v692, 16
        %v838 = vor.u32 %v835, %v836
        %v839 = vrot.slane %v835, 4
        %v841 = vshrl.u32 %v693, 16
        %v843 = vrot.slane %v841, 7
        %v844 = vshll.u32 %v693, 16
        %v846 = vor.u32 %v843, %v844
        %v847 = vsel %vm712, %v839, %v846
        %v848 = vrot.slane %v843, 4
        %v850 = vshrl.u32 %v694, 16
        %v852 = vrot.slane %v850, 7
        %v853 = vshll.u32 %v694, 16
        %v855 = vor.u32 %v852, %v853
        %v856 = vrot.slane %v852, 4
        %v858 = vshrl.u32 %v695, 16
        %v860 = vrot.slane %v858, 7
        %v861 = vshll.u32 %v695, 16
        %v863 = vor.u32 %v860, %v861
        %v864 = vsel %vm712, %v856, %v863
        %v865 = vrot.slane %v860, 4
        %v867 = vshrl.u32 %v696, 16
        %v869 = vrot.slane %v867, 7
        %v870 = vshll.u32 %v696, 16
        %v872 = vor.u32 %v869, %v870
        %v873 = vrot.slane %v869, 4
        %v875 = vshrl.u32 %v697, 16
        %v877 = vrot.slane %v875, 7
        %v878 = vshll.u32 %v697, 16
        %v880 = vor.u32 %v877, %v878
        %v881 = vsel %vm712, %v873, %v880
        %v882 = vrot.slane %v877, 4
        %v884 = vshrl.u32 %v698, 16
        %v886 = vrot.slane %v884, 7
        %v887 = vshll.u32 %v698, 16
        %v889 = vor.u32 %v886, %v887
        %v890 = vrot.slane %v886, 4
        %v892 = vshrl.u32 %v699, 16
        %v894 = vrot.slane %v892, 7
        %v895 = vshll.u32 %v699, 16
        %v897 = vor.u32 %v894, %v895
        %v898 = vsel %vm712, %v890, %v897
        %v899 = vrot.slane %v894, 4
        %v901 = vshrl.u32 %v700, 16
        %v903 = vrot.slane %v901, 7
        %v904 = vshll.u32 %v700, 16
        %v906 = vor.u32 %v903, %v904
        %v907 = vrot.slane %v903, 4
        %v909 = vshrl.u32 %v701, 16
        %v911 = vrot.slane %v909, 7
        %v912 = vshll.u32 %v701, 16
        %v914 = vor.u32 %v911, %v912
        %v915 = vsel %vm712, %v907, %v914
        %v916 = vrot.slane %v911, 4
        %v918 = vshrl.u32 %v702, 16
        %v920 = vrot.slane %v918, 7
        %v921 = vshll.u32 %v702, 16
        %v923 = vor.u32 %v920, %v921
        %v924 = vrot.slane %v920, 4
        %v926 = vshrl.u32 %v703, 16
        %v928 = vrot.slane %v926, 7
        %v929 = vshll.u32 %v703, 16
        %v931 = vor.u32 %v928, %v929
        %v932 = vsel %vm712, %v924, %v931
        %v933 = vrot.slane %v928, 4
        %v935 = vshrl.u32 %v704, 16
        %v937 = vrot.slane %v935, 7
        %v938 = vshll.u32 %v704, 16
        %v940 = vor.u32 %v937, %v938
        %v941 = vrot.slane %v937, 4
        %v943 = vshrl.u32 %v705, 16
        %v945 = vrot.slane %v943, 7
        %v946 = vshll.u32 %v705, 16
        %v948 = vor.u32 %v945, %v946
        %v949 = vsel %vm712, %v941, %v948
        %v950 = vrot.slane %v945, 4
        %v952 = vshrl.u32 %v706, 16
        %v954 = vrot.slane %v952, 7
        %v955 = vshll.u32 %v706, 16
        %v957 = vor.u32 %v954, %v955
        %v958 = vrot.slane %v954, 4
        %v960 = vshrl.u32 %v707, 16
        %v962 = vrot.slane %v960, 7
        %v963 = vshll.u32 %v707, 16
        %v965 = vor.u32 %v962, %v963
        %v966 = vsel %vm712, %v958, %v965
        %v967 = vrot.slane %v962, 4
        %v969 = vshrl.u32 %v708, 16
        %v971 = vrot.slane %v969, 7
        %v972 = vshll.u32 %v708, 16
        %v974 = vor.u32 %v971, %v972
        %v975 = vrot.slane %v971, 4
        %v977 = vshrl.u32 %v709, 16
        %v979 = vrot.slane %v977, 7
        %v980 = vshll.u32 %v709, 16
        %v982 = vor.u32 %v979, %v980
        %v983 = vsel %vm712, %v975, %v982
        %v984 = vrot.slane %v979, 4
        %s1033 = scalar_lea.vmem [#allocation2], 12
        %vm1034 = vcmask 60416
        %vm1035 = vsmask.f32 7938
        %vm1036 = vmand %vm1034, %vm1035
        %v1037 = vld [vmem:[%s1033] sm:$0xf]
        %v1038 = vsel %vm1036, %v719, %v1037
        %1039 = vst [vmem:[%s1033] sm:$0xf] %v1038
        %1040 = vst.msk [vmem:[%s1033 + $0x4] sm:$0xf] %vm574, %v728
        %vm1041 = vcmask 57344
        %vm1042 = vmand %vm1041, %vm710
        %v1043 = vld [vmem:[%s1033 + $0x8] sm:$0x1]
        %v1044 = vsel %vm1042, %v729, %v1043
        %1045 = vst [vmem:[%s1033 + $0x8] sm:$0x1] %v1044
        %v1046 = vld [vmem:[%s1033 + $0xc] sm:$0xf]
        %v1047 = vsel %vm1036, %v736, %v1046
        %1048 = vst [vmem:[%s1033 + $0xc] sm:$0xf] %v1047
        %1049 = vst.msk [vmem:[%s1033 + $0x10] sm:$0xf] %vm574, %v745
        %v1050 = vld [vmem:[%s1033 + $0x14] sm:$0x1]
        %v1051 = vsel %vm1042, %v746, %v1050
        %1052 = vst [vmem:[%s1033 + $0x14] sm:$0x1] %v1051
        %v1053 = vld [vmem:[%s1033 + $0x18] sm:$0xf]
        %v1054 = vsel %vm1036, %v753, %v1053
        %1055 = vst [vmem:[%s1033 + $0x18] sm:$0xf] %v1054
        %1056 = vst.msk [vmem:[%s1033 + $0x1c] sm:$0xf] %vm574, %v762
        %v1057 = vld [vmem:[%s1033 + $0x20] sm:$0x1]
        %v1058 = vsel %vm1042, %v763, %v1057
        %1059 = vst [vmem:[%s1033 + $0x20] sm:$0x1] %v1058
        %v1060 = vld [vmem:[%s1033 + $0x24] sm:$0xf]
        %v1061 = vsel %vm1036, %v770, %v1060
        %1062 = vst [vmem:[%s1033 + $0x24] sm:$0xf] %v1061
        %1063 = vst.msk [vmem:[%s1033 + $0x28] sm:$0xf] %vm574, %v779
        %v1064 = vld [vmem:[%s1033 + $0x2c] sm:$0x1]
        %v1065 = vsel %vm1042, %v780, %v1064
        %1066 = vst [vmem:[%s1033 + $0x2c] sm:$0x1] %v1065
        %v1067 = vld [vmem:[%s1033 + $0x30] sm:$0xf]
        %v1068 = vsel %vm1036, %v787, %v1067
        %1069 = vst [vmem:[%s1033 + $0x30] sm:$0xf] %v1068
        %1070 = vst.msk [vmem:[%s1033 + $0x34] sm:$0xf] %vm574, %v796
        %v1071 = vld [vmem:[%s1033 + $0x38] sm:$0x1]
        %v1072 = vsel %vm1042, %v797, %v1071
        %1073 = vst [vmem:[%s1033 + $0x38] sm:$0x1] %v1072
        %v1074 = vld [vmem:[%s1033 + $0x3c] sm:$0xf]
        %v1075 = vsel %vm1036, %v804, %v1074
        %1076 = vst [vmem:[%s1033 + $0x3c] sm:$0xf] %v1075
        %1077 = vst.msk [vmem:[%s1033 + $0x40] sm:$0xf] %vm574, %v813
        %v1078 = vld [vmem:[%s1033 + $0x44] sm:$0x1]
        %v1079 = vsel %vm1042, %v814, %v1078
        %1080 = vst [vmem:[%s1033 + $0x44] sm:$0x1] %v1079
        %v1081 = vld [vmem:[%s1033 + $0x48] sm:$0xf]
        %v1082 = vsel %vm1036, %v821, %v1081
        %1083 = vst [vmem:[%s1033 + $0x48] sm:$0xf] %v1082
        %1084 = vst.msk [vmem:[%s1033 + $0x4c] sm:$0xf] %vm574, %v830
        %v1085 = vld [vmem:[%s1033 + $0x50] sm:$0x1]
        %v1086 = vsel %vm1042, %v831, %v1085
        %1087 = vst [vmem:[%s1033 + $0x50] sm:$0x1] %v1086
        %v1088 = vld [vmem:[%s1033 + $0x54] sm:$0xf]
        %v1089 = vsel %vm1036, %v838, %v1088
        %1090 = vst [vmem:[%s1033 + $0x54] sm:$0xf] %v1089
        %1091 = vst.msk [vmem:[%s1033 + $0x58] sm:$0xf] %vm574, %v847
        %v1092 = vld [vmem:[%s1033 + $0x5c] sm:$0x1]
        %v1093 = vsel %vm1042, %v848, %v1092
        %1094 = vst [vmem:[%s1033 + $0x5c] sm:$0x1] %v1093
        %v1095 = vld [vmem:[%s1033 + $0x60] sm:$0xf]
        %v1096 = vsel %vm1036, %v855, %v1095
        %1097 = vst [vmem:[%s1033 + $0x60] sm:$0xf] %v1096
        %1098 = vst.msk [vmem:[%s1033 + $0x64] sm:$0xf] %vm574, %v864
        %v1099 = vld [vmem:[%s1033 + $0x68] sm:$0x1]
        %v1100 = vsel %vm1042, %v865, %v1099
        %1101 = vst [vmem:[%s1033 + $0x68] sm:$0x1] %v1100
        %v1102 = vld [vmem:[%s1033 + $0x6c] sm:$0xf]
        %v1103 = vsel %vm1036, %v872, %v1102
        %1104 = vst [vmem:[%s1033 + $0x6c] sm:$0xf] %v1103
        %1105 = vst.msk [vmem:[%s1033 + $0x70] sm:$0xf] %vm574, %v881
        %v1106 = vld [vmem:[%s1033 + $0x74] sm:$0x1]
        %v1107 = vsel %vm1042, %v882, %v1106
        %1108 = vst [vmem:[%s1033 + $0x74] sm:$0x1] %v1107
        %v1109 = vld [vmem:[%s1033 + $0x78] sm:$0xf]
        %v1110 = vsel %vm1036, %v889, %v1109
        %1111 = vst [vmem:[%s1033 + $0x78] sm:$0xf] %v1110
        %1112 = vst.msk [vmem:[%s1033 + $0x7c] sm:$0xf] %vm574, %v898
        %v1113 = vld [vmem:[%s1033 + $0x80] sm:$0x1]
        %v1114 = vsel %vm1042, %v899, %v1113
        %1115 = vst [vmem:[%s1033 + $0x80] sm:$0x1] %v1114
        %v1116 = vld [vmem:[%s1033 + $0x84] sm:$0xf]
        %v1117 = vsel %vm1036, %v906, %v1116
        %1118 = vst [vmem:[%s1033 + $0x84] sm:$0xf] %v1117
        %1119 = vst.msk [vmem:[%s1033 + $0x88] sm:$0xf] %vm574, %v915
        %v1120 = vld [vmem:[%s1033 + $0x8c] sm:$0x1]
        %v1121 = vsel %vm1042, %v916, %v1120
        %1122 = vst [vmem:[%s1033 + $0x8c] sm:$0x1] %v1121
        %v1123 = vld [vmem:[%s1033 + $0x90] sm:$0xf]
        %v1124 = vsel %vm1036, %v923, %v1123
        %1125 = vst [vmem:[%s1033 + $0x90] sm:$0xf] %v1124
        %1126 = vst.msk [vmem:[%s1033 + $0x94] sm:$0xf] %vm574, %v932
        %v1127 = vld [vmem:[%s1033 + $0x98] sm:$0x1]
        %v1128 = vsel %vm1042, %v933, %v1127
        %1129 = vst [vmem:[%s1033 + $0x98] sm:$0x1] %v1128
        %v1130 = vld [vmem:[%s1033 + $0x9c] sm:$0xf]
        %v1131 = vsel %vm1036, %v940, %v1130
        %1132 = vst [vmem:[%s1033 + $0x9c] sm:$0xf] %v1131
        %1133 = vst.msk [vmem:[%s1033 + $0xa0] sm:$0xf] %vm574, %v949
        %v1134 = vld [vmem:[%s1033 + $0xa4] sm:$0x1]
        %v1135 = vsel %vm1042, %v950, %v1134
        %1136 = vst [vmem:[%s1033 + $0xa4] sm:$0x1] %v1135
        %v1137 = vld [vmem:[%s1033 + $0xa8] sm:$0xf]
        %v1138 = vsel %vm1036, %v957, %v1137
        %1139 = vst [vmem:[%s1033 + $0xa8] sm:$0xf] %v1138
        %1140 = vst.msk [vmem:[%s1033 + $0xac] sm:$0xf] %vm574, %v966
        %v1141 = vld [vmem:[%s1033 + $0xb0] sm:$0x1]
        %v1142 = vsel %vm1042, %v967, %v1141
        %1143 = vst [vmem:[%s1033 + $0xb0] sm:$0x1] %v1142
        %v1144 = vld [vmem:[%s1033 + $0xb4] sm:$0xf]
        %v1145 = vsel %vm1036, %v974, %v1144
        %1146 = vst [vmem:[%s1033 + $0xb4] sm:$0xf] %v1145
        %1147 = vst.msk [vmem:[%s1033 + $0xb8] sm:$0xf] %vm574, %v983
        %v1148 = vld [vmem:[%s1033 + $0xbc] sm:$0x1]
        %v1149 = vsel %vm1042, %v984, %v1148
        %1150 = vst [vmem:[%s1033 + $0xbc] sm:$0x1] %v1149
      $region48: #{tpu_custom_call.1} parent=43 // pred_fallthru
        _
      %v1151 = vld [vmem:[#allocation2] sm:$0xf]
      %v1152 = vld [vmem:[#allocation2 + $0x4] sm:$0xf]
      %v1153 = vld [vmem:[#allocation2 + $0xc] sm:$0xf]
      %v1154 = vld [vmem:[#allocation2 + $0x10] sm:$0xf]
      %v1155 = vld [vmem:[#allocation2 + $0x18] sm:$0xf]
      %v1156 = vld [vmem:[#allocation2 + $0x1c] sm:$0xf]
      %v1157 = vld [vmem:[#allocation2 + $0x24] sm:$0xf]
      %v1158 = vld [vmem:[#allocation2 + $0x28] sm:$0xf]
      %v1159 = vld [vmem:[#allocation2 + $0x30] sm:$0xf]
      %v1160 = vld [vmem:[#allocation2 + $0x34] sm:$0xf]
      %v1161 = vld [vmem:[#allocation2 + $0x3c] sm:$0xf]
      %v1162 = vld [vmem:[#allocation2 + $0x40] sm:$0xf]
      %v1163 = vld [vmem:[#allocation2 + $0x48] sm:$0xf]
      %v1164 = vld [vmem:[#allocation2 + $0x4c] sm:$0xf]
      %v1165 = vld [vmem:[#allocation2 + $0x54] sm:$0xf]
      %v1166 = vld [vmem:[#allocation2 + $0x58] sm:$0xf]
      %v1167 = vld [vmem:[#allocation2 + $0x60] sm:$0xf]
      %v1168 = vld [vmem:[#allocation2 + $0x64] sm:$0xf]
      %v1169 = vld [vmem:[#allocation2 + $0x6c] sm:$0xf]
      %v1170 = vld [vmem:[#allocation2 + $0x70] sm:$0xf]
      %v1171 = vld [vmem:[#allocation2 + $0x78] sm:$0xf]
      %v1172 = vld [vmem:[#allocation2 + $0x7c] sm:$0xf]
      %v1173 = vld [vmem:[#allocation2 + $0x84] sm:$0xf]
      %v1174 = vld [vmem:[#allocation2 + $0x88] sm:$0xf]
      %v1175 = vld [vmem:[#allocation2 + $0x90] sm:$0xf]
      %v1176 = vld [vmem:[#allocation2 + $0x94] sm:$0xf]
      %v1177 = vld [vmem:[#allocation2 + $0x9c] sm:$0xf]
      %v1178 = vld [vmem:[#allocation2 + $0xa0] sm:$0xf]
      %v1179 = vld [vmem:[#allocation2 + $0xa8] sm:$0xf]
      %v1180 = vld [vmem:[#allocation2 + $0xac] sm:$0xf]
      %v1181 = vld [vmem:[#allocation2 + $0xb4] sm:$0xf]
      %v1182 = vld [vmem:[#allocation2 + $0xb8] sm:$0xf]
      %v1183 = vld [vmem:[%s295] sm:$0xf]
      %v1184 = vld [vmem:[%s295 + $0x4] sm:$0xf]
      %v1185 = vld [vmem:[#allocation2 + $0x8] sm:$0x1]
      %v1186 = vld [vmem:[#allocation2 + $0x14] sm:$0x1]
      %v1187 = vld [vmem:[#allocation2 + $0x20] sm:$0x1]
      %v1188 = vld [vmem:[#allocation2 + $0x2c] sm:$0x1]
      %v1189 = vld [vmem:[#allocation2 + $0x38] sm:$0x1]
      %v1190 = vld [vmem:[#allocation2 + $0x44] sm:$0x1]
      %v1191 = vld [vmem:[#allocation2 + $0x50] sm:$0x1]
      %v1192 = vld [vmem:[#allocation2 + $0x5c] sm:$0x1]
      %v1193 = vld [vmem:[#allocation2 + $0x68] sm:$0x1]
      %v1194 = vld [vmem:[#allocation2 + $0x74] sm:$0x1]
      %v1195 = vld [vmem:[#allocation2 + $0x80] sm:$0x1]
      %v1196 = vld [vmem:[#allocation2 + $0x8c] sm:$0x1]
      %v1197 = vld [vmem:[#allocation2 + $0x98] sm:$0x1]
      %v1198 = vld [vmem:[#allocation2 + $0xa4] sm:$0x1]
      %v1199 = vld [vmem:[#allocation2 + $0xb0] sm:$0x1]
      %v1200 = vld [vmem:[#allocation2 + $0xbc] sm:$0x1]
      %vm1201 = vsmask.f32 3328
      %vm1202 = vsmask.f32 7440
      %vm1203 = vmor %vm1201, %vm1202
      %v1205 = vshrl.u32 %v1151, 16
      %v1207 = vrot.slane %v1205, 4
      %v1208 = vshll.u32 %v1151, 16
      %v1210 = vrot.slane %v1208, 5
      %v1211 = vor.u32 %v1207, %v1210
      %v1212 = vrot.slane %v1211, 4
      %v1214 = vshll.u32 %v1152, 16
      %v1216 = vrot.slane %v1214, 5
      %v1217 = vsel %vm1203, %v1212, %v1216
      %v1218 = vshrl.u32 %v1152, 16
      %v1220 = vrot.slane %v1218, 4
      %v1221 = vor.u32 %v1220, %v1216
      %v1222 = vrot.slane %v1221, 4
      %v1224 = vshll.u32 %v1185, 16
      %v1226 = vrot.slane %v1224, 5
      %v1227 = vsel %vm1203, %v1222, %v1226
      %v1229 = vshrl.u32 %v1153, 16
      %v1231 = vrot.slane %v1229, 4
      %v1232 = vshll.u32 %v1153, 16
      %v1234 = vrot.slane %v1232, 5
      %v1235 = vor.u32 %v1231, %v1234
      %v1236 = vrot.slane %v1235, 4
      %v1238 = vshll.u32 %v1154, 16
      %v1240 = vrot.slane %v1238, 5
      %v1241 = vsel %vm1203, %v1236, %v1240
      %v1242 = vshrl.u32 %v1154, 16
      %v1244 = vrot.slane %v1242, 4
      %v1245 = vor.u32 %v1244, %v1240
      %v1246 = vrot.slane %v1245, 4
      %v1248 = vshll.u32 %v1186, 16
      %v1250 = vrot.slane %v1248, 5
      %v1251 = vsel %vm1203, %v1246, %v1250
      %v1253 = vshrl.u32 %v1155, 16
      %v1255 = vrot.slane %v1253, 4
      %v1256 = vshll.u32 %v1155, 16
      %v1258 = vrot.slane %v1256, 5
      %v1259 = vor.u32 %v1255, %v1258
      %v1260 = vrot.slane %v1259, 4
      %v1262 = vshll.u32 %v1156, 16
      %v1264 = vrot.slane %v1262, 5
      %v1265 = vsel %vm1203, %v1260, %v1264
      %v1266 = vshrl.u32 %v1156, 16
      %v1268 = vrot.slane %v1266, 4
      %v1269 = vor.u32 %v1268, %v1264
      %v1270 = vrot.slane %v1269, 4
      %v1272 = vshll.u32 %v1187, 16
      %v1274 = vrot.slane %v1272, 5
      %v1275 = vsel %vm1203, %v1270, %v1274
      %v1277 = vshrl.u32 %v1157, 16
      %v1279 = vrot.slane %v1277, 4
      %v1280 = vshll.u32 %v1157, 16
      %v1282 = vrot.slane %v1280, 5
      %v1283 = vor.u32 %v1279, %v1282
      %v1284 = vrot.slane %v1283, 4
      %v1286 = vshll.u32 %v1158, 16
      %v1288 = vrot.slane %v1286, 5
      %v1289 = vsel %vm1203, %v1284, %v1288
      %v1290 = vshrl.u32 %v1158, 16
      %v1292 = vrot.slane %v1290, 4
      %v1293 = vor.u32 %v1292, %v1288
      %v1294 = vrot.slane %v1293, 4
      %v1296 = vshll.u32 %v1188, 16
      %v1298 = vrot.slane %v1296, 5
      %v1299 = vsel %vm1203, %v1294, %v1298
      %v1301 = vshrl.u32 %v1159, 16
      %v1303 = vrot.slane %v1301, 4
      %v1304 = vshll.u32 %v1159, 16
      %v1306 = vrot.slane %v1304, 5
      %v1307 = vor.u32 %v1303, %v1306
      %v1308 = vrot.slane %v1307, 4
      %v1310 = vshll.u32 %v1160, 16
      %v1312 = vrot.slane %v1310, 5
      %v1313 = vsel %vm1203, %v1308, %v1312
      %v1314 = vshrl.u32 %v1160, 16
      %v1316 = vrot.slane %v1314, 4
      %v1317 = vor.u32 %v1316, %v1312
      %v1318 = vrot.slane %v1317, 4
      %v1320 = vshll.u32 %v1189, 16
      %v1322 = vrot.slane %v1320, 5
      %v1323 = vsel %vm1203, %v1318, %v1322
      %v1325 = vshrl.u32 %v1161, 16
      %v1327 = vrot.slane %v1325, 4
      %v1328 = vshll.u32 %v1161, 16
      %v1330 = vrot.slane %v1328, 5
      %v1331 = vor.u32 %v1327, %v1330
      %v1332 = vrot.slane %v1331, 4
      %v1334 = vshll.u32 %v1162, 16
      %v1336 = vrot.slane %v1334, 5
      %v1337 = vsel %vm1203, %v1332, %v1336
      %v1338 = vshrl.u32 %v1162, 16
      %v1340 = vrot.slane %v1338, 4
      %v1341 = vor.u32 %v1340, %v1336
      %v1342 = vrot.slane %v1341, 4
      %v1344 = vshll.u32 %v1190, 16
      %v1346 = vrot.slane %v1344, 5
      %v1347 = vsel %vm1203, %v1342, %v1346
      %v1349 = vshrl.u32 %v1163, 16
      %v1351 = vrot.slane %v1349, 4
      %v1352 = vshll.u32 %v1163, 16
      %v1354 = vrot.slane %v1352, 5
      %v1355 = vor.u32 %v1351, %v1354
      %v1356 = vrot.slane %v1355, 4
      %v1358 = vshll.u32 %v1164, 16
      %v1360 = vrot.slane %v1358, 5
      %v1361 = vsel %vm1203, %v1356, %v1360
      %v1362 = vshrl.u32 %v1164, 16
      %v1364 = vrot.slane %v1362, 4
      %v1365 = vor.u32 %v1364, %v1360
      %v1366 = vrot.slane %v1365, 4
      %v1368 = vshll.u32 %v1191, 16
      %v1370 = vrot.slane %v1368, 5
      %v1371 = vsel %vm1203, %v1366, %v1370
      %v1373 = vshrl.u32 %v1165, 16
      %v1375 = vrot.slane %v1373, 4
      %v1376 = vshll.u32 %v1165, 16
      %v1378 = vrot.slane %v1376, 5
      %v1379 = vor.u32 %v1375, %v1378
      %v1380 = vrot.slane %v1379, 4
      %v1382 = vshll.u32 %v1166, 16
      %v1384 = vrot.slane %v1382, 5
      %v1385 = vsel %vm1203, %v1380, %v1384
      %v1386 = vshrl.u32 %v1166, 16
      %v1388 = vrot.slane %v1386, 4
      %v1389 = vor.u32 %v1388, %v1384
      %v1390 = vrot.slane %v1389, 4
      %v1392 = vshll.u32 %v1192, 16
      %v1394 = vrot.slane %v1392, 5
      %v1395 = vsel %vm1203, %v1390, %v1394
      %v1397 = vshrl.u32 %v1167, 16
      %v1399 = vrot.slane %v1397, 4
      %v1400 = vshll.u32 %v1167, 16
      %v1402 = vrot.slane %v1400, 5
      %v1403 = vor.u32 %v1399, %v1402
      %v1404 = vrot.slane %v1403, 4
      %v1406 = vshll.u32 %v1168, 16
      %v1408 = vrot.slane %v1406, 5
      %v1409 = vsel %vm1203, %v1404, %v1408
      %v1410 = vshrl.u32 %v1168, 16
      %v1412 = vrot.slane %v1410, 4
      %v1413 = vor.u32 %v1412, %v1408
      %v1414 = vrot.slane %v1413, 4
      %v1416 = vshll.u32 %v1193, 16
      %v1418 = vrot.slane %v1416, 5
      %v1419 = vsel %vm1203, %v1414, %v1418
      %v1421 = vshrl.u32 %v1169, 16
      %v1423 = vrot.slane %v1421, 4
      %v1424 = vshll.u32 %v1169, 16
      %v1426 = vrot.slane %v1424, 5
      %v1427 = vor.u32 %v1423, %v1426
      %v1428 = vrot.slane %v1427, 4
      %v1430 = vshll.u32 %v1170, 16
      %v1432 = vrot.slane %v1430, 5
      %v1433 = vsel %vm1203, %v1428, %v1432
      %v1434 = vshrl.u32 %v1170, 16
      %v1436 = vrot.slane %v1434, 4
      %v1437 = vor.u32 %v1436, %v1432
      %v1438 = vrot.slane %v1437, 4
      %v1440 = vshll.u32 %v1194, 16
      %v1442 = vrot.slane %v1440, 5
      %v1443 = vsel %vm1203, %v1438, %v1442
      %v1445 = vshrl.u32 %v1171, 16
      %v1447 = vrot.slane %v1445, 4
      %v1448 = vshll.u32 %v1171, 16
      %v1450 = vrot.slane %v1448, 5
      %v1451 = vor.u32 %v1447, %v1450
      %v1452 = vrot.slane %v1451, 4
      %v1454 = vshll.u32 %v1172, 16
      %v1456 = vrot.slane %v1454, 5
      %v1457 = vsel %vm1203, %v1452, %v1456
      %v1458 = vshrl.u32 %v1172, 16
      %v1460 = vrot.slane %v1458, 4
      %v1461 = vor.u32 %v1460, %v1456
      %v1462 = vrot.slane %v1461, 4
      %v1464 = vshll.u32 %v1195, 16
      %v1466 = vrot.slane %v1464, 5
      %v1467 = vsel %vm1203, %v1462, %v1466
      %v1469 = vshrl.u32 %v1173, 16
      %v1471 = vrot.slane %v1469, 4
      %v1472 = vshll.u32 %v1173, 16
      %v1474 = vrot.slane %v1472, 5
      %v1475 = vor.u32 %v1471, %v1474
      %v1476 = vrot.slane %v1475, 4
      %v1478 = vshll.u32 %v1174, 16
      %v1480 = vrot.slane %v1478, 5
      %v1481 = vsel %vm1203, %v1476, %v1480
      %v1482 = vshrl.u32 %v1174, 16
      %v1484 = vrot.slane %v1482, 4
      %v1485 = vor.u32 %v1484, %v1480
      %v1486 = vrot.slane %v1485, 4
      %v1488 = vshll.u32 %v1196, 16
      %v1490 = vrot.slane %v1488, 5
      %v1491 = vsel %vm1203, %v1486, %v1490
      %v1493 = vshrl.u32 %v1175, 16
      %v1495 = vrot.slane %v1493, 4
      %v1496 = vshll.u32 %v1175, 16
      %v1498 = vrot.slane %v1496, 5
      %v1499 = vor.u32 %v1495, %v1498
      %v1500 = vrot.slane %v1499, 4
      %v1502 = vshll.u32 %v1176, 16
      %v1504 = vrot.slane %v1502, 5
      %v1505 = vsel %vm1203, %v1500, %v1504
      %v1506 = vshrl.u32 %v1176, 16
      %v1508 = vrot.slane %v1506, 4
      %v1509 = vor.u32 %v1508, %v1504
      %v1510 = vrot.slane %v1509, 4
      %v1512 = vshll.u32 %v1197, 16
      %v1514 = vrot.slane %v1512, 5
      %v1515 = vsel %vm1203, %v1510, %v1514
      %v1517 = vshrl.u32 %v1177, 16
      %v1519 = vrot.slane %v1517, 4
      %v1520 = vshll.u32 %v1177, 16
      %v1522 = vrot.slane %v1520, 5
      %v1523 = vor.u32 %v1519, %v1522
      %v1524 = vrot.slane %v1523, 4
      %v1526 = vshll.u32 %v1178, 16
      %v1528 = vrot.slane %v1526, 5
      %v1529 = vsel %vm1203, %v1524, %v1528
      %v1530 = vshrl.u32 %v1178, 16
      %v1532 = vrot.slane %v1530, 4
      %v1533 = vor.u32 %v1532, %v1528
      %v1534 = vrot.slane %v1533, 4
      %v1536 = vshll.u32 %v1198, 16
      %v1538 = vrot.slane %v1536, 5
      %v1539 = vsel %vm1203, %v1534, %v1538
      %v1541 = vshrl.u32 %v1179, 16
      %v1543 = vrot.slane %v1541, 4
      %v1544 = vshll.u32 %v1179, 16
      %v1546 = vrot.slane %v1544, 5
      %v1547 = vor.u32 %v1543, %v1546
      %v1548 = vrot.slane %v1547, 4
      %v1550 = vshll.u32 %v1180, 16
      %v1552 = vrot.slane %v1550, 5
      %v1553 = vsel %vm1203, %v1548, %v1552
      %v1554 = vshrl.u32 %v1180, 16
      %v1556 = vrot.slane %v1554, 4
      %v1557 = vor.u32 %v1556, %v1552
      %v1558 = vrot.slane %v1557, 4
      %v1560 = vshll.u32 %v1199, 16
      %v1562 = vrot.slane %v1560, 5
      %v1563 = vsel %vm1203, %v1558, %v1562
      %v1565 = vshrl.u32 %v1181, 16
      %v1567 = vrot.slane %v1565, 4
      %v1568 = vshll.u32 %v1181, 16
      %v1570 = vrot.slane %v1568, 5
      %v1571 = vor.u32 %v1567, %v1570
      %v1572 = vrot.slane %v1571, 4
      %v1574 = vshll.u32 %v1182, 16
      %v1576 = vrot.slane %v1574, 5
      %v1577 = vsel %vm1203, %v1572, %v1576
      %v1578 = vshrl.u32 %v1182, 16
      %v1580 = vrot.slane %v1578, 4
      %v1581 = vor.u32 %v1580, %v1576
      %v1582 = vrot.slane %v1581, 4
      %v1584 = vshll.u32 %v1200, 16
      %v1586 = vrot.slane %v1584, 5
      %v1587 = vsel %vm1203, %v1582, %v1586
      %s1588 = scalar_lea.vmem %s295, 8
      %v1589 = vld [vmem:[%s1588] sm:$0xf]
      %v1590 = vld [vmem:[%s1588 + $0x4] sm:$0xf]
      %v1591 = vunpack.c.l.b16 %v1217
      %v1592 = vunpack.c.l.b16 %v1227
      %v1593 = vunpack.c.l.b16 %v1241
      %v1594 = vunpack.c.l.b16 %v1251
      %v1595 = vunpack.c.l.b16 %v1265
      %v1596 = vunpack.c.l.b16 %v1275
      %v1597 = vunpack.c.l.b16 %v1289
      %v1598 = vunpack.c.l.b16 %v1299
      %v1599 = vunpack.c.l.b16 %v1313
      %v1600 = vunpack.c.l.b16 %v1323
      %v1601 = vunpack.c.l.b16 %v1337
      %v1602 = vunpack.c.l.b16 %v1347
      %v1603 = vunpack.c.l.b16 %v1361
      %v1604 = vunpack.c.l.b16 %v1371
      %v1605 = vunpack.c.l.b16 %v1385
      %v1606 = vunpack.c.l.b16 %v1395
      %v1607 = vunpack.c.l.b16 %v1409
      %v1608 = vunpack.c.l.b16 %v1419
      %v1609 = vunpack.c.l.b16 %v1433
      %v1610 = vunpack.c.l.b16 %v1443
      %v1611 = vunpack.c.l.b16 %v1457
      %v1612 = vunpack.c.l.b16 %v1467
      %v1613 = vunpack.c.l.b16 %v1481
      %v1614 = vunpack.c.l.b16 %v1491
      %v1615 = vunpack.c.l.b16 %v1505
      %v1616 = vunpack.c.l.b16 %v1515
      %v1617 = vunpack.c.l.b16 %v1529
      %v1618 = vunpack.c.l.b16 %v1539
      %v1619 = vunpack.c.l.b16 %v1553
      %v1620 = vunpack.c.l.b16 %v1563
      %v1621 = vunpack.c.l.b16 %v1577
      %v1622 = vunpack.c.l.b16 %v1587
      %v1623 = vpack.c.b16 %v1592, %v1591
      %v1624 = vpack.c.b16 %v1594, %v1593
      %v1625 = vpack.c.b16 %v1596, %v1595
      %v1626 = vpack.c.b16 %v1598, %v1597
      %v1627 = vpack.c.b16 %v1600, %v1599
      %v1628 = vpack.c.b16 %v1602, %v1601
      %v1629 = vpack.c.b16 %v1604, %v1603
      %v1630 = vpack.c.b16 %v1606, %v1605
      %v1631 = vpack.c.b16 %v1608, %v1607
      %v1632 = vpack.c.b16 %v1610, %v1609
      %v1633 = vpack.c.b16 %v1612, %v1611
      %v1634 = vpack.c.b16 %v1614, %v1613
      %v1635 = vpack.c.b16 %v1616, %v1615
      %v1636 = vpack.c.b16 %v1618, %v1617
      %v1637 = vpack.c.b16 %v1620, %v1619
      %v1638 = vpack.c.b16 %v1622, %v1621
      %v1641 = vunpack.c.l.b16 %v1589
      %v1642 = vunpack.c.l.b16 %v1590
      %v1643 = vpack.c.b16 %v1642, %v1641
      %vm1644 = vcmask 64512
      %v1646 = vsel %vm1644, %v1623, 0
      %v1649 = vsel %vm1644, %v1624, 0
      %v1652 = vsel %vm1644, %v1625, 0
      %v1655 = vsel %vm1644, %v1626, 0
      %v1658 = vsel %vm1644, %v1627, 0
      %v1661 = vsel %vm1644, %v1628, 0
      %v1664 = vsel %vm1644, %v1629, 0
      %v1667 = vsel %vm1644, %v1630, 0
      %v1670 = vsel %vm1644, %v1631, 0
      %v1673 = vsel %vm1644, %v1632, 0
      %v1676 = vsel %vm1644, %v1633, 0
      %v1679 = vsel %vm1644, %v1634, 0
      %v1682 = vsel %vm1644, %v1635, 0
      %v1685 = vsel %vm1644, %v1636, 0
      %v1688 = vsel %vm1644, %v1637, 0
      %v1691 = vsel %vm1644, %v1638, 0
      %v1694 = vsel %vm1644, %v1643, 0
      %1696 = vmatprep.subr.bf16.mxu0 0
      %1697 = vmatpush1.bf16.xpose.msra.mxu0 %v1694
      %1698 = vmatprep.subr.bf16.mxu0 0
      %1699 = vmatpush1.bf16.xpose.msra.mxu0 0
      %1700 = vmatprep.subr.bf16.mxu0 0
      %1701 = vmatpush1.bf16.xpose.msra.mxu0 0
      %1702 = vmatprep.subr.bf16.mxu0 0
      %1703 = vmatpush1.bf16.xpose.msra.mxu0 0
      %1704 = vmatprep.subr.bf16.mxu0 0
      %1705 = vmatpush1.bf16.xpose.msra.mxu0 0
      %1706 = vmatprep.subr.bf16.mxu0 0
      %1707 = vmatpush1.bf16.xpose.msra.mxu0 0
      %1708 = vmatprep.subr.bf16.mxu0 0
      %1709 = vmatpush1.bf16.xpose.msra.mxu0 0
      %1710 = vmatprep.subr.bf16.mxu0 0
      %1711 = vmatpush1.bf16.xpose.msra.mxu0 0
      %1712 = vmatprep.subr.bf16.mxu0 0
      %1713 = vmatpush1.bf16.xpose.msra.mxu0 0
      %1714 = vmatprep.subr.bf16.mxu0 0
      %1715 = vmatpush1.bf16.xpose.msra.mxu0 0
      %1716 = vmatprep.subr.bf16.mxu0 0
      %1717 = vmatpush1.bf16.xpose.msra.mxu0 0
      %1718 = vmatprep.subr.bf16.mxu0 0
      %1719 = vmatpush1.bf16.xpose.msra.mxu0 0
      %1720 = vmatprep.subr.bf16.mxu0 0
      %1721 = vmatpush1.bf16.xpose.msra.mxu0 0
      %1722 = vmatprep.subr.bf16.mxu0 0
      %1723 = vmatpush1.bf16.xpose.msra.mxu0 0
      %1724 = vmatprep.subr.bf16.mxu0 0
      %1725 = vmatpush1.bf16.xpose.msra.mxu0 0
      %1726 = vmatprep.subr.bf16.mxu0 0
      %1727 = vmatpush1.bf16.xpose.msra.mxu0 0
      %1728 = vmatprep.mubr.bf16.mxu0 0
      %1729 = vmatmul.mubr.bf16.gmra.mrb[0].mxu0 %v1646
      %v1730 = vpop.f32.mrb[0].mxu0
      %v1731 = vadd.f32 0.0, %v1730
      %v1732 = vpop.f32.mrb[0].mxu0
      %v1733 = vpop.f32.mrb[0].mxu0
      %v1734 = vadd.f32 0.0, %v1733
      %v1735 = vpop.f32.mrb[0].mxu0
      %1736 = vmatprep.mubr.bf16.mxu0 0
      %1737 = vmatmul.mubr.bf16.gmra.mrb[0].mxu0 %v1649
      %v1738 = vpop.f32.mrb[0].mxu0
      %v1739 = vadd.f32 0.0, %v1738
      %v1740 = vpop.f32.mrb[0].mxu0
      %v1741 = vpop.f32.mrb[0].mxu0
      %v1742 = vadd.f32 0.0, %v1741
      %v1743 = vpop.f32.mrb[0].mxu0
      %1744 = vmatprep.mubr.bf16.mxu0 0
      %1745 = vmatmul.mubr.bf16.gmra.mrb[0].mxu0 %v1652
      %v1746 = vpop.f32.mrb[0].mxu0
      %v1747 = vadd.f32 0.0, %v1746
      %v1748 = vpop.f32.mrb[0].mxu0
      %v1749 = vpop.f32.mrb[0].mxu0
      %v1750 = vadd.f32 0.0, %v1749
      %v1751 = vpop.f32.mrb[0].mxu0
      %1752 = vmatprep.mubr.bf16.mxu0 0
      %1753 = vmatmul.mubr.bf16.gmra.mrb[0].mxu0 %v1655
      %v1754 = vpop.f32.mrb[0].mxu0
      %v1755 = vadd.f32 0.0, %v1754
      %v1756 = vpop.f32.mrb[0].mxu0
      %v1757 = vpop.f32.mrb[0].mxu0
      %v1758 = vadd.f32 0.0, %v1757
      %v1759 = vpop.f32.mrb[0].mxu0
      %1760 = vmatprep.mubr.bf16.mxu0 0
      %1761 = vmatmul.mubr.bf16.gmra.mrb[0].mxu0 %v1658
      %v1762 = vpop.f32.mrb[0].mxu0
      %v1763 = vadd.f32 0.0, %v1762
      %v1764 = vpop.f32.mrb[0].mxu0
      %v1765 = vpop.f32.mrb[0].mxu0
      %v1766 = vadd.f32 0.0, %v1765
      %v1767 = vpop.f32.mrb[0].mxu0
      %1768 = vmatprep.mubr.bf16.mxu0 0
      %1769 = vmatmul.mubr.bf16.gmra.mrb[0].mxu0 %v1661
      %v1770 = vpop.f32.mrb[0].mxu0
      %v1771 = vadd.f32 0.0, %v1770
      %v1772 = vpop.f32.mrb[0].mxu0
      %v1773 = vpop.f32.mrb[0].mxu0
      %v1774 = vadd.f32 0.0, %v1773
      %v1775 = vpop.f32.mrb[0].mxu0
      %1776 = vmatprep.mubr.bf16.mxu0 0
      %1777 = vmatmul.mubr.bf16.gmra.mrb[0].mxu0 %v1664
      %v1778 = vpop.f32.mrb[0].mxu0
      %v1779 = vadd.f32 0.0, %v1778
      %v1780 = vpop.f32.mrb[0].mxu0
      %v1781 = vpop.f32.mrb[0].mxu0
      %v1782 = vadd.f32 0.0, %v1781
      %v1783 = vpop.f32.mrb[0].mxu0
      %1784 = vmatprep.mubr.bf16.mxu0 0
      %1785 = vmatmul.mubr.bf16.gmra.mrb[0].mxu0 %v1667
      %v1786 = vpop.f32.mrb[0].mxu0
      %v1787 = vadd.f32 0.0, %v1786
      %v1788 = vpop.f32.mrb[0].mxu0
      %v1789 = vpop.f32.mrb[0].mxu0
      %v1790 = vadd.f32 0.0, %v1789
      %v1791 = vpop.f32.mrb[0].mxu0
      %1792 = vmatprep.mubr.bf16.mxu0 0
      %1793 = vmatmul.mubr.bf16.gmra.mrb[0].mxu0 %v1670
      %v1794 = vpop.f32.mrb[0].mxu0
      %v1795 = vadd.f32 0.0, %v1794
      %v1796 = vpop.f32.mrb[0].mxu0
      %v1797 = vpop.f32.mrb[0].mxu0
      %v1798 = vadd.f32 0.0, %v1797
      %v1799 = vpop.f32.mrb[0].mxu0
      %1800 = vmatprep.mubr.bf16.mxu0 0
      %1801 = vmatmul.mubr.bf16.gmra.mrb[0].mxu0 %v1673
      %v1802 = vpop.f32.mrb[0].mxu0
      %v1803 = vadd.f32 0.0, %v1802
      %v1804 = vpop.f32.mrb[0].mxu0
      %v1805 = vpop.f32.mrb[0].mxu0
      %v1806 = vadd.f32 0.0, %v1805
      %v1807 = vpop.f32.mrb[0].mxu0
      %1808 = vmatprep.mubr.bf16.mxu0 0
      %1809 = vmatmul.mubr.bf16.gmra.mrb[0].mxu0 %v1676
      %v1810 = vpop.f32.mrb[0].mxu0
      %v1811 = vadd.f32 0.0, %v1810
      %v1812 = vpop.f32.mrb[0].mxu0
      %v1813 = vpop.f32.mrb[0].mxu0
      %v1814 = vadd.f32 0.0, %v1813
      %v1815 = vpop.f32.mrb[0].mxu0
      %1816 = vmatprep.mubr.bf16.mxu0 0
      %1817 = vmatmul.mubr.bf16.gmra.mrb[0].mxu0 %v1679
      %v1818 = vpop.f32.mrb[0].mxu0
      %v1819 = vadd.f32 0.0, %v1818
      %v1820 = vpop.f32.mrb[0].mxu0
      %v1821 = vpop.f32.mrb[0].mxu0
      %v1822 = vadd.f32 0.0, %v1821
      %v1823 = vpop.f32.mrb[0].mxu0
      %1824 = vmatprep.mubr.bf16.mxu0 0
      %1825 = vmatmul.mubr.bf16.gmra.mrb[0].mxu0 %v1682
      %v1826 = vpop.f32.mrb[0].mxu0
      %v1827 = vadd.f32 0.0, %v1826
      %v1828 = vpop.f32.mrb[0].mxu0
      %v1829 = vpop.f32.mrb[0].mxu0
      %v1830 = vadd.f32 0.0, %v1829
      %v1831 = vpop.f32.mrb[0].mxu0
      %1832 = vmatprep.mubr.bf16.mxu0 0
      %1833 = vmatmul.mubr.bf16.gmra.mrb[0].mxu0 %v1685
      %v1834 = vpop.f32.mrb[0].mxu0
      %v1835 = vadd.f32 0.0, %v1834
      %v1836 = vpop.f32.mrb[0].mxu0
      %v1837 = vpop.f32.mrb[0].mxu0
      %v1838 = vadd.f32 0.0, %v1837
      %v1839 = vpop.f32.mrb[0].mxu0
      %1840 = vmatprep.mubr.bf16.mxu0 0
      %1841 = vmatmul.mubr.bf16.gmra.mrb[0].mxu0 %v1688
      %v1842 = vpop.f32.mrb[0].mxu0
      %v1843 = vadd.f32 0.0, %v1842
      %v1844 = vpop.f32.mrb[0].mxu0
      %v1845 = vpop.f32.mrb[0].mxu0
      %v1846 = vadd.f32 0.0, %v1845
      %v1847 = vpop.f32.mrb[0].mxu0
      %1848 = vmatprep.mubr.bf16.mxu0 0
      %1849 = vmatmul.mubr.bf16.gmra.mrb[0].mxu0 %v1691
      %v1850 = vpop.f32.mrb[0].mxu0
      %v1851 = vadd.f32 0.0, %v1850
      %v1852 = vpop.f32.mrb[0].mxu0
      %v1853 = vpop.f32.mrb[0].mxu0
      %v1854 = vadd.f32 0.0, %v1853
      %v1855 = vpop.f32.mrb[0].mxu0
      %1856 = vdwg.mxu0
      %v1889 = vunpack.c.l.b16 %v1151
      %v1890 = vunpack.c.l.b16 %v1152
      %v1891 = vunpack.c.l.b16 %v1153
      %v1892 = vunpack.c.l.b16 %v1154
      %v1893 = vunpack.c.l.b16 %v1155
      %v1894 = vunpack.c.l.b16 %v1156
      %v1895 = vunpack.c.l.b16 %v1157
      %v1896 = vunpack.c.l.b16 %v1158
      %v1897 = vunpack.c.l.b16 %v1159
      %v1898 = vunpack.c.l.b16 %v1160
      %v1899 = vunpack.c.l.b16 %v1161
      %v1900 = vunpack.c.l.b16 %v1162
      %v1901 = vunpack.c.l.b16 %v1163
      %v1902 = vunpack.c.l.b16 %v1164
      %v1903 = vunpack.c.l.b16 %v1165
      %v1904 = vunpack.c.l.b16 %v1166
      %v1905 = vunpack.c.l.b16 %v1167
      %v1906 = vunpack.c.l.b16 %v1168
      %v1907 = vunpack.c.l.b16 %v1169
      %v1908 = vunpack.c.l.b16 %v1170
      %v1909 = vunpack.c.l.b16 %v1171
      %v1910 = vunpack.c.l.b16 %v1172
      %v1911 = vunpack.c.l.b16 %v1173
      %v1912 = vunpack.c.l.b16 %v1174
      %v1913 = vunpack.c.l.b16 %v1175
      %v1914 = vunpack.c.l.b16 %v1176
      %v1915 = vunpack.c.l.b16 %v1177
      %v1916 = vunpack.c.l.b16 %v1178
      %v1917 = vunpack.c.l.b16 %v1179
      %v1918 = vunpack.c.l.b16 %v1180
      %v1919 = vunpack.c.l.b16 %v1181
      %v1920 = vunpack.c.l.b16 %v1182
      %v1921 = vpack.c.b16 %v1890, %v1889
      %v1922 = vpack.c.b16 %v1892, %v1891
      %v1923 = vpack.c.b16 %v1894, %v1893
      %v1924 = vpack.c.b16 %v1896, %v1895
      %v1925 = vpack.c.b16 %v1898, %v1897
      %v1926 = vpack.c.b16 %v1900, %v1899
      %v1927 = vpack.c.b16 %v1902, %v1901
      %v1928 = vpack.c.b16 %v1904, %v1903
      %v1929 = vpack.c.b16 %v1906, %v1905
      %v1930 = vpack.c.b16 %v1908, %v1907
      %v1931 = vpack.c.b16 %v1910, %v1909
      %v1932 = vpack.c.b16 %v1912, %v1911
      %v1933 = vpack.c.b16 %v1914, %v1913
      %v1934 = vpack.c.b16 %v1916, %v1915
      %v1935 = vpack.c.b16 %v1918, %v1917
      %v1936 = vpack.c.b16 %v1920, %v1919
      %v1939 = vunpack.c.l.b16 %v1183
      %v1940 = vunpack.c.l.b16 %v1184
      %v1941 = vpack.c.b16 %v1940, %v1939
      %v1943 = vsel %vm1644, %v1921, 0
      %v1946 = vsel %vm1644, %v1922, 0
      %v1949 = vsel %vm1644, %v1923, 0
      %v1952 = vsel %vm1644, %v1924, 0
      %v1955 = vsel %vm1644, %v1925, 0
      %v1958 = vsel %vm1644, %v1926, 0
      %v1961 = vsel %vm1644, %v1927, 0
      %v1964 = vsel %vm1644, %v1928, 0
      %v1967 = vsel %vm1644, %v1929, 0
      %v1970 = vsel %vm1644, %v1930, 0
      %v1973 = vsel %vm1644, %v1931, 0
      %v1976 = vsel %vm1644, %v1932, 0
      %v1979 = vsel %vm1644, %v1933, 0
      %v1982 = vsel %vm1644, %v1934, 0
      %v1985 = vsel %vm1644, %v1935, 0
      %v1988 = vsel %vm1644, %v1936, 0
      %v1991 = vsel %vm1644, %v1941, 0
      %1993 = vmatprep.subr.bf16.mxu0 0
      %1994 = vmatpush1.bf16.xpose.msra.mxu0 %v1991
      %1995 = vmatprep.subr.bf16.mxu0 0
      %1996 = vmatpush1.bf16.xpose.msra.mxu0 0
      %1997 = vmatprep.subr.bf16.mxu0 0
      %1998 = vmatpush1.bf16.xpose.msra.mxu0 0
      %1999 = vmatprep.subr.bf16.mxu0 0
      %2000 = vmatpush1.bf16.xpose.msra.mxu0 0
      %2001 = vmatprep.subr.bf16.mxu0 0
      %2002 = vmatpush1.bf16.xpose.msra.mxu0 0
      %2003 = vmatprep.subr.bf16.mxu0 0
      %2004 = vmatpush1.bf16.xpose.msra.mxu0 0
      %2005 = vmatprep.subr.bf16.mxu0 0
      %2006 = vmatpush1.bf16.xpose.msra.mxu0 0
      %2007 = vmatprep.subr.bf16.mxu0 0
      %2008 = vmatpush1.bf16.xpose.msra.mxu0 0
      %2009 = vmatprep.subr.bf16.mxu0 0
      %2010 = vmatpush1.bf16.xpose.msra.mxu0 0
      %2011 = vmatprep.subr.bf16.mxu0 0
      %2012 = vmatpush1.bf16.xpose.msra.mxu0 0
      %2013 = vmatprep.subr.bf16.mxu0 0
      %2014 = vmatpush1.bf16.xpose.msra.mxu0 0
      %2015 = vmatprep.subr.bf16.mxu0 0
      %2016 = vmatpush1.bf16.xpose.msra.mxu0 0
      %2017 = vmatprep.subr.bf16.mxu0 0
      %2018 = vmatpush1.bf16.xpose.msra.mxu0 0
      %2019 = vmatprep.subr.bf16.mxu0 0
      %2020 = vmatpush1.bf16.xpose.msra.mxu0 0
      %2021 = vmatprep.subr.bf16.mxu0 0
      %2022 = vmatpush1.bf16.xpose.msra.mxu0 0
      %2023 = vmatprep.subr.bf16.mxu0 0
      %2024 = vmatpush1.bf16.xpose.msra.mxu0 0
      %2025 = vmatprep.mubr.bf16.mxu0 0
      %2026 = vmatmul.mubr.bf16.gmra.mrb[0].mxu0 %v1943
      %v2027 = vpop.f32.mrb[0].mxu0
      %v2028 = vadd.f32 %v1731, %v2027
      %v2029 = vpop.f32.mrb[0].mxu0
      %v2030 = vpop.f32.mrb[0].mxu0
      %v2031 = vadd.f32 %v1734, %v2030
      %v2032 = vpop.f32.mrb[0].mxu0
      %2033 = vmatprep.mubr.bf16.mxu0 0
      %2034 = vmatmul.mubr.bf16.gmra.mrb[0].mxu0 %v1946
      %v2035 = vpop.f32.mrb[0].mxu0
      %v2036 = vadd.f32 %v1739, %v2035
      %v2037 = vpop.f32.mrb[0].mxu0
      %v2038 = vpop.f32.mrb[0].mxu0
      %v2039 = vadd.f32 %v1742, %v2038
      %v2040 = vpop.f32.mrb[0].mxu0
      %2041 = vmatprep.mubr.bf16.mxu0 0
      %2042 = vmatmul.mubr.bf16.gmra.mrb[0].mxu0 %v1949
      %v2043 = vpop.f32.mrb[0].mxu0
      %v2044 = vadd.f32 %v1747, %v2043
      %v2045 = vpop.f32.mrb[0].mxu0
      %v2046 = vpop.f32.mrb[0].mxu0
      %v2047 = vadd.f32 %v1750, %v2046
      %v2048 = vpop.f32.mrb[0].mxu0
      %2049 = vmatprep.mubr.bf16.mxu0 0
      %2050 = vmatmul.mubr.bf16.gmra.mrb[0].mxu0 %v1952
      %v2051 = vpop.f32.mrb[0].mxu0
      %v2052 = vadd.f32 %v1755, %v2051
      %v2053 = vpop.f32.mrb[0].mxu0
      %v2054 = vpop.f32.mrb[0].mxu0
      %v2055 = vadd.f32 %v1758, %v2054
      %v2056 = vpop.f32.mrb[0].mxu0
      %2057 = vmatprep.mubr.bf16.mxu0 0
      %2058 = vmatmul.mubr.bf16.gmra.mrb[0].mxu0 %v1955
      %v2059 = vpop.f32.mrb[0].mxu0
      %v2060 = vadd.f32 %v1763, %v2059
      %v2061 = vpop.f32.mrb[0].mxu0
      %v2062 = vpop.f32.mrb[0].mxu0
      %v2063 = vadd.f32 %v1766, %v2062
      %v2064 = vpop.f32.mrb[0].mxu0
      %2065 = vmatprep.mubr.bf16.mxu0 0
      %2066 = vmatmul.mubr.bf16.gmra.mrb[0].mxu0 %v1958
      %v2067 = vpop.f32.mrb[0].mxu0
      %v2068 = vadd.f32 %v1771, %v2067
      %v2069 = vpop.f32.mrb[0].mxu0
      %v2070 = vpop.f32.mrb[0].mxu0
      %v2071 = vadd.f32 %v1774, %v2070
      %v2072 = vpop.f32.mrb[0].mxu0
      %2073 = vmatprep.mubr.bf16.mxu0 0
      %2074 = vmatmul.mubr.bf16.gmra.mrb[0].mxu0 %v1961
      %v2075 = vpop.f32.mrb[0].mxu0
      %v2076 = vadd.f32 %v1779, %v2075
      %v2077 = vpop.f32.mrb[0].mxu0
      %v2078 = vpop.f32.mrb[0].mxu0
      %v2079 = vadd.f32 %v1782, %v2078
      %v2080 = vpop.f32.mrb[0].mxu0
      %2081 = vmatprep.mubr.bf16.mxu0 0
      %2082 = vmatmul.mubr.bf16.gmra.mrb[0].mxu0 %v1964
      %v2083 = vpop.f32.mrb[0].mxu0
      %v2084 = vadd.f32 %v1787, %v2083
      %v2085 = vpop.f32.mrb[0].mxu0
      %v2086 = vpop.f32.mrb[0].mxu0
      %v2087 = vadd.f32 %v1790, %v2086
      %v2088 = vpop.f32.mrb[0].mxu0
      %2089 = vmatprep.mubr.bf16.mxu0 0
      %2090 = vmatmul.mubr.bf16.gmra.mrb[0].mxu0 %v1967
      %v2091 = vpop.f32.mrb[0].mxu0
      %v2092 = vadd.f32 %v1795, %v2091
      %v2093 = vpop.f32.mrb[0].mxu0
      %v2094 = vpop.f32.mrb[0].mxu0
      %v2095 = vadd.f32 %v1798, %v2094
      %v2096 = vpop.f32.mrb[0].mxu0
      %2097 = vmatprep.mubr.bf16.mxu0 0
      %2098 = vmatmul.mubr.bf16.gmra.mrb[0].mxu0 %v1970
      %v2099 = vpop.f32.mrb[0].mxu0
      %v2100 = vadd.f32 %v1803, %v2099
      %v2101 = vpop.f32.mrb[0].mxu0
      %v2102 = vpop.f32.mrb[0].mxu0
      %v2103 = vadd.f32 %v1806, %v2102
      %v2104 = vpop.f32.mrb[0].mxu0
      %2105 = vmatprep.mubr.bf16.mxu0 0
      %2106 = vmatmul.mubr.bf16.gmra.mrb[0].mxu0 %v1973
      %v2107 = vpop.f32.mrb[0].mxu0
      %v2108 = vadd.f32 %v1811, %v2107
      %v2109 = vpop.f32.mrb[0].mxu0
      %v2110 = vpop.f32.mrb[0].mxu0
      %v2111 = vadd.f32 %v1814, %v2110
      %v2112 = vpop.f32.mrb[0].mxu0
      %2113 = vmatprep.mubr.bf16.mxu0 0
      %2114 = vmatmul.mubr.bf16.gmra.mrb[0].mxu0 %v1976
      %v2115 = vpop.f32.mrb[0].mxu0
      %v2116 = vadd.f32 %v1819, %v2115
      %v2117 = vpop.f32.mrb[0].mxu0
      %v2118 = vpop.f32.mrb[0].mxu0
      %v2119 = vadd.f32 %v1822, %v2118
      %v2120 = vpop.f32.mrb[0].mxu0
      %2121 = vmatprep.mubr.bf16.mxu0 0
      %2122 = vmatmul.mubr.bf16.gmra.mrb[0].mxu0 %v1979
      %v2123 = vpop.f32.mrb[0].mxu0
      %v2124 = vadd.f32 %v1827, %v2123
      %v2125 = vpop.f32.mrb[0].mxu0
      %v2126 = vpop.f32.mrb[0].mxu0
      %v2127 = vadd.f32 %v1830, %v2126
      %v2128 = vpop.f32.mrb[0].mxu0
      %2129 = vmatprep.mubr.bf16.mxu0 0
      %2130 = vmatmul.mubr.bf16.gmra.mrb[0].mxu0 %v1982
      %v2131 = vpop.f32.mrb[0].mxu0
      %v2132 = vadd.f32 %v1835, %v2131
      %v2133 = vpop.f32.mrb[0].mxu0
      %v2134 = vpop.f32.mrb[0].mxu0
      %v2135 = vadd.f32 %v1838, %v2134
      %v2136 = vpop.f32.mrb[0].mxu0
      %2137 = vmatprep.mubr.bf16.mxu0 0
      %2138 = vmatmul.mubr.bf16.gmra.mrb[0].mxu0 %v1985
      %v2139 = vpop.f32.mrb[0].mxu0
      %v2140 = vadd.f32 %v1843, %v2139
      %v2141 = vpop.f32.mrb[0].mxu0
      %v2142 = vpop.f32.mrb[0].mxu0
      %v2143 = vadd.f32 %v1846, %v2142
      %v2144 = vpop.f32.mrb[0].mxu0
      %2145 = vmatprep.mubr.bf16.mxu0 0
      %2146 = vmatmul.mubr.bf16.gmra.mrb[0].mxu0 %v1988
      %v2147 = vpop.f32.mrb[0].mxu0
      %v2148 = vadd.f32 %v1851, %v2147
      %v2149 = vpop.f32.mrb[0].mxu0
      %v2150 = vpop.f32.mrb[0].mxu0
      %v2151 = vadd.f32 %v1854, %v2150
      %v2152 = vpop.f32.mrb[0].mxu0
      %2153 = vdwg.mxu0
      %v2154 = vld [vmem:[#allocation2] sm:$0xe]
      %v2155 = vld [vmem:[#allocation2 + $0xc] sm:$0xe]
      %v2156 = vld [vmem:[#allocation2 + $0x18] sm:$0xe]
      %v2157 = vld [vmem:[#allocation2 + $0x24] sm:$0xe]
      %v2158 = vld [vmem:[#allocation2 + $0x30] sm:$0xe]
      %v2159 = vld [vmem:[#allocation2 + $0x3c] sm:$0xe]
      %v2160 = vld [vmem:[#allocation2 + $0x48] sm:$0xe]
      %v2161 = vld [vmem:[#allocation2 + $0x54] sm:$0xe]
      %v2162 = vld [vmem:[#allocation2 + $0x60] sm:$0xe]
      %v2163 = vld [vmem:[#allocation2 + $0x6c] sm:$0xe]
      %v2164 = vld [vmem:[#allocation2 + $0x78] sm:$0xe]
      %v2165 = vld [vmem:[#allocation2 + $0x84] sm:$0xe]
      %v2166 = vld [vmem:[#allocation2 + $0x90] sm:$0xe]
      %v2167 = vld [vmem:[#allocation2 + $0x9c] sm:$0xe]
      %v2168 = vld [vmem:[#allocation2 + $0xa8] sm:$0xe]
      %v2169 = vld [vmem:[#allocation2 + $0xb4] sm:$0xe]
      %vm2202 = vcmask 1042432
      %vm2203 = vcmask 1046532
      %vm2204 = vmor %vm2202, %vm2203
      %v2205 = vrot.slane %v2154, 5
      %v2206 = vrot.slane %v2205, 4
      %v2207 = vrot.slane %v1152, 5
      %v2208 = vsel %vm2204, %v2206, %v2207
      %v2209 = vrot.slane %v2207, 4
      %v2210 = vrot.slane %v1185, 5
      %v2211 = vsel %vm2204, %v2209, %v2210
      %v2212 = vrot.slane %v2155, 5
      %v2213 = vrot.slane %v2212, 4
      %v2214 = vrot.slane %v1154, 5
      %v2215 = vsel %vm2204, %v2213, %v2214
      %v2216 = vrot.slane %v2214, 4
      %v2217 = vrot.slane %v1186, 5
      %v2218 = vsel %vm2204, %v2216, %v2217
      %v2219 = vrot.slane %v2156, 5
      %v2220 = vrot.slane %v2219, 4
      %v2221 = vrot.slane %v1156, 5
      %v2222 = vsel %vm2204, %v2220, %v2221
      %v2223 = vrot.slane %v2221, 4
      %v2224 = vrot.slane %v1187, 5
      %v2225 = vsel %vm2204, %v2223, %v2224
      %v2226 = vrot.slane %v2157, 5
      %v2227 = vrot.slane %v2226, 4
      %v2228 = vrot.slane %v1158, 5
      %v2229 = vsel %vm2204, %v2227, %v2228
      %v2230 = vrot.slane %v2228, 4
      %v2231 = vrot.slane %v1188, 5
      %v2232 = vsel %vm2204, %v2230, %v2231
      %v2233 = vrot.slane %v2158, 5
      %v2234 = vrot.slane %v2233, 4
      %v2235 = vrot.slane %v1160, 5
      %v2236 = vsel %vm2204, %v2234, %v2235
      %v2237 = vrot.slane %v2235, 4
      %v2238 = vrot.slane %v1189, 5
      %v2239 = vsel %vm2204, %v2237, %v2238
      %v2240 = vrot.slane %v2159, 5
      %v2241 = vrot.slane %v2240, 4
      %v2242 = vrot.slane %v1162, 5
      %v2243 = vsel %vm2204, %v2241, %v2242
      %v2244 = vrot.slane %v2242, 4
      %v2245 = vrot.slane %v1190, 5
      %v2246 = vsel %vm2204, %v2244, %v2245
      %v2247 = vrot.slane %v2160, 5
      %v2248 = vrot.slane %v2247, 4
      %v2249 = vrot.slane %v1164, 5
      %v2250 = vsel %vm2204, %v2248, %v2249
      %v2251 = vrot.slane %v2249, 4
      %v2252 = vrot.slane %v1191, 5
      %v2253 = vsel %vm2204, %v2251, %v2252
      %v2254 = vrot.slane %v2161, 5
      %v2255 = vrot.slane %v2254, 4
      %v2256 = vrot.slane %v1166, 5
      %v2257 = vsel %vm2204, %v2255, %v2256
      %v2258 = vrot.slane %v2256, 4
      %v2259 = vrot.slane %v1192, 5
      %v2260 = vsel %vm2204, %v2258, %v2259
      %v2261 = vrot.slane %v2162, 5
      %v2262 = vrot.slane %v2261, 4
      %v2263 = vrot.slane %v1168, 5
      %v2264 = vsel %vm2204, %v2262, %v2263
      %v2265 = vrot.slane %v2263, 4
      %v2266 = vrot.slane %v1193, 5
      %v2267 = vsel %vm2204, %v2265, %v2266
      %v2268 = vrot.slane %v2163, 5
      %v2269 = vrot.slane %v2268, 4
      %v2270 = vrot.slane %v1170, 5
      %v2271 = vsel %vm2204, %v2269, %v2270
      %v2272 = vrot.slane %v2270, 4
      %v2273 = vrot.slane %v1194, 5
      %v2274 = vsel %vm2204, %v2272, %v2273
      %v2275 = vrot.slane %v2164, 5
      %v2276 = vrot.slane %v2275, 4
      %v2277 = vrot.slane %v1172, 5
      %v2278 = vsel %vm2204, %v2276, %v2277
      %v2279 = vrot.slane %v2277, 4
      %v2280 = vrot.slane %v1195, 5
      %v2281 = vsel %vm2204, %v2279, %v2280
      %v2282 = vrot.slane %v2165, 5
      %v2283 = vrot.slane %v2282, 4
      %v2284 = vrot.slane %v1174, 5
      %v2285 = vsel %vm2204, %v2283, %v2284
      %v2286 = vrot.slane %v2284, 4
      %v2287 = vrot.slane %v1196, 5
      %v2288 = vsel %vm2204, %v2286, %v2287
      %v2289 = vrot.slane %v2166, 5
      %v2290 = vrot.slane %v2289, 4
      %v2291 = vrot.slane %v1176, 5
      %v2292 = vsel %vm2204, %v2290, %v2291
      %v2293 = vrot.slane %v2291, 4
      %v2294 = vrot.slane %v1197, 5
      %v2295 = vsel %vm2204, %v2293, %v2294
      %v2296 = vrot.slane %v2167, 5
      %v2297 = vrot.slane %v2296, 4
      %v2298 = vrot.slane %v1178, 5
      %v2299 = vsel %vm2204, %v2297, %v2298
      %v2300 = vrot.slane %v2298, 4
      %v2301 = vrot.slane %v1198, 5
      %v2302 = vsel %vm2204, %v2300, %v2301
      %v2303 = vrot.slane %v2168, 5
      %v2304 = vrot.slane %v2303, 4
      %v2305 = vrot.slane %v1180, 5
      %v2306 = vsel %vm2204, %v2304, %v2305
      %v2307 = vrot.slane %v2305, 4
      %v2308 = vrot.slane %v1199, 5
      %v2309 = vsel %vm2204, %v2307, %v2308
      %v2310 = vrot.slane %v2169, 5
      %v2311 = vrot.slane %v2310, 4
      %v2312 = vrot.slane %v1182, 5
      %v2313 = vsel %vm2204, %v2311, %v2312
      %v2314 = vrot.slane %v2312, 4
      %v2315 = vrot.slane %v1200, 5
      %v2316 = vsel %vm2204, %v2314, %v2315
      %s2317 = scalar_lea.vmem %s295, 16
      %v2318 = vld [vmem:[%s2317] sm:$0xf]
      %v2319 = vld [vmem:[%s2317 + $0x4] sm:$0xf]
      %v2320 = vunpack.c.l.b16 %v2208
      %v2321 = vunpack.c.l.b16 %v2211
      %v2322 = vunpack.c.l.b16 %v2215
      %v2323 = vunpack.c.l.b16 %v2218
      %v2324 = vunpack.c.l.b16 %v2222
      %v2325 = vunpack.c.l.b16 %v2225
      %v2326 = vunpack.c.l.b16 %v2229
      %v2327 = vunpack.c.l.b16 %v2232
      %v2328 = vunpack.c.l.b16 %v2236
      %v2329 = vunpack.c.l.b16 %v2239
      %v2330 = vunpack.c.l.b16 %v2243
      %v2331 = vunpack.c.l.b16 %v2246
      %v2332 = vunpack.c.l.b16 %v2250
      %v2333 = vunpack.c.l.b16 %v2253
      %v2334 = vunpack.c.l.b16 %v2257
      %v2335 = vunpack.c.l.b16 %v2260
      %v2336 = vunpack.c.l.b16 %v2264
      %v2337 = vunpack.c.l.b16 %v2267
      %v2338 = vunpack.c.l.b16 %v2271
      %v2339 = vunpack.c.l.b16 %v2274
      %v2340 = vunpack.c.l.b16 %v2278
      %v2341 = vunpack.c.l.b16 %v2281
      %v2342 = vunpack.c.l.b16 %v2285
      %v2343 = vunpack.c.l.b16 %v2288
      %v2344 = vunpack.c.l.b16 %v2292
      %v2345 = vunpack.c.l.b16 %v2295
      %v2346 = vunpack.c.l.b16 %v2299
      %v2347 = vunpack.c.l.b16 %v2302
      %v2348 = vunpack.c.l.b16 %v2306
      %v2349 = vunpack.c.l.b16 %v2309
      %v2350 = vunpack.c.l.b16 %v2313
      %v2351 = vunpack.c.l.b16 %v2316
      %v2352 = vpack.c.b16 %v2321, %v2320
      %v2353 = vpack.c.b16 %v2323, %v2322
      %v2354 = vpack.c.b16 %v2325, %v2324
      %v2355 = vpack.c.b16 %v2327, %v2326
      %v2356 = vpack.c.b16 %v2329, %v2328
      %v2357 = vpack.c.b16 %v2331, %v2330
      %v2358 = vpack.c.b16 %v2333, %v2332
      %v2359 = vpack.c.b16 %v2335, %v2334
      %v2360 = vpack.c.b16 %v2337, %v2336
      %v2361 = vpack.c.b16 %v2339, %v2338
      %v2362 = vpack.c.b16 %v2341, %v2340
      %v2363 = vpack.c.b16 %v2343, %v2342
      %v2364 = vpack.c.b16 %v2345, %v2344
      %v2365 = vpack.c.b16 %v2347, %v2346
      %v2366 = vpack.c.b16 %v2349, %v2348
      %v2367 = vpack.c.b16 %v2351, %v2350
      %v2370 = vunpack.c.l.b16 %v2318
      %v2371 = vunpack.c.l.b16 %v2319
      %v2372 = vpack.c.b16 %v2371, %v2370
      %v2374 = vsel %vm1644, %v2352, 0
      %v2377 = vsel %vm1644, %v2353, 0
      %v2380 = vsel %vm1644, %v2354, 0
      %v2383 = vsel %vm1644, %v2355, 0
      %v2386 = vsel %vm1644, %v2356, 0
      %v2389 = vsel %vm1644, %v2357, 0
      %v2392 = vsel %vm1644, %v2358, 0
      %v2395 = vsel %vm1644, %v2359, 0
      %v2398 = vsel %vm1644, %v2360, 0
      %v2401 = vsel %vm1644, %v2361, 0
      %v2404 = vsel %vm1644, %v2362, 0
      %v2407 = vsel %vm1644, %v2363, 0
      %v2410 = vsel %vm1644, %v2364, 0
      %v2413 = vsel %vm1644, %v2365, 0
      %v2416 = vsel %vm1644, %v2366, 0
      %v2419 = vsel %vm1644, %v2367, 0
      %v2422 = vsel %vm1644, %v2372, 0
      %2424 = vmatprep.subr.bf16.mxu0 0
      %2425 = vmatpush1.bf16.xpose.msra.mxu0 %v2422
      %2426 = vmatprep.subr.bf16.mxu0 0
      %2427 = vmatpush1.bf16.xpose.msra.mxu0 0
      %2428 = vmatprep.subr.bf16.mxu0 0
      %2429 = vmatpush1.bf16.xpose.msra.mxu0 0
      %2430 = vmatprep.subr.bf16.mxu0 0
      %2431 = vmatpush1.bf16.xpose.msra.mxu0 0
      %2432 = vmatprep.subr.bf16.mxu0 0
      %2433 = vmatpush1.bf16.xpose.msra.mxu0 0
      %2434 = vmatprep.subr.bf16.mxu0 0
      %2435 = vmatpush1.bf16.xpose.msra.mxu0 0
      %2436 = vmatprep.subr.bf16.mxu0 0
      %2437 = vmatpush1.bf16.xpose.msra.mxu0 0
      %2438 = vmatprep.subr.bf16.mxu0 0
      %2439 = vmatpush1.bf16.xpose.msra.mxu0 0
      %2440 = vmatprep.subr.bf16.mxu0 0
      %2441 = vmatpush1.bf16.xpose.msra.mxu0 0
      %2442 = vmatprep.subr.bf16.mxu0 0
      %2443 = vmatpush1.bf16.xpose.msra.mxu0 0
      %2444 = vmatprep.subr.bf16.mxu0 0
      %2445 = vmatpush1.bf16.xpose.msra.mxu0 0
      %2446 = vmatprep.subr.bf16.mxu0 0
      %2447 = vmatpush1.bf16.xpose.msra.mxu0 0
      %2448 = vmatprep.subr.bf16.mxu0 0
      %2449 = vmatpush1.bf16.xpose.msra.mxu0 0
      %2450 = vmatprep.subr.bf16.mxu0 0
      %2451 = vmatpush1.bf16.xpose.msra.mxu0 0
      %2452 = vmatprep.subr.bf16.mxu0 0
      %2453 = vmatpush1.bf16.xpose.msra.mxu0 0
      %2454 = vmatprep.subr.bf16.mxu0 0
      %2455 = vmatpush1.bf16.xpose.msra.mxu0 0
      %2456 = vmatprep.mubr.bf16.mxu0 0
      %2457 = vmatmul.mubr.bf16.gmra.mrb[0].mxu0 %v2374
      %v2458 = vpop.f32.mrb[0].mxu0
      %v2459 = vadd.f32 0.0, %v2458
      %v2460 = vpop.f32.mrb[0].mxu0
      %v2461 = vpop.f32.mrb[0].mxu0
      %v2462 = vadd.f32 0.0, %v2461
      %v2463 = vpop.f32.mrb[0].mxu0
      %2464 = vmatprep.mubr.bf16.mxu0 0
      %2465 = vmatmul.mubr.bf16.gmra.mrb[0].mxu0 %v2377
      %v2466 = vpop.f32.mrb[0].mxu0
      %v2467 = vadd.f32 0.0, %v2466
      %v2468 = vpop.f32.mrb[0].mxu0
      %v2469 = vpop.f32.mrb[0].mxu0
      %v2470 = vadd.f32 0.0, %v2469
      %v2471 = vpop.f32.mrb[0].mxu0
      %2472 = vmatprep.mubr.bf16.mxu0 0
      %2473 = vmatmul.mubr.bf16.gmra.mrb[0].mxu0 %v2380
      %v2474 = vpop.f32.mrb[0].mxu0
      %v2475 = vadd.f32 0.0, %v2474
      %v2476 = vpop.f32.mrb[0].mxu0
      %v2477 = vpop.f32.mrb[0].mxu0
      %v2478 = vadd.f32 0.0, %v2477
      %v2479 = vpop.f32.mrb[0].mxu0
      %2480 = vmatprep.mubr.bf16.mxu0 0
      %2481 = vmatmul.mubr.bf16.gmra.mrb[0].mxu0 %v2383
      %v2482 = vpop.f32.mrb[0].mxu0
      %v2483 = vadd.f32 0.0, %v2482
      %v2484 = vpop.f32.mrb[0].mxu0
      %v2485 = vpop.f32.mrb[0].mxu0
      %v2486 = vadd.f32 0.0, %v2485
      %v2487 = vpop.f32.mrb[0].mxu0
      %2488 = vmatprep.mubr.bf16.mxu0 0
      %2489 = vmatmul.mubr.bf16.gmra.mrb[0].mxu0 %v2386
      %v2490 = vpop.f32.mrb[0].mxu0
      %v2491 = vadd.f32 0.0, %v2490
      %v2492 = vpop.f32.mrb[0].mxu0
      %v2493 = vpop.f32.mrb[0].mxu0
      %v2494 = vadd.f32 0.0, %v2493
      %v2495 = vpop.f32.mrb[0].mxu0
      %2496 = vmatprep.mubr.bf16.mxu0 0
      %2497 = vmatmul.mubr.bf16.gmra.mrb[0].mxu0 %v2389
      %v2498 = vpop.f32.mrb[0].mxu0
      %v2499 = vadd.f32 0.0, %v2498
      %v2500 = vpop.f32.mrb[0].mxu0
      %v2501 = vpop.f32.mrb[0].mxu0
      %v2502 = vadd.f32 0.0, %v2501
      %v2503 = vpop.f32.mrb[0].mxu0
      %2504 = vmatprep.mubr.bf16.mxu0 0
      %2505 = vmatmul.mubr.bf16.gmra.mrb[0].mxu0 %v2392
      %v2506 = vpop.f32.mrb[0].mxu0
      %v2507 = vadd.f32 0.0, %v2506
      %v2508 = vpop.f32.mrb[0].mxu0
      %v2509 = vpop.f32.mrb[0].mxu0
      %v2510 = vadd.f32 0.0, %v2509
      %v2511 = vpop.f32.mrb[0].mxu0
      %2512 = vmatprep.mubr.bf16.mxu0 0
      %2513 = vmatmul.mubr.bf16.gmra.mrb[0].mxu0 %v2395
      %v2514 = vpop.f32.mrb[0].mxu0
      %v2515 = vadd.f32 0.0, %v2514
      %v2516 = vpop.f32.mrb[0].mxu0
      %v2517 = vpop.f32.mrb[0].mxu0
      %v2518 = vadd.f32 0.0, %v2517
      %v2519 = vpop.f32.mrb[0].mxu0
      %2520 = vmatprep.mubr.bf16.mxu0 0
      %2521 = vmatmul.mubr.bf16.gmra.mrb[0].mxu0 %v2398
      %v2522 = vpop.f32.mrb[0].mxu0
      %v2523 = vadd.f32 0.0, %v2522
      %v2524 = vpop.f32.mrb[0].mxu0
      %v2525 = vpop.f32.mrb[0].mxu0
      %v2526 = vadd.f32 0.0, %v2525
      %v2527 = vpop.f32.mrb[0].mxu0
      %2528 = vmatprep.mubr.bf16.mxu0 0
      %2529 = vmatmul.mubr.bf16.gmra.mrb[0].mxu0 %v2401
      %v2530 = vpop.f32.mrb[0].mxu0
      %v2531 = vadd.f32 0.0, %v2530
      %v2532 = vpop.f32.mrb[0].mxu0
      %v2533 = vpop.f32.mrb[0].mxu0
      %v2534 = vadd.f32 0.0, %v2533
      %v2535 = vpop.f32.mrb[0].mxu0
      %2536 = vmatprep.mubr.bf16.mxu0 0
      %2537 = vmatmul.mubr.bf16.gmra.mrb[0].mxu0 %v2404
      %v2538 = vpop.f32.mrb[0].mxu0
      %v2539 = vadd.f32 0.0, %v2538
      %v2540 = vpop.f32.mrb[0].mxu0
      %v2541 = vpop.f32.mrb[0].mxu0
      %v2542 = vadd.f32 0.0, %v2541
      %v2543 = vpop.f32.mrb[0].mxu0
      %2544 = vmatprep.mubr.bf16.mxu0 0
      %2545 = vmatmul.mubr.bf16.gmra.mrb[0].mxu0 %v2407
      %v2546 = vpop.f32.mrb[0].mxu0
      %v2547 = vadd.f32 0.0, %v2546
      %v2548 = vpop.f32.mrb[0].mxu0
      %v2549 = vpop.f32.mrb[0].mxu0
      %v2550 = vadd.f32 0.0, %v2549
      %v2551 = vpop.f32.mrb[0].mxu0
      %2552 = vmatprep.mubr.bf16.mxu0 0
      %2553 = vmatmul.mubr.bf16.gmra.mrb[0].mxu0 %v2410
      %v2554 = vpop.f32.mrb[0].mxu0
      %v2555 = vadd.f32 0.0, %v2554
      %v2556 = vpop.f32.mrb[0].mxu0
      %v2557 = vpop.f32.mrb[0].mxu0
      %v2558 = vadd.f32 0.0, %v2557
      %v2559 = vpop.f32.mrb[0].mxu0
      %2560 = vmatprep.mubr.bf16.mxu0 0
      %2561 = vmatmul.mubr.bf16.gmra.mrb[0].mxu0 %v2413
      %v2562 = vpop.f32.mrb[0].mxu0
      %v2563 = vadd.f32 0.0, %v2562
      %v2564 = vpop.f32.mrb[0].mxu0
      %v2565 = vpop.f32.mrb[0].mxu0
      %v2566 = vadd.f32 0.0, %v2565
      %v2567 = vpop.f32.mrb[0].mxu0
      %2568 = vmatprep.mubr.bf16.mxu0 0
      %2569 = vmatmul.mubr.bf16.gmra.mrb[0].mxu0 %v2416
      %v2570 = vpop.f32.mrb[0].mxu0
      %v2571 = vadd.f32 0.0, %v2570
      %v2572 = vpop.f32.mrb[0].mxu0
      %v2573 = vpop.f32.mrb[0].mxu0
      %v2574 = vadd.f32 0.0, %v2573
      %v2575 = vpop.f32.mrb[0].mxu0
      %2576 = vmatprep.mubr.bf16.mxu0 0
      %2577 = vmatmul.mubr.bf16.gmra.mrb[0].mxu0 %v2419
      %v2578 = vpop.f32.mrb[0].mxu0
      %v2579 = vadd.f32 0.0, %v2578
      %v2580 = vpop.f32.mrb[0].mxu0
      %v2581 = vpop.f32.mrb[0].mxu0
      %v2582 = vadd.f32 0.0, %v2581
      %v2583 = vpop.f32.mrb[0].mxu0
      %2584 = vdwg.mxu0
      %v2585 = vadd.f32 %v2028, %v2459
      %v2586 = vadd.f32 %v2031, %v2462
      %v2587 = vadd.f32 %v2036, %v2467
      %v2588 = vadd.f32 %v2039, %v2470
      %v2589 = vadd.f32 %v2044, %v2475
      %v2590 = vadd.f32 %v2047, %v2478
      %v2591 = vadd.f32 %v2052, %v2483
      %v2592 = vadd.f32 %v2055, %v2486
      %v2593 = vadd.f32 %v2060, %v2491
      %v2594 = vadd.f32 %v2063, %v2494
      %v2595 = vadd.f32 %v2068, %v2499
      %v2596 = vadd.f32 %v2071, %v2502
      %v2597 = vadd.f32 %v2076, %v2507
      %v2598 = vadd.f32 %v2079, %v2510
      %v2599 = vadd.f32 %v2084, %v2515
      %v2600 = vadd.f32 %v2087, %v2518
      %v2601 = vadd.f32 %v2092, %v2523
      %v2602 = vadd.f32 %v2095, %v2526
      %v2603 = vadd.f32 %v2100, %v2531
      %v2604 = vadd.f32 %v2103, %v2534
      %v2605 = vadd.f32 %v2108, %v2539
      %v2606 = vadd.f32 %v2111, %v2542
      %v2607 = vadd.f32 %v2116, %v2547
      %v2608 = vadd.f32 %v2119, %v2550
      %v2609 = vadd.f32 %v2124, %v2555
      %v2610 = vadd.f32 %v2127, %v2558
      %v2611 = vadd.f32 %v2132, %v2563
      %v2612 = vadd.f32 %v2135, %v2566
      %v2613 = vadd.f32 %v2140, %v2571
      %v2614 = vadd.f32 %v2143, %v2574
      %v2615 = vadd.f32 %v2148, %v2579
      %v2616 = vadd.f32 %v2151, %v2582
      %s2617 = scalar_lea.vmem [#allocation2], 12
      %v2618 = vld [vmem:[%s2617] sm:$0xf]
      %v2619 = vld [vmem:[%s2617 + $0x4] sm:$0xf]
      %v2620 = vld [vmem:[%s2617 + $0xc] sm:$0xf]
      %v2621 = vld [vmem:[%s2617 + $0x10] sm:$0xf]
      %v2622 = vld [vmem:[%s2617 + $0x18] sm:$0xf]
      %v2623 = vld [vmem:[%s2617 + $0x1c] sm:$0xf]
      %v2624 = vld [vmem:[%s2617 + $0x24] sm:$0xf]
      %v2625 = vld [vmem:[%s2617 + $0x28] sm:$0xf]
      %v2626 = vld [vmem:[%s2617 + $0x30] sm:$0xf]
      %v2627 = vld [vmem:[%s2617 + $0x34] sm:$0xf]
      %v2628 = vld [vmem:[%s2617 + $0x3c] sm:$0xf]
      %v2629 = vld [vmem:[%s2617 + $0x40] sm:$0xf]
      %v2630 = vld [vmem:[%s2617 + $0x48] sm:$0xf]
      %v2631 = vld [vmem:[%s2617 + $0x4c] sm:$0xf]
      %v2632 = vld [vmem:[%s2617 + $0x54] sm:$0xf]
      %v2633 = vld [vmem:[%s2617 + $0x58] sm:$0xf]
      %v2634 = vld [vmem:[%s2617 + $0x60] sm:$0xf]
      %v2635 = vld [vmem:[%s2617 + $0x64] sm:$0xf]
      %v2636 = vld [vmem:[%s2617 + $0x6c] sm:$0xf]
      %v2637 = vld [vmem:[%s2617 + $0x70] sm:$0xf]
      %v2638 = vld [vmem:[%s2617 + $0x78] sm:$0xf]
      %v2639 = vld [vmem:[%s2617 + $0x7c] sm:$0xf]
      %v2640 = vld [vmem:[%s2617 + $0x84] sm:$0xf]
      %v2641 = vld [vmem:[%s2617 + $0x88] sm:$0xf]
      %v2642 = vld [vmem:[%s2617 + $0x90] sm:$0xf]
      %v2643 = vld [vmem:[%s2617 + $0x94] sm:$0xf]
      %v2644 = vld [vmem:[%s2617 + $0x9c] sm:$0xf]
      %v2645 = vld [vmem:[%s2617 + $0xa0] sm:$0xf]
      %v2646 = vld [vmem:[%s2617 + $0xa8] sm:$0xf]
      %v2647 = vld [vmem:[%s2617 + $0xac] sm:$0xf]
      %v2648 = vld [vmem:[%s2617 + $0xb4] sm:$0xf]
      %v2649 = vld [vmem:[%s2617 + $0xb8] sm:$0xf]
      %s2650 = scalar_lea.vmem %s295, 24
      %v2651 = vld [vmem:[%s2650] sm:$0xf]
      %v2652 = vld [vmem:[%s2650 + $0x4] sm:$0xf]
      %v2685 = vunpack.c.l.b16 %v2618
      %v2686 = vunpack.c.l.b16 %v2619
      %v2687 = vunpack.c.l.b16 %v2620
      %v2688 = vunpack.c.l.b16 %v2621
      %v2689 = vunpack.c.l.b16 %v2622
      %v2690 = vunpack.c.l.b16 %v2623
      %v2691 = vunpack.c.l.b16 %v2624
      %v2692 = vunpack.c.l.b16 %v2625
      %v2693 = vunpack.c.l.b16 %v2626
      %v2694 = vunpack.c.l.b16 %v2627
      %v2695 = vunpack.c.l.b16 %v2628
      %v2696 = vunpack.c.l.b16 %v2629
      %v2697 = vunpack.c.l.b16 %v2630
      %v2698 = vunpack.c.l.b16 %v2631
      %v2699 = vunpack.c.l.b16 %v2632
      %v2700 = vunpack.c.l.b16 %v2633
      %v2701 = vunpack.c.l.b16 %v2634
      %v2702 = vunpack.c.l.b16 %v2635
      %v2703 = vunpack.c.l.b16 %v2636
      %v2704 = vunpack.c.l.b16 %v2637
      %v2705 = vunpack.c.l.b16 %v2638
      %v2706 = vunpack.c.l.b16 %v2639
      %v2707 = vunpack.c.l.b16 %v2640
      %v2708 = vunpack.c.l.b16 %v2641
      %v2709 = vunpack.c.l.b16 %v2642
      %v2710 = vunpack.c.l.b16 %v2643
      %v2711 = vunpack.c.l.b16 %v2644
      %v2712 = vunpack.c.l.b16 %v2645
      %v2713 = vunpack.c.l.b16 %v2646
      %v2714 = vunpack.c.l.b16 %v2647
      %v2715 = vunpack.c.l.b16 %v2648
      %v2716 = vunpack.c.l.b16 %v2649
      %v2717 = vpack.c.b16 %v2686, %v2685
      %v2718 = vpack.c.b16 %v2688, %v2687
      %v2719 = vpack.c.b16 %v2690, %v2689
      %v2720 = vpack.c.b16 %v2692, %v2691
      %v2721 = vpack.c.b16 %v2694, %v2693
      %v2722 = vpack.c.b16 %v2696, %v2695
      %v2723 = vpack.c.b16 %v2698, %v2697
      %v2724 = vpack.c.b16 %v2700, %v2699
      %v2725 = vpack.c.b16 %v2702, %v2701
      %v2726 = vpack.c.b16 %v2704, %v2703
      %v2727 = vpack.c.b16 %v2706, %v2705
      %v2728 = vpack.c.b16 %v2708, %v2707
      %v2729 = vpack.c.b16 %v2710, %v2709
      %v2730 = vpack.c.b16 %v2712, %v2711
      %v2731 = vpack.c.b16 %v2714, %v2713
      %v2732 = vpack.c.b16 %v2716, %v2715
      %v2735 = vunpack.c.l.b16 %v2651
      %v2736 = vunpack.c.l.b16 %v2652
      %v2737 = vpack.c.b16 %v2736, %v2735
      %v2739 = vsel %vm1644, %v2717, 0
      %v2742 = vsel %vm1644, %v2718, 0
      %v2745 = vsel %vm1644, %v2719, 0
      %v2748 = vsel %vm1644, %v2720, 0
      %v2751 = vsel %vm1644, %v2721, 0
      %v2754 = vsel %vm1644, %v2722, 0
      %v2757 = vsel %vm1644, %v2723, 0
      %v2760 = vsel %vm1644, %v2724, 0
      %v2763 = vsel %vm1644, %v2725, 0
      %v2766 = vsel %vm1644, %v2726, 0
      %v2769 = vsel %vm1644, %v2727, 0
      %v2772 = vsel %vm1644, %v2728, 0
      %v2775 = vsel %vm1644, %v2729, 0
      %v2778 = vsel %vm1644, %v2730, 0
      %v2781 = vsel %vm1644, %v2731, 0
      %v2784 = vsel %vm1644, %v2732, 0
      %v2787 = vsel %vm1644, %v2737, 0
      %2789 = vmatprep.subr.bf16.mxu0 0
      %2790 = vmatpush1.bf16.xpose.msra.mxu0 %v2787
      %2791 = vmatprep.subr.bf16.mxu0 0
      %2792 = vmatpush1.bf16.xpose.msra.mxu0 0
      %2793 = vmatprep.subr.bf16.mxu0 0
      %2794 = vmatpush1.bf16.xpose.msra.mxu0 0
      %2795 = vmatprep.subr.bf16.mxu0 0
      %2796 = vmatpush1.bf16.xpose.msra.mxu0 0
      %2797 = vmatprep.subr.bf16.mxu0 0
      %2798 = vmatpush1.bf16.xpose.msra.mxu0 0
      %2799 = vmatprep.subr.bf16.mxu0 0
      %2800 = vmatpush1.bf16.xpose.msra.mxu0 0
      %2801 = vmatprep.subr.bf16.mxu0 0
      %2802 = vmatpush1.bf16.xpose.msra.mxu0 0
      %2803 = vmatprep.subr.bf16.mxu0 0
      %2804 = vmatpush1.bf16.xpose.msra.mxu0 0
      %2805 = vmatprep.subr.bf16.mxu0 0
      %2806 = vmatpush1.bf16.xpose.msra.mxu0 0
      %2807 = vmatprep.subr.bf16.mxu0 0
      %2808 = vmatpush1.bf16.xpose.msra.mxu0 0
      %2809 = vmatprep.subr.bf16.mxu0 0
      %2810 = vmatpush1.bf16.xpose.msra.mxu0 0
      %2811 = vmatprep.subr.bf16.mxu0 0
      %2812 = vmatpush1.bf16.xpose.msra.mxu0 0
      %2813 = vmatprep.subr.bf16.mxu0 0
      %2814 = vmatpush1.bf16.xpose.msra.mxu0 0
      %2815 = vmatprep.subr.bf16.mxu0 0
      %2816 = vmatpush1.bf16.xpose.msra.mxu0 0
      %2817 = vmatprep.subr.bf16.mxu0 0
      %2818 = vmatpush1.bf16.xpose.msra.mxu0 0
      %2819 = vmatprep.subr.bf16.mxu0 0
      %2820 = vmatpush1.bf16.xpose.msra.mxu0 0
      %2821 = vmatprep.mubr.bf16.mxu0 0
      %2822 = vmatmul.mubr.bf16.gmra.mrb[0].mxu0 %v2739
      %v2823 = vpop.f32.mrb[0].mxu0
      %v2824 = vadd.f32 0.0, %v2823
      %v2825 = vpop.f32.mrb[0].mxu0
      %v2826 = vpop.f32.mrb[0].mxu0
      %v2827 = vadd.f32 0.0, %v2826
      %v2828 = vpop.f32.mrb[0].mxu0
      %2829 = vmatprep.mubr.bf16.mxu0 0
      %2830 = vmatmul.mubr.bf16.gmra.mrb[0].mxu0 %v2742
      %v2831 = vpop.f32.mrb[0].mxu0
      %v2832 = vadd.f32 0.0, %v2831
      %v2833 = vpop.f32.mrb[0].mxu0
      %v2834 = vpop.f32.mrb[0].mxu0
      %v2835 = vadd.f32 0.0, %v2834
      %v2836 = vpop.f32.mrb[0].mxu0
      %2837 = vmatprep.mubr.bf16.mxu0 0
      %2838 = vmatmul.mubr.bf16.gmra.mrb[0].mxu0 %v2745
      %v2839 = vpop.f32.mrb[0].mxu0
      %v2840 = vadd.f32 0.0, %v2839
      %v2841 = vpop.f32.mrb[0].mxu0
      %v2842 = vpop.f32.mrb[0].mxu0
      %v2843 = vadd.f32 0.0, %v2842
      %v2844 = vpop.f32.mrb[0].mxu0
      %2845 = vmatprep.mubr.bf16.mxu0 0
      %2846 = vmatmul.mubr.bf16.gmra.mrb[0].mxu0 %v2748
      %v2847 = vpop.f32.mrb[0].mxu0
      %v2848 = vadd.f32 0.0, %v2847
      %v2849 = vpop.f32.mrb[0].mxu0
      %v2850 = vpop.f32.mrb[0].mxu0
      %v2851 = vadd.f32 0.0, %v2850
      %v2852 = vpop.f32.mrb[0].mxu0
      %2853 = vmatprep.mubr.bf16.mxu0 0
      %2854 = vmatmul.mubr.bf16.gmra.mrb[0].mxu0 %v2751
      %v2855 = vpop.f32.mrb[0].mxu0
      %v2856 = vadd.f32 0.0, %v2855
      %v2857 = vpop.f32.mrb[0].mxu0
      %v2858 = vpop.f32.mrb[0].mxu0
      %v2859 = vadd.f32 0.0, %v2858
      %v2860 = vpop.f32.mrb[0].mxu0
      %2861 = vmatprep.mubr.bf16.mxu0 0
      %2862 = vmatmul.mubr.bf16.gmra.mrb[0].mxu0 %v2754
      %v2863 = vpop.f32.mrb[0].mxu0
      %v2864 = vadd.f32 0.0, %v2863
      %v2865 = vpop.f32.mrb[0].mxu0
      %v2866 = vpop.f32.mrb[0].mxu0
      %v2867 = vadd.f32 0.0, %v2866
      %v2868 = vpop.f32.mrb[0].mxu0
      %2869 = vmatprep.mubr.bf16.mxu0 0
      %2870 = vmatmul.mubr.bf16.gmra.mrb[0].mxu0 %v2757
      %v2871 = vpop.f32.mrb[0].mxu0
      %v2872 = vadd.f32 0.0, %v2871
      %v2873 = vpop.f32.mrb[0].mxu0
      %v2874 = vpop.f32.mrb[0].mxu0
      %v2875 = vadd.f32 0.0, %v2874
      %v2876 = vpop.f32.mrb[0].mxu0
      %2877 = vmatprep.mubr.bf16.mxu0 0
      %2878 = vmatmul.mubr.bf16.gmra.mrb[0].mxu0 %v2760
      %v2879 = vpop.f32.mrb[0].mxu0
      %v2880 = vadd.f32 0.0, %v2879
      %v2881 = vpop.f32.mrb[0].mxu0
      %v2882 = vpop.f32.mrb[0].mxu0
      %v2883 = vadd.f32 0.0, %v2882
      %v2884 = vpop.f32.mrb[0].mxu0
      %2885 = vmatprep.mubr.bf16.mxu0 0
      %2886 = vmatmul.mubr.bf16.gmra.mrb[0].mxu0 %v2763
      %v2887 = vpop.f32.mrb[0].mxu0
      %v2888 = vadd.f32 0.0, %v2887
      %v2889 = vpop.f32.mrb[0].mxu0
      %v2890 = vpop.f32.mrb[0].mxu0
      %v2891 = vadd.f32 0.0, %v2890
      %v2892 = vpop.f32.mrb[0].mxu0
      %2893 = vmatprep.mubr.bf16.mxu0 0
      %2894 = vmatmul.mubr.bf16.gmra.mrb[0].mxu0 %v2766
      %v2895 = vpop.f32.mrb[0].mxu0
      %v2896 = vadd.f32 0.0, %v2895
      %v2897 = vpop.f32.mrb[0].mxu0
      %v2898 = vpop.f32.mrb[0].mxu0
      %v2899 = vadd.f32 0.0, %v2898
      %v2900 = vpop.f32.mrb[0].mxu0
      %2901 = vmatprep.mubr.bf16.mxu0 0
      %2902 = vmatmul.mubr.bf16.gmra.mrb[0].mxu0 %v2769
      %v2903 = vpop.f32.mrb[0].mxu0
      %v2904 = vadd.f32 0.0, %v2903
      %v2905 = vpop.f32.mrb[0].mxu0
      %v2906 = vpop.f32.mrb[0].mxu0
      %v2907 = vadd.f32 0.0, %v2906
      %v2908 = vpop.f32.mrb[0].mxu0
      %2909 = vmatprep.mubr.bf16.mxu0 0
      %2910 = vmatmul.mubr.bf16.gmra.mrb[0].mxu0 %v2772
      %v2911 = vpop.f32.mrb[0].mxu0
      %v2912 = vadd.f32 0.0, %v2911
      %v2913 = vpop.f32.mrb[0].mxu0
      %v2914 = vpop.f32.mrb[0].mxu0
      %v2915 = vadd.f32 0.0, %v2914
      %v2916 = vpop.f32.mrb[0].mxu0
      %2917 = vmatprep.mubr.bf16.mxu0 0
      %2918 = vmatmul.mubr.bf16.gmra.mrb[0].mxu0 %v2775
      %v2919 = vpop.f32.mrb[0].mxu0
      %v2920 = vadd.f32 0.0, %v2919
      %v2921 = vpop.f32.mrb[0].mxu0
      %v2922 = vpop.f32.mrb[0].mxu0
      %v2923 = vadd.f32 0.0, %v2922
      %v2924 = vpop.f32.mrb[0].mxu0
      %2925 = vmatprep.mubr.bf16.mxu0 0
      %2926 = vmatmul.mubr.bf16.gmra.mrb[0].mxu0 %v2778
      %v2927 = vpop.f32.mrb[0].mxu0
      %v2928 = vadd.f32 0.0, %v2927
      %v2929 = vpop.f32.mrb[0].mxu0
      %v2930 = vpop.f32.mrb[0].mxu0
      %v2931 = vadd.f32 0.0, %v2930
      %v2932 = vpop.f32.mrb[0].mxu0
      %2933 = vmatprep.mubr.bf16.mxu0 0
      %2934 = vmatmul.mubr.bf16.gmra.mrb[0].mxu0 %v2781
      %v2935 = vpop.f32.mrb[0].mxu0
      %v2936 = vadd.f32 0.0, %v2935
      %v2937 = vpop.f32.mrb[0].mxu0
      %v2938 = vpop.f32.mrb[0].mxu0
      %v2939 = vadd.f32 0.0, %v2938
      %v2940 = vpop.f32.mrb[0].mxu0
      %2941 = vmatprep.mubr.bf16.mxu0 0
      %2942 = vmatmul.mubr.bf16.gmra.mrb[0].mxu0 %v2784
      %v2943 = vpop.f32.mrb[0].mxu0
      %v2944 = vadd.f32 0.0, %v2943
      %v2945 = vpop.f32.mrb[0].mxu0
      %v2946 = vpop.f32.mrb[0].mxu0
      %v2947 = vadd.f32 0.0, %v2946
      %v2948 = vpop.f32.mrb[0].mxu0
      %2949 = vdwg.mxu0
      %v2950 = vadd.f32 %v2585, %v2824
      %v2951 = vadd.f32 %v2586, %v2827
      %v2952 = vadd.f32 %v2587, %v2832
      %v2953 = vadd.f32 %v2588, %v2835
      %v2954 = vadd.f32 %v2589, %v2840
      %v2955 = vadd.f32 %v2590, %v2843
      %v2956 = vadd.f32 %v2591, %v2848
      %v2957 = vadd.f32 %v2592, %v2851
      %v2958 = vadd.f32 %v2593, %v2856
      %v2959 = vadd.f32 %v2594, %v2859
      %v2960 = vadd.f32 %v2595, %v2864
      %v2961 = vadd.f32 %v2596, %v2867
      %v2962 = vadd.f32 %v2597, %v2872
      %v2963 = vadd.f32 %v2598, %v2875
      %v2964 = vadd.f32 %v2599, %v2880
      %v2965 = vadd.f32 %v2600, %v2883
      %v2966 = vadd.f32 %v2601, %v2888
      %v2967 = vadd.f32 %v2602, %v2891
      %v2968 = vadd.f32 %v2603, %v2896
      %v2969 = vadd.f32 %v2604, %v2899
      %v2970 = vadd.f32 %v2605, %v2904
      %v2971 = vadd.f32 %v2606, %v2907
      %v2972 = vadd.f32 %v2607, %v2912
      %v2973 = vadd.f32 %v2608, %v2915
      %v2974 = vadd.f32 %v2609, %v2920
      %v2975 = vadd.f32 %v2610, %v2923
      %v2976 = vadd.f32 %v2611, %v2928
      %v2977 = vadd.f32 %v2612, %v2931
      %v2978 = vadd.f32 %v2613, %v2936
      %v2979 = vadd.f32 %v2614, %v2939
      %v2980 = vadd.f32 %v2615, %v2944
      %v2981 = vadd.f32 %v2616, %v2947
      %v2982 = vld [vmem:[%s2617] sm:$0xf]
      %v2983 = vld [vmem:[%s2617 + $0x4] sm:$0xf]
      %v2984 = vld [vmem:[%s2617 + $0x8] sm:$0x1]
      %v2985 = vld [vmem:[%s2617 + $0xc] sm:$0xf]
      %v2986 = vld [vmem:[%s2617 + $0x10] sm:$0xf]
      %v2987 = vld [vmem:[%s2617 + $0x14] sm:$0x1]
      %v2988 = vld [vmem:[%s2617 + $0x18] sm:$0xf]
      %v2989 = vld [vmem:[%s2617 + $0x1c] sm:$0xf]
      %v2990 = vld [vmem:[%s2617 + $0x20] sm:$0x1]
      %v2991 = vld [vmem:[%s2617 + $0x24] sm:$0xf]
      %v2992 = vld [vmem:[%s2617 + $0x28] sm:$0xf]
      %v2993 = vld [vmem:[%s2617 + $0x2c] sm:$0x1]
      %v2994 = vld [vmem:[%s2617 + $0x30] sm:$0xf]
      %v2995 = vld [vmem:[%s2617 + $0x34] sm:$0xf]
      %v2996 = vld [vmem:[%s2617 + $0x38] sm:$0x1]
      %v2997 = vld [vmem:[%s2617 + $0x3c] sm:$0xf]
      %v2998 = vld [vmem:[%s2617 + $0x40] sm:$0xf]
      %v2999 = vld [vmem:[%s2617 + $0x44] sm:$0x1]
      %v3000 = vld [vmem:[%s2617 + $0x48] sm:$0xf]
      %v3001 = vld [vmem:[%s2617 + $0x4c] sm:$0xf]
      %v3002 = vld [vmem:[%s2617 + $0x50] sm:$0x1]
      %v3003 = vld [vmem:[%s2617 + $0x54] sm:$0xf]
      %v3004 = vld [vmem:[%s2617 + $0x58] sm:$0xf]
      %v3005 = vld [vmem:[%s2617 + $0x5c] sm:$0x1]
      %v3006 = vld [vmem:[%s2617 + $0x60] sm:$0xf]
      %v3007 = vld [vmem:[%s2617 + $0x64] sm:$0xf]
      %v3008 = vld [vmem:[%s2617 + $0x68] sm:$0x1]
      %v3009 = vld [vmem:[%s2617 + $0x6c] sm:$0xf]
      %v3010 = vld [vmem:[%s2617 + $0x70] sm:$0xf]
      %v3011 = vld [vmem:[%s2617 + $0x74] sm:$0x1]
      %v3012 = vld [vmem:[%s2617 + $0x78] sm:$0xf]
      %v3013 = vld [vmem:[%s2617 + $0x7c] sm:$0xf]
      %v3014 = vld [vmem:[%s2617 + $0x80] sm:$0x1]
      %v3015 = vld [vmem:[%s2617 + $0x84] sm:$0xf]
      %v3016 = vld [vmem:[%s2617 + $0x88] sm:$0xf]
      %v3017 = vld [vmem:[%s2617 + $0x8c] sm:$0x1]
      %v3018 = vld [vmem:[%s2617 + $0x90] sm:$0xf]
      %v3019 = vld [vmem:[%s2617 + $0x94] sm:$0xf]
      %v3020 = vld [vmem:[%s2617 + $0x98] sm:$0x1]
      %v3021 = vld [vmem:[%s2617 + $0x9c] sm:$0xf]
      %v3022 = vld [vmem:[%s2617 + $0xa0] sm:$0xf]
      %v3023 = vld [vmem:[%s2617 + $0xa4] sm:$0x1]
      %v3024 = vld [vmem:[%s2617 + $0xa8] sm:$0xf]
      %v3025 = vld [vmem:[%s2617 + $0xac] sm:$0xf]
      %v3026 = vld [vmem:[%s2617 + $0xb0] sm:$0x1]
      %v3027 = vld [vmem:[%s2617 + $0xb4] sm:$0xf]
      %v3028 = vld [vmem:[%s2617 + $0xb8] sm:$0xf]
      %v3029 = vld [vmem:[%s2617 + $0xbc] sm:$0x1]
      %v3031 = vshrl.u32 %v2982, 16
      %v3033 = vrot.slane %v3031, 4
      %v3034 = vshll.u32 %v2982, 16
      %v3036 = vrot.slane %v3034, 5
      %v3037 = vor.u32 %v3033, %v3036
      %v3038 = vrot.slane %v3037, 4
      %v3040 = vshll.u32 %v2983, 16
      %v3042 = vrot.slane %v3040, 5
      %v3043 = vsel %vm1203, %v3038, %v3042
      %v3044 = vshrl.u32 %v2983, 16
      %v3046 = vrot.slane %v3044, 4
      %v3047 = vor.u32 %v3046, %v3042
      %v3048 = vrot.slane %v3047, 4
      %v3050 = vshll.u32 %v2984, 16
      %v3052 = vrot.slane %v3050, 5
      %v3053 = vsel %vm1203, %v3048, %v3052
      %v3055 = vshrl.u32 %v2985, 16
      %v3057 = vrot.slane %v3055, 4
      %v3058 = vshll.u32 %v2985, 16
      %v3060 = vrot.slane %v3058, 5
      %v3061 = vor.u32 %v3057, %v3060
      %v3062 = vrot.slane %v3061, 4
      %v3064 = vshll.u32 %v2986, 16
      %v3066 = vrot.slane %v3064, 5
      %v3067 = vsel %vm1203, %v3062, %v3066
      %v3068 = vshrl.u32 %v2986, 16
      %v3070 = vrot.slane %v3068, 4
      %v3071 = vor.u32 %v3070, %v3066
      %v3072 = vrot.slane %v3071, 4
      %v3074 = vshll.u32 %v2987, 16
      %v3076 = vrot.slane %v3074, 5
      %v3077 = vsel %vm1203, %v3072, %v3076
      %v3079 = vshrl.u32 %v2988, 16
      %v3081 = vrot.slane %v3079, 4
      %v3082 = vshll.u32 %v2988, 16
      %v3084 = vrot.slane %v3082, 5
      %v3085 = vor.u32 %v3081, %v3084
      %v3086 = vrot.slane %v3085, 4
      %v3088 = vshll.u32 %v2989, 16
      %v3090 = vrot.slane %v3088, 5
      %v3091 = vsel %vm1203, %v3086, %v3090
      %v3092 = vshrl.u32 %v2989, 16
      %v3094 = vrot.slane %v3092, 4
      %v3095 = vor.u32 %v3094, %v3090
      %v3096 = vrot.slane %v3095, 4
      %v3098 = vshll.u32 %v2990, 16
      %v3100 = vrot.slane %v3098, 5
      %v3101 = vsel %vm1203, %v3096, %v3100
      %v3103 = vshrl.u32 %v2991, 16
      %v3105 = vrot.slane %v3103, 4
      %v3106 = vshll.u32 %v2991, 16
      %v3108 = vrot.slane %v3106, 5
      %v3109 = vor.u32 %v3105, %v3108
      %v3110 = vrot.slane %v3109, 4
      %v3112 = vshll.u32 %v2992, 16
      %v3114 = vrot.slane %v3112, 5
      %v3115 = vsel %vm1203, %v3110, %v3114
      %v3116 = vshrl.u32 %v2992, 16
      %v3118 = vrot.slane %v3116, 4
      %v3119 = vor.u32 %v3118, %v3114
      %v3120 = vrot.slane %v3119, 4
      %v3122 = vshll.u32 %v2993, 16
      %v3124 = vrot.slane %v3122, 5
      %v3125 = vsel %vm1203, %v3120, %v3124
      %v3127 = vshrl.u32 %v2994, 16
      %v3129 = vrot.slane %v3127, 4
      %v3130 = vshll.u32 %v2994, 16
      %v3132 = vrot.slane %v3130, 5
      %v3133 = vor.u32 %v3129, %v3132
      %v3134 = vrot.slane %v3133, 4
      %v3136 = vshll.u32 %v2995, 16
      %v3138 = vrot.slane %v3136, 5
      %v3139 = vsel %vm1203, %v3134, %v3138
      %v3140 = vshrl.u32 %v2995, 16
      %v3142 = vrot.slane %v3140, 4
      %v3143 = vor.u32 %v3142, %v3138
      %v3144 = vrot.slane %v3143, 4
      %v3146 = vshll.u32 %v2996, 16
      %v3148 = vrot.slane %v3146, 5
      %v3149 = vsel %vm1203, %v3144, %v3148
      %v3151 = vshrl.u32 %v2997, 16
      %v3153 = vrot.slane %v3151, 4
      %v3154 = vshll.u32 %v2997, 16
      %v3156 = vrot.slane %v3154, 5
      %v3157 = vor.u32 %v3153, %v3156
      %v3158 = vrot.slane %v3157, 4
      %v3160 = vshll.u32 %v2998, 16
      %v3162 = vrot.slane %v3160, 5
      %v3163 = vsel %vm1203, %v3158, %v3162
      %v3164 = vshrl.u32 %v2998, 16
      %v3166 = vrot.slane %v3164, 4
      %v3167 = vor.u32 %v3166, %v3162
      %v3168 = vrot.slane %v3167, 4
      %v3170 = vshll.u32 %v2999, 16
      %v3172 = vrot.slane %v3170, 5
      %v3173 = vsel %vm1203, %v3168, %v3172
      %v3175 = vshrl.u32 %v3000, 16
      %v3177 = vrot.slane %v3175, 4
      %v3178 = vshll.u32 %v3000, 16
      %v3180 = vrot.slane %v3178, 5
      %v3181 = vor.u32 %v3177, %v3180
      %v3182 = vrot.slane %v3181, 4
      %v3184 = vshll.u32 %v3001, 16
      %v3186 = vrot.slane %v3184, 5
      %v3187 = vsel %vm1203, %v3182, %v3186
      %v3188 = vshrl.u32 %v3001, 16
      %v3190 = vrot.slane %v3188, 4
      %v3191 = vor.u32 %v3190, %v3186
      %v3192 = vrot.slane %v3191, 4
      %v3194 = vshll.u32 %v3002, 16
      %v3196 = vrot.slane %v3194, 5
      %v3197 = vsel %vm1203, %v3192, %v3196
      %v3199 = vshrl.u32 %v3003, 16
      %v3201 = vrot.slane %v3199, 4
      %v3202 = vshll.u32 %v3003, 16
      %v3204 = vrot.slane %v3202, 5
      %v3205 = vor.u32 %v3201, %v3204
      %v3206 = vrot.slane %v3205, 4
      %v3208 = vshll.u32 %v3004, 16
      %v3210 = vrot.slane %v3208, 5
      %v3211 = vsel %vm1203, %v3206, %v3210
      %v3212 = vshrl.u32 %v3004, 16
      %v3214 = vrot.slane %v3212, 4
      %v3215 = vor.u32 %v3214, %v3210
      %v3216 = vrot.slane %v3215, 4
      %v3218 = vshll.u32 %v3005, 16
      %v3220 = vrot.slane %v3218, 5
      %v3221 = vsel %vm1203, %v3216, %v3220
      %v3223 = vshrl.u32 %v3006, 16
      %v3225 = vrot.slane %v3223, 4
      %v3226 = vshll.u32 %v3006, 16
      %v3228 = vrot.slane %v3226, 5
      %v3229 = vor.u32 %v3225, %v3228
      %v3230 = vrot.slane %v3229, 4
      %v3232 = vshll.u32 %v3007, 16
      %v3234 = vrot.slane %v3232, 5
      %v3235 = vsel %vm1203, %v3230, %v3234
      %v3236 = vshrl.u32 %v3007, 16
      %v3238 = vrot.slane %v3236, 4
      %v3239 = vor.u32 %v3238, %v3234
      %v3240 = vrot.slane %v3239, 4
      %v3242 = vshll.u32 %v3008, 16
      %v3244 = vrot.slane %v3242, 5
      %v3245 = vsel %vm1203, %v3240, %v3244
      %v3247 = vshrl.u32 %v3009, 16
      %v3249 = vrot.slane %v3247, 4
      %v3250 = vshll.u32 %v3009, 16
      %v3252 = vrot.slane %v3250, 5
      %v3253 = vor.u32 %v3249, %v3252
      %v3254 = vrot.slane %v3253, 4
      %v3256 = vshll.u32 %v3010, 16
      %v3258 = vrot.slane %v3256, 5
      %v3259 = vsel %vm1203, %v3254, %v3258
      %v3260 = vshrl.u32 %v3010, 16
      %v3262 = vrot.slane %v3260, 4
      %v3263 = vor.u32 %v3262, %v3258
      %v3264 = vrot.slane %v3263, 4
      %v3266 = vshll.u32 %v3011, 16
      %v3268 = vrot.slane %v3266, 5
      %v3269 = vsel %vm1203, %v3264, %v3268
      %v3271 = vshrl.u32 %v3012, 16
      %v3273 = vrot.slane %v3271, 4
      %v3274 = vshll.u32 %v3012, 16
      %v3276 = vrot.slane %v3274, 5
      %v3277 = vor.u32 %v3273, %v3276
      %v3278 = vrot.slane %v3277, 4
      %v3280 = vshll.u32 %v3013, 16
      %v3282 = vrot.slane %v3280, 5
      %v3283 = vsel %vm1203, %v3278, %v3282
      %v3284 = vshrl.u32 %v3013, 16
      %v3286 = vrot.slane %v3284, 4
      %v3287 = vor.u32 %v3286, %v3282
      %v3288 = vrot.slane %v3287, 4
      %v3290 = vshll.u32 %v3014, 16
      %v3292 = vrot.slane %v3290, 5
      %v3293 = vsel %vm1203, %v3288, %v3292
      %v3295 = vshrl.u32 %v3015, 16
      %v3297 = vrot.slane %v3295, 4
      %v3298 = vshll.u32 %v3015, 16
      %v3300 = vrot.slane %v3298, 5
      %v3301 = vor.u32 %v3297, %v3300
      %v3302 = vrot.slane %v3301, 4
      %v3304 = vshll.u32 %v3016, 16
      %v3306 = vrot.slane %v3304, 5
      %v3307 = vsel %vm1203, %v3302, %v3306
      %v3308 = vshrl.u32 %v3016, 16
      %v3310 = vrot.slane %v3308, 4
      %v3311 = vor.u32 %v3310, %v3306
      %v3312 = vrot.slane %v3311, 4
      %v3314 = vshll.u32 %v3017, 16
      %v3316 = vrot.slane %v3314, 5
      %v3317 = vsel %vm1203, %v3312, %v3316
      %v3319 = vshrl.u32 %v3018, 16
      %v3321 = vrot.slane %v3319, 4
      %v3322 = vshll.u32 %v3018, 16
      %v3324 = vrot.slane %v3322, 5
      %v3325 = vor.u32 %v3321, %v3324
      %v3326 = vrot.slane %v3325, 4
      %v3328 = vshll.u32 %v3019, 16
      %v3330 = vrot.slane %v3328, 5
      %v3331 = vsel %vm1203, %v3326, %v3330
      %v3332 = vshrl.u32 %v3019, 16
      %v3334 = vrot.slane %v3332, 4
      %v3335 = vor.u32 %v3334, %v3330
      %v3336 = vrot.slane %v3335, 4
      %v3338 = vshll.u32 %v3020, 16
      %v3340 = vrot.slane %v3338, 5
      %v3341 = vsel %vm1203, %v3336, %v3340
      %v3343 = vshrl.u32 %v3021, 16
      %v3345 = vrot.slane %v3343, 4
      %v3346 = vshll.u32 %v3021, 16
      %v3348 = vrot.slane %v3346, 5
      %v3349 = vor.u32 %v3345, %v3348
      %v3350 = vrot.slane %v3349, 4
      %v3352 = vshll.u32 %v3022, 16
      %v3354 = vrot.slane %v3352, 5
      %v3355 = vsel %vm1203, %v3350, %v3354
      %v3356 = vshrl.u32 %v3022, 16
      %v3358 = vrot.slane %v3356, 4
      %v3359 = vor.u32 %v3358, %v3354
      %v3360 = vrot.slane %v3359, 4
      %v3362 = vshll.u32 %v3023, 16
      %v3364 = vrot.slane %v3362, 5
      %v3365 = vsel %vm1203, %v3360, %v3364
      %v3367 = vshrl.u32 %v3024, 16
      %v3369 = vrot.slane %v3367, 4
      %v3370 = vshll.u32 %v3024, 16
      %v3372 = vrot.slane %v3370, 5
      %v3373 = vor.u32 %v3369, %v3372
      %v3374 = vrot.slane %v3373, 4
      %v3376 = vshll.u32 %v3025, 16
      %v3378 = vrot.slane %v3376, 5
      %v3379 = vsel %vm1203, %v3374, %v3378
      %v3380 = vshrl.u32 %v3025, 16
      %v3382 = vrot.slane %v3380, 4
      %v3383 = vor.u32 %v3382, %v3378
      %v3384 = vrot.slane %v3383, 4
      %v3386 = vshll.u32 %v3026, 16
      %v3388 = vrot.slane %v3386, 5
      %v3389 = vsel %vm1203, %v3384, %v3388
      %v3391 = vshrl.u32 %v3027, 16
      %v3393 = vrot.slane %v3391, 4
      %v3394 = vshll.u32 %v3027, 16
      %v3396 = vrot.slane %v3394, 5
      %v3397 = vor.u32 %v3393, %v3396
      %v3398 = vrot.slane %v3397, 4
      %v3400 = vshll.u32 %v3028, 16
      %v3402 = vrot.slane %v3400, 5
      %v3403 = vsel %vm1203, %v3398, %v3402
      %v3404 = vshrl.u32 %v3028, 16
      %v3406 = vrot.slane %v3404, 4
      %v3407 = vor.u32 %v3406, %v3402
      %v3408 = vrot.slane %v3407, 4
      %v3410 = vshll.u32 %v3029, 16
      %v3412 = vrot.slane %v3410, 5
      %v3413 = vsel %vm1203, %v3408, %v3412
      %s3414 = scalar_lea.vmem %s295, 32
      %v3415 = vld [vmem:[%s3414] sm:$0xf]
      %v3416 = vld [vmem:[%s3414 + $0x4] sm:$0xf]
      %v3417 = vunpack.c.l.b16 %v3043
      %v3418 = vunpack.c.l.b16 %v3053
      %v3419 = vunpack.c.l.b16 %v3067
      %v3420 = vunpack.c.l.b16 %v3077
      %v3421 = vunpack.c.l.b16 %v3091
      %v3422 = vunpack.c.l.b16 %v3101
      %v3423 = vunpack.c.l.b16 %v3115
      %v3424 = vunpack.c.l.b16 %v3125
      %v3425 = vunpack.c.l.b16 %v3139
      %v3426 = vunpack.c.l.b16 %v3149
      %v3427 = vunpack.c.l.b16 %v3163
      %v3428 = vunpack.c.l.b16 %v3173
      %v3429 = vunpack.c.l.b16 %v3187
      %v3430 = vunpack.c.l.b16 %v3197
      %v3431 = vunpack.c.l.b16 %v3211
      %v3432 = vunpack.c.l.b16 %v3221
      %v3433 = vunpack.c.l.b16 %v3235
      %v3434 = vunpack.c.l.b16 %v3245
      %v3435 = vunpack.c.l.b16 %v3259
      %v3436 = vunpack.c.l.b16 %v3269
      %v3437 = vunpack.c.l.b16 %v3283
      %v3438 = vunpack.c.l.b16 %v3293
      %v3439 = vunpack.c.l.b16 %v3307
      %v3440 = vunpack.c.l.b16 %v3317
      %v3441 = vunpack.c.l.b16 %v3331
      %v3442 = vunpack.c.l.b16 %v3341
      %v3443 = vunpack.c.l.b16 %v3355
      %v3444 = vunpack.c.l.b16 %v3365
      %v3445 = vunpack.c.l.b16 %v3379
      %v3446 = vunpack.c.l.b16 %v3389
      %v3447 = vunpack.c.l.b16 %v3403
      %v3448 = vunpack.c.l.b16 %v3413
      %v3449 = vpack.c.b16 %v3418, %v3417
      %v3450 = vpack.c.b16 %v3420, %v3419
      %v3451 = vpack.c.b16 %v3422, %v3421
      %v3452 = vpack.c.b16 %v3424, %v3423
      %v3453 = vpack.c.b16 %v3426, %v3425
      %v3454 = vpack.c.b16 %v3428, %v3427
      %v3455 = vpack.c.b16 %v3430, %v3429
      %v3456 = vpack.c.b16 %v3432, %v3431
      %v3457 = vpack.c.b16 %v3434, %v3433
      %v3458 = vpack.c.b16 %v3436, %v3435
      %v3459 = vpack.c.b16 %v3438, %v3437
      %v3460 = vpack.c.b16 %v3440, %v3439
      %v3461 = vpack.c.b16 %v3442, %v3441
      %v3462 = vpack.c.b16 %v3444, %v3443
      %v3463 = vpack.c.b16 %v3446, %v3445
      %v3464 = vpack.c.b16 %v3448, %v3447
      %v3467 = vunpack.c.l.b16 %v3415
      %v3468 = vunpack.c.l.b16 %v3416
      %v3469 = vpack.c.b16 %v3468, %v3467
      %v3471 = vsel %vm1644, %v3449, 0
      %v3474 = vsel %vm1644, %v3450, 0
      %v3477 = vsel %vm1644, %v3451, 0
      %v3480 = vsel %vm1644, %v3452, 0
      %v3483 = vsel %vm1644, %v3453, 0
      %v3486 = vsel %vm1644, %v3454, 0
      %v3489 = vsel %vm1644, %v3455, 0
      %v3492 = vsel %vm1644, %v3456, 0
      %v3495 = vsel %vm1644, %v3457, 0
      %v3498 = vsel %vm1644, %v3458, 0
      %v3501 = vsel %vm1644, %v3459, 0
      %v3504 = vsel %vm1644, %v3460, 0
      %v3507 = vsel %vm1644, %v3461, 0
      %v3510 = vsel %vm1644, %v3462, 0
      %v3513 = vsel %vm1644, %v3463, 0
      %v3516 = vsel %vm1644, %v3464, 0
      %v3519 = vsel %vm1644, %v3469, 0
      %3521 = vmatprep.subr.bf16.mxu0 0
      %3522 = vmatpush1.bf16.xpose.msra.mxu0 %v3519
      %3523 = vmatprep.subr.bf16.mxu0 0
      %3524 = vmatpush1.bf16.xpose.msra.mxu0 0
      %3525 = vmatprep.subr.bf16.mxu0 0
      %3526 = vmatpush1.bf16.xpose.msra.mxu0 0
      %3527 = vmatprep.subr.bf16.mxu0 0
      %3528 = vmatpush1.bf16.xpose.msra.mxu0 0
      %3529 = vmatprep.subr.bf16.mxu0 0
      %3530 = vmatpush1.bf16.xpose.msra.mxu0 0
      %3531 = vmatprep.subr.bf16.mxu0 0
      %3532 = vmatpush1.bf16.xpose.msra.mxu0 0
      %3533 = vmatprep.subr.bf16.mxu0 0
      %3534 = vmatpush1.bf16.xpose.msra.mxu0 0
      %3535 = vmatprep.subr.bf16.mxu0 0
      %3536 = vmatpush1.bf16.xpose.msra.mxu0 0
      %3537 = vmatprep.subr.bf16.mxu0 0
      %3538 = vmatpush1.bf16.xpose.msra.mxu0 0
      %3539 = vmatprep.subr.bf16.mxu0 0
      %3540 = vmatpush1.bf16.xpose.msra.mxu0 0
      %3541 = vmatprep.subr.bf16.mxu0 0
      %3542 = vmatpush1.bf16.xpose.msra.mxu0 0
      %3543 = vmatprep.subr.bf16.mxu0 0
      %3544 = vmatpush1.bf16.xpose.msra.mxu0 0
      %3545 = vmatprep.subr.bf16.mxu0 0
      %3546 = vmatpush1.bf16.xpose.msra.mxu0 0
      %3547 = vmatprep.subr.bf16.mxu0 0
      %3548 = vmatpush1.bf16.xpose.msra.mxu0 0
      %3549 = vmatprep.subr.bf16.mxu0 0
      %3550 = vmatpush1.bf16.xpose.msra.mxu0 0
      %3551 = vmatprep.subr.bf16.mxu0 0
      %3552 = vmatpush1.bf16.xpose.msra.mxu0 0
      %3553 = vmatprep.mubr.bf16.mxu0 0
      %3554 = vmatmul.mubr.bf16.gmra.mrb[0].mxu0 %v3471
      %v3555 = vpop.f32.mrb[0].mxu0
      %v3556 = vadd.f32 0.0, %v3555
      %v3557 = vpop.f32.mrb[0].mxu0
      %v3558 = vpop.f32.mrb[0].mxu0
      %v3559 = vadd.f32 0.0, %v3558
      %v3560 = vpop.f32.mrb[0].mxu0
      %3561 = vmatprep.mubr.bf16.mxu0 0
      %3562 = vmatmul.mubr.bf16.gmra.mrb[0].mxu0 %v3474
      %v3563 = vpop.f32.mrb[0].mxu0
      %v3564 = vadd.f32 0.0, %v3563
      %v3565 = vpop.f32.mrb[0].mxu0
      %v3566 = vpop.f32.mrb[0].mxu0
      %v3567 = vadd.f32 0.0, %v3566
      %v3568 = vpop.f32.mrb[0].mxu0
      %3569 = vmatprep.mubr.bf16.mxu0 0
      %3570 = vmatmul.mubr.bf16.gmra.mrb[0].mxu0 %v3477
      %v3571 = vpop.f32.mrb[0].mxu0
      %v3572 = vadd.f32 0.0, %v3571
      %v3573 = vpop.f32.mrb[0].mxu0
      %v3574 = vpop.f32.mrb[0].mxu0
      %v3575 = vadd.f32 0.0, %v3574
      %v3576 = vpop.f32.mrb[0].mxu0
      %3577 = vmatprep.mubr.bf16.mxu0 0
      %3578 = vmatmul.mubr.bf16.gmra.mrb[0].mxu0 %v3480
      %v3579 = vpop.f32.mrb[0].mxu0
      %v3580 = vadd.f32 0.0, %v3579
      %v3581 = vpop.f32.mrb[0].mxu0
      %v3582 = vpop.f32.mrb[0].mxu0
      %v3583 = vadd.f32 0.0, %v3582
      %v3584 = vpop.f32.mrb[0].mxu0
      %3585 = vmatprep.mubr.bf16.mxu0 0
      %3586 = vmatmul.mubr.bf16.gmra.mrb[0].mxu0 %v3483
      %v3587 = vpop.f32.mrb[0].mxu0
      %v3588 = vadd.f32 0.0, %v3587
      %v3589 = vpop.f32.mrb[0].mxu0
      %v3590 = vpop.f32.mrb[0].mxu0
      %v3591 = vadd.f32 0.0, %v3590
      %v3592 = vpop.f32.mrb[0].mxu0
      %3593 = vmatprep.mubr.bf16.mxu0 0
      %3594 = vmatmul.mubr.bf16.gmra.mrb[0].mxu0 %v3486
      %v3595 = vpop.f32.mrb[0].mxu0
      %v3596 = vadd.f32 0.0, %v3595
      %v3597 = vpop.f32.mrb[0].mxu0
      %v3598 = vpop.f32.mrb[0].mxu0
      %v3599 = vadd.f32 0.0, %v3598
      %v3600 = vpop.f32.mrb[0].mxu0
      %3601 = vmatprep.mubr.bf16.mxu0 0
      %3602 = vmatmul.mubr.bf16.gmra.mrb[0].mxu0 %v3489
      %v3603 = vpop.f32.mrb[0].mxu0
      %v3604 = vadd.f32 0.0, %v3603
      %v3605 = vpop.f32.mrb[0].mxu0
      %v3606 = vpop.f32.mrb[0].mxu0
      %v3607 = vadd.f32 0.0, %v3606
      %v3608 = vpop.f32.mrb[0].mxu0
      %3609 = vmatprep.mubr.bf16.mxu0 0
      %3610 = vmatmul.mubr.bf16.gmra.mrb[0].mxu0 %v3492
      %v3611 = vpop.f32.mrb[0].mxu0
      %v3612 = vadd.f32 0.0, %v3611
      %v3613 = vpop.f32.mrb[0].mxu0
      %v3614 = vpop.f32.mrb[0].mxu0
      %v3615 = vadd.f32 0.0, %v3614
      %v3616 = vpop.f32.mrb[0].mxu0
      %3617 = vmatprep.mubr.bf16.mxu0 0
      %3618 = vmatmul.mubr.bf16.gmra.mrb[0].mxu0 %v3495
      %v3619 = vpop.f32.mrb[0].mxu0
      %v3620 = vadd.f32 0.0, %v3619
      %v3621 = vpop.f32.mrb[0].mxu0
      %v3622 = vpop.f32.mrb[0].mxu0
      %v3623 = vadd.f32 0.0, %v3622
      %v3624 = vpop.f32.mrb[0].mxu0
      %3625 = vmatprep.mubr.bf16.mxu0 0
      %3626 = vmatmul.mubr.bf16.gmra.mrb[0].mxu0 %v3498
      %v3627 = vpop.f32.mrb[0].mxu0
      %v3628 = vadd.f32 0.0, %v3627
      %v3629 = vpop.f32.mrb[0].mxu0
      %v3630 = vpop.f32.mrb[0].mxu0
      %v3631 = vadd.f32 0.0, %v3630
      %v3632 = vpop.f32.mrb[0].mxu0
      %3633 = vmatprep.mubr.bf16.mxu0 0
      %3634 = vmatmul.mubr.bf16.gmra.mrb[0].mxu0 %v3501
      %v3635 = vpop.f32.mrb[0].mxu0
      %v3636 = vadd.f32 0.0, %v3635
      %v3637 = vpop.f32.mrb[0].mxu0
      %v3638 = vpop.f32.mrb[0].mxu0
      %v3639 = vadd.f32 0.0, %v3638
      %v3640 = vpop.f32.mrb[0].mxu0
      %3641 = vmatprep.mubr.bf16.mxu0 0
      %3642 = vmatmul.mubr.bf16.gmra.mrb[0].mxu0 %v3504
      %v3643 = vpop.f32.mrb[0].mxu0
      %v3644 = vadd.f32 0.0, %v3643
      %v3645 = vpop.f32.mrb[0].mxu0
      %v3646 = vpop.f32.mrb[0].mxu0
      %v3647 = vadd.f32 0.0, %v3646
      %v3648 = vpop.f32.mrb[0].mxu0
      %3649 = vmatprep.mubr.bf16.mxu0 0
      %3650 = vmatmul.mubr.bf16.gmra.mrb[0].mxu0 %v3507
      %v3651 = vpop.f32.mrb[0].mxu0
      %v3652 = vadd.f32 0.0, %v3651
      %v3653 = vpop.f32.mrb[0].mxu0
      %v3654 = vpop.f32.mrb[0].mxu0
      %v3655 = vadd.f32 0.0, %v3654
      %v3656 = vpop.f32.mrb[0].mxu0
      %3657 = vmatprep.mubr.bf16.mxu0 0
      %3658 = vmatmul.mubr.bf16.gmra.mrb[0].mxu0 %v3510
      %v3659 = vpop.f32.mrb[0].mxu0
      %v3660 = vadd.f32 0.0, %v3659
      %v3661 = vpop.f32.mrb[0].mxu0
      %v3662 = vpop.f32.mrb[0].mxu0
      %v3663 = vadd.f32 0.0, %v3662
      %v3664 = vpop.f32.mrb[0].mxu0
      %3665 = vmatprep.mubr.bf16.mxu0 0
      %3666 = vmatmul.mubr.bf16.gmra.mrb[0].mxu0 %v3513
      %v3667 = vpop.f32.mrb[0].mxu0
      %v3668 = vadd.f32 0.0, %v3667
      %v3669 = vpop.f32.mrb[0].mxu0
      %v3670 = vpop.f32.mrb[0].mxu0
      %v3671 = vadd.f32 0.0, %v3670
      %v3672 = vpop.f32.mrb[0].mxu0
      %3673 = vmatprep.mubr.bf16.mxu0 0
      %3674 = vmatmul.mubr.bf16.gmra.mrb[0].mxu0 %v3516
      %v3675 = vpop.f32.mrb[0].mxu0
      %v3676 = vadd.f32 0.0, %v3675
      %v3677 = vpop.f32.mrb[0].mxu0
      %v3678 = vpop.f32.mrb[0].mxu0
      %v3679 = vadd.f32 0.0, %v3678
      %v3680 = vpop.f32.mrb[0].mxu0
      %3681 = vdwg.mxu0
      %v3682 = vadd.f32 %v2950, %v3556
      %v3683 = vadd.f32 %v2951, %v3559
      %v3684 = vadd.f32 %v2952, %v3564
      %v3685 = vadd.f32 %v2953, %v3567
      %v3686 = vadd.f32 %v2954, %v3572
      %v3687 = vadd.f32 %v2955, %v3575
      %v3688 = vadd.f32 %v2956, %v3580
      %v3689 = vadd.f32 %v2957, %v3583
      %v3690 = vadd.f32 %v2958, %v3588
      %v3691 = vadd.f32 %v2959, %v3591
      %v3692 = vadd.f32 %v2960, %v3596
      %v3693 = vadd.f32 %v2961, %v3599
      %v3694 = vadd.f32 %v2962, %v3604
      %v3695 = vadd.f32 %v2963, %v3607
      %v3696 = vadd.f32 %v2964, %v3612
      %v3697 = vadd.f32 %v2965, %v3615
      %v3698 = vadd.f32 %v2966, %v3620
      %v3699 = vadd.f32 %v2967, %v3623
      %v3700 = vadd.f32 %v2968, %v3628
      %v3701 = vadd.f32 %v2969, %v3631
      %v3702 = vadd.f32 %v2970, %v3636
      %v3703 = vadd.f32 %v2971, %v3639
      %v3704 = vadd.f32 %v2972, %v3644
      %v3705 = vadd.f32 %v2973, %v3647
      %v3706 = vadd.f32 %v2974, %v3652
      %v3707 = vadd.f32 %v2975, %v3655
      %v3708 = vadd.f32 %v2976, %v3660
      %v3709 = vadd.f32 %v2977, %v3663
      %v3710 = vadd.f32 %v2978, %v3668
      %v3711 = vadd.f32 %v2979, %v3671
      %v3712 = vadd.f32 %v2980, %v3676
      %v3713 = vadd.f32 %v2981, %v3679
      %v3714 = vld [vmem:[%s2617] sm:$0xe]
      %v3715 = vld [vmem:[%s2617 + $0xc] sm:$0xe]
      %v3716 = vld [vmem:[%s2617 + $0x18] sm:$0xe]
      %v3717 = vld [vmem:[%s2617 + $0x24] sm:$0xe]
      %v3718 = vld [vmem:[%s2617 + $0x30] sm:$0xe]
      %v3719 = vld [vmem:[%s2617 + $0x3c] sm:$0xe]
      %v3720 = vld [vmem:[%s2617 + $0x48] sm:$0xe]
      %v3721 = vld [vmem:[%s2617 + $0x54] sm:$0xe]
      %v3722 = vld [vmem:[%s2617 + $0x60] sm:$0xe]
      %v3723 = vld [vmem:[%s2617 + $0x6c] sm:$0xe]
      %v3724 = vld [vmem:[%s2617 + $0x78] sm:$0xe]
      %v3725 = vld [vmem:[%s2617 + $0x84] sm:$0xe]
      %v3726 = vld [vmem:[%s2617 + $0x90] sm:$0xe]
      %v3727 = vld [vmem:[%s2617 + $0x9c] sm:$0xe]
      %v3728 = vld [vmem:[%s2617 + $0xa8] sm:$0xe]
      %v3729 = vld [vmem:[%s2617 + $0xb4] sm:$0xe]
      %v3778 = vrot.slane %v3714, 5
      %v3779 = vrot.slane %v3778, 4
      %v3780 = vrot.slane %v2983, 5
      %v3781 = vsel %vm2204, %v3779, %v3780
      %v3782 = vrot.slane %v3780, 4
      %v3783 = vrot.slane %v2984, 5
      %v3784 = vsel %vm2204, %v3782, %v3783
      %v3785 = vrot.slane %v3715, 5
      %v3786 = vrot.slane %v3785, 4
      %v3787 = vrot.slane %v2986, 5
      %v3788 = vsel %vm2204, %v3786, %v3787
      %v3789 = vrot.slane %v3787, 4
      %v3790 = vrot.slane %v2987, 5
      %v3791 = vsel %vm2204, %v3789, %v3790
      %v3792 = vrot.slane %v3716, 5
      %v3793 = vrot.slane %v3792, 4
      %v3794 = vrot.slane %v2989, 5
      %v3795 = vsel %vm2204, %v3793, %v3794
      %v3796 = vrot.slane %v3794, 4
      %v3797 = vrot.slane %v2990, 5
      %v3798 = vsel %vm2204, %v3796, %v3797
      %v3799 = vrot.slane %v3717, 5
      %v3800 = vrot.slane %v3799, 4
      %v3801 = vrot.slane %v2992, 5
      %v3802 = vsel %vm2204, %v3800, %v3801
      %v3803 = vrot.slane %v3801, 4
      %v3804 = vrot.slane %v2993, 5
      %v3805 = vsel %vm2204, %v3803, %v3804
      %v3806 = vrot.slane %v3718, 5
      %v3807 = vrot.slane %v3806, 4
      %v3808 = vrot.slane %v2995, 5
      %v3809 = vsel %vm2204, %v3807, %v3808
      %v3810 = vrot.slane %v3808, 4
      %v3811 = vrot.slane %v2996, 5
      %v3812 = vsel %vm2204, %v3810, %v3811
      %v3813 = vrot.slane %v3719, 5
      %v3814 = vrot.slane %v3813, 4
      %v3815 = vrot.slane %v2998, 5
      %v3816 = vsel %vm2204, %v3814, %v3815
      %v3817 = vrot.slane %v3815, 4
      %v3818 = vrot.slane %v2999, 5
      %v3819 = vsel %vm2204, %v3817, %v3818
      %v3820 = vrot.slane %v3720, 5
      %v3821 = vrot.slane %v3820, 4
      %v3822 = vrot.slane %v3001, 5
      %v3823 = vsel %vm2204, %v3821, %v3822
      %v3824 = vrot.slane %v3822, 4
      %v3825 = vrot.slane %v3002, 5
      %v3826 = vsel %vm2204, %v3824, %v3825
      %v3827 = vrot.slane %v3721, 5
      %v3828 = vrot.slane %v3827, 4
      %v3829 = vrot.slane %v3004, 5
      %v3830 = vsel %vm2204, %v3828, %v3829
      %v3831 = vrot.slane %v3829, 4
      %v3832 = vrot.slane %v3005, 5
      %v3833 = vsel %vm2204, %v3831, %v3832
      %v3834 = vrot.slane %v3722, 5
      %v3835 = vrot.slane %v3834, 4
      %v3836 = vrot.slane %v3007, 5
      %v3837 = vsel %vm2204, %v3835, %v3836
      %v3838 = vrot.slane %v3836, 4
      %v3839 = vrot.slane %v3008, 5
      %v3840 = vsel %vm2204, %v3838, %v3839
      %v3841 = vrot.slane %v3723, 5
      %v3842 = vrot.slane %v3841, 4
      %v3843 = vrot.slane %v3010, 5
      %v3844 = vsel %vm2204, %v3842, %v3843
      %v3845 = vrot.slane %v3843, 4
      %v3846 = vrot.slane %v3011, 5
      %v3847 = vsel %vm2204, %v3845, %v3846
      %v3848 = vrot.slane %v3724, 5
      %v3849 = vrot.slane %v3848, 4
      %v3850 = vrot.slane %v3013, 5
      %v3851 = vsel %vm2204, %v3849, %v3850
      %v3852 = vrot.slane %v3850, 4
      %v3853 = vrot.slane %v3014, 5
      %v3854 = vsel %vm2204, %v3852, %v3853
      %v3855 = vrot.slane %v3725, 5
      %v3856 = vrot.slane %v3855, 4
      %v3857 = vrot.slane %v3016, 5
      %v3858 = vsel %vm2204, %v3856, %v3857
      %v3859 = vrot.slane %v3857, 4
      %v3860 = vrot.slane %v3017, 5
      %v3861 = vsel %vm2204, %v3859, %v3860
      %v3862 = vrot.slane %v3726, 5
      %v3863 = vrot.slane %v3862, 4
      %v3864 = vrot.slane %v3019, 5
      %v3865 = vsel %vm2204, %v3863, %v3864
      %v3866 = vrot.slane %v3864, 4
      %v3867 = vrot.slane %v3020, 5
      %v3868 = vsel %vm2204, %v3866, %v3867
      %v3869 = vrot.slane %v3727, 5
      %v3870 = vrot.slane %v3869, 4
      %v3871 = vrot.slane %v3022, 5
      %v3872 = vsel %vm2204, %v3870, %v3871
      %v3873 = vrot.slane %v3871, 4
      %v3874 = vrot.slane %v3023, 5
      %v3875 = vsel %vm2204, %v3873, %v3874
      %v3876 = vrot.slane %v3728, 5
      %v3877 = vrot.slane %v3876, 4
      %v3878 = vrot.slane %v3025, 5
      %v3879 = vsel %vm2204, %v3877, %v3878
      %v3880 = vrot.slane %v3878, 4
      %v3881 = vrot.slane %v3026, 5
      %v3882 = vsel %vm2204, %v3880, %v3881
      %v3883 = vrot.slane %v3729, 5
      %v3884 = vrot.slane %v3883, 4
      %v3885 = vrot.slane %v3028, 5
      %v3886 = vsel %vm2204, %v3884, %v3885
      %v3887 = vrot.slane %v3885, 4
      %v3888 = vrot.slane %v3029, 5
      %v3889 = vsel %vm2204, %v3887, %v3888
      %s3890 = scalar_lea.vmem %s295, 40
      %v3891 = vld [vmem:[%s3890] sm:$0xf]
      %v3892 = vld [vmem:[%s3890 + $0x4] sm:$0xf]
      %v3893 = vunpack.c.l.b16 %v3781
      %v3894 = vunpack.c.l.b16 %v3784
      %v3895 = vunpack.c.l.b16 %v3788
      %v3896 = vunpack.c.l.b16 %v3791
      %v3897 = vunpack.c.l.b16 %v3795
      %v3898 = vunpack.c.l.b16 %v3798
      %v3899 = vunpack.c.l.b16 %v3802
      %v3900 = vunpack.c.l.b16 %v3805
      %v3901 = vunpack.c.l.b16 %v3809
      %v3902 = vunpack.c.l.b16 %v3812
      %v3903 = vunpack.c.l.b16 %v3816
      %v3904 = vunpack.c.l.b16 %v3819
      %v3905 = vunpack.c.l.b16 %v3823
      %v3906 = vunpack.c.l.b16 %v3826
      %v3907 = vunpack.c.l.b16 %v3830
      %v3908 = vunpack.c.l.b16 %v3833
      %v3909 = vunpack.c.l.b16 %v3837
      %v3910 = vunpack.c.l.b16 %v3840
      %v3911 = vunpack.c.l.b16 %v3844
      %v3912 = vunpack.c.l.b16 %v3847
      %v3913 = vunpack.c.l.b16 %v3851
      %v3914 = vunpack.c.l.b16 %v3854
      %v3915 = vunpack.c.l.b16 %v3858
      %v3916 = vunpack.c.l.b16 %v3861
      %v3917 = vunpack.c.l.b16 %v3865
      %v3918 = vunpack.c.l.b16 %v3868
      %v3919 = vunpack.c.l.b16 %v3872
      %v3920 = vunpack.c.l.b16 %v3875
      %v3921 = vunpack.c.l.b16 %v3879
      %v3922 = vunpack.c.l.b16 %v3882
      %v3923 = vunpack.c.l.b16 %v3886
      %v3924 = vunpack.c.l.b16 %v3889
      %v3925 = vpack.c.b16 %v3894, %v3893
      %v3926 = vpack.c.b16 %v3896, %v3895
      %v3927 = vpack.c.b16 %v3898, %v3897
      %v3928 = vpack.c.b16 %v3900, %v3899
      %v3929 = vpack.c.b16 %v3902, %v3901
      %v3930 = vpack.c.b16 %v3904, %v3903
      %v3931 = vpack.c.b16 %v3906, %v3905
      %v3932 = vpack.c.b16 %v3908, %v3907
      %v3933 = vpack.c.b16 %v3910, %v3909
      %v3934 = vpack.c.b16 %v3912, %v3911
      %v3935 = vpack.c.b16 %v3914, %v3913
      %v3936 = vpack.c.b16 %v3916, %v3915
      %v3937 = vpack.c.b16 %v3918, %v3917
      %v3938 = vpack.c.b16 %v3920, %v3919
      %v3939 = vpack.c.b16 %v3922, %v3921
      %v3940 = vpack.c.b16 %v3924, %v3923
      %v3943 = vunpack.c.l.b16 %v3891
      %v3944 = vunpack.c.l.b16 %v3892
      %v3945 = vpack.c.b16 %v3944, %v3943
      %v3947 = vsel %vm1644, %v3925, 0
      %v3950 = vsel %vm1644, %v3926, 0
      %v3953 = vsel %vm1644, %v3927, 0
      %v3956 = vsel %vm1644, %v3928, 0
      %v3959 = vsel %vm1644, %v3929, 0
      %v3962 = vsel %vm1644, %v3930, 0
      %v3965 = vsel %vm1644, %v3931, 0
      %v3968 = vsel %vm1644, %v3932, 0
      %v3971 = vsel %vm1644, %v3933, 0
      %v3974 = vsel %vm1644, %v3934, 0
      %v3977 = vsel %vm1644, %v3935, 0
      %v3980 = vsel %vm1644, %v3936, 0
      %v3983 = vsel %vm1644, %v3937, 0
      %v3986 = vsel %vm1644, %v3938, 0
      %v3989 = vsel %vm1644, %v3939, 0
      %v3992 = vsel %vm1644, %v3940, 0
      %v3995 = vsel %vm1644, %v3945, 0
      %3997 = vmatprep.subr.bf16.mxu0 0
      %3998 = vmatpush1.bf16.xpose.msra.mxu0 %v3995
      %3999 = vmatprep.subr.bf16.mxu0 0
      %4000 = vmatpush1.bf16.xpose.msra.mxu0 0
      %4001 = vmatprep.subr.bf16.mxu0 0
      %4002 = vmatpush1.bf16.xpose.msra.mxu0 0
      %4003 = vmatprep.subr.bf16.mxu0 0
      %4004 = vmatpush1.bf16.xpose.msra.mxu0 0
      %4005 = vmatprep.subr.bf16.mxu0 0
      %4006 = vmatpush1.bf16.xpose.msra.mxu0 0
      %4007 = vmatprep.subr.bf16.mxu0 0
      %4008 = vmatpush1.bf16.xpose.msra.mxu0 0
      %4009 = vmatprep.subr.bf16.mxu0 0
      %4010 = vmatpush1.bf16.xpose.msra.mxu0 0
      %4011 = vmatprep.subr.bf16.mxu0 0
      %4012 = vmatpush1.bf16.xpose.msra.mxu0 0
      %4013 = vmatprep.subr.bf16.mxu0 0
      %4014 = vmatpush1.bf16.xpose.msra.mxu0 0
      %4015 = vmatprep.subr.bf16.mxu0 0
      %4016 = vmatpush1.bf16.xpose.msra.mxu0 0
      %4017 = vmatprep.subr.bf16.mxu0 0
      %4018 = vmatpush1.bf16.xpose.msra.mxu0 0
      %4019 = vmatprep.subr.bf16.mxu0 0
      %4020 = vmatpush1.bf16.xpose.msra.mxu0 0
      %4021 = vmatprep.subr.bf16.mxu0 0
      %4022 = vmatpush1.bf16.xpose.msra.mxu0 0
      %4023 = vmatprep.subr.bf16.mxu0 0
      %4024 = vmatpush1.bf16.xpose.msra.mxu0 0
      %4025 = vmatprep.subr.bf16.mxu0 0
      %4026 = vmatpush1.bf16.xpose.msra.mxu0 0
      %4027 = vmatprep.subr.bf16.mxu0 0
      %4028 = vmatpush1.bf16.xpose.msra.mxu0 0
      %4029 = vmatprep.mubr.bf16.mxu0 0
      %4030 = vmatmul.mubr.bf16.gmra.mrb[0].mxu0 %v3947
      %v4031 = vpop.f32.mrb[0].mxu0
      %v4032 = vadd.f32 0.0, %v4031
      %v4033 = vpop.f32.mrb[0].mxu0
      %v4034 = vpop.f32.mrb[0].mxu0
      %v4035 = vadd.f32 0.0, %v4034
      %v4036 = vpop.f32.mrb[0].mxu0
      %4037 = vmatprep.mubr.bf16.mxu0 0
      %4038 = vmatmul.mubr.bf16.gmra.mrb[0].mxu0 %v3950
      %v4039 = vpop.f32.mrb[0].mxu0
      %v4040 = vadd.f32 0.0, %v4039
      %v4041 = vpop.f32.mrb[0].mxu0
      %v4042 = vpop.f32.mrb[0].mxu0
      %v4043 = vadd.f32 0.0, %v4042
      %v4044 = vpop.f32.mrb[0].mxu0
      %4045 = vmatprep.mubr.bf16.mxu0 0
      %4046 = vmatmul.mubr.bf16.gmra.mrb[0].mxu0 %v3953
      %v4047 = vpop.f32.mrb[0].mxu0
      %v4048 = vadd.f32 0.0, %v4047
      %v4049 = vpop.f32.mrb[0].mxu0
      %v4050 = vpop.f32.mrb[0].mxu0
      %v4051 = vadd.f32 0.0, %v4050
      %v4052 = vpop.f32.mrb[0].mxu0
      %4053 = vmatprep.mubr.bf16.mxu0 0
      %4054 = vmatmul.mubr.bf16.gmra.mrb[0].mxu0 %v3956
      %v4055 = vpop.f32.mrb[0].mxu0
      %v4056 = vadd.f32 0.0, %v4055
      %v4057 = vpop.f32.mrb[0].mxu0
      %v4058 = vpop.f32.mrb[0].mxu0
      %v4059 = vadd.f32 0.0, %v4058
      %v4060 = vpop.f32.mrb[0].mxu0
      %4061 = vmatprep.mubr.bf16.mxu0 0
      %4062 = vmatmul.mubr.bf16.gmra.mrb[0].mxu0 %v3959
      %v4063 = vpop.f32.mrb[0].mxu0
      %v4064 = vadd.f32 0.0, %v4063
      %v4065 = vpop.f32.mrb[0].mxu0
      %v4066 = vpop.f32.mrb[0].mxu0
      %v4067 = vadd.f32 0.0, %v4066
      %v4068 = vpop.f32.mrb[0].mxu0
      %4069 = vmatprep.mubr.bf16.mxu0 0
      %4070 = vmatmul.mubr.bf16.gmra.mrb[0].mxu0 %v3962
      %v4071 = vpop.f32.mrb[0].mxu0
      %v4072 = vadd.f32 0.0, %v4071
      %v4073 = vpop.f32.mrb[0].mxu0
      %v4074 = vpop.f32.mrb[0].mxu0
      %v4075 = vadd.f32 0.0, %v4074
      %v4076 = vpop.f32.mrb[0].mxu0
      %4077 = vmatprep.mubr.bf16.mxu0 0
      %4078 = vmatmul.mubr.bf16.gmra.mrb[0].mxu0 %v3965
      %v4079 = vpop.f32.mrb[0].mxu0
      %v4080 = vadd.f32 0.0, %v4079
      %v4081 = vpop.f32.mrb[0].mxu0
      %v4082 = vpop.f32.mrb[0].mxu0
      %v4083 = vadd.f32 0.0, %v4082
      %v4084 = vpop.f32.mrb[0].mxu0
      %4085 = vmatprep.mubr.bf16.mxu0 0
      %4086 = vmatmul.mubr.bf16.gmra.mrb[0].mxu0 %v3968
      %v4087 = vpop.f32.mrb[0].mxu0
      %v4088 = vadd.f32 0.0, %v4087
      %v4089 = vpop.f32.mrb[0].mxu0
      %v4090 = vpop.f32.mrb[0].mxu0
      %v4091 = vadd.f32 0.0, %v4090
      %v4092 = vpop.f32.mrb[0].mxu0
      %4093 = vmatprep.mubr.bf16.mxu0 0
      %4094 = vmatmul.mubr.bf16.gmra.mrb[0].mxu0 %v3971
      %v4095 = vpop.f32.mrb[0].mxu0
      %v4096 = vadd.f32 0.0, %v4095
      %v4097 = vpop.f32.mrb[0].mxu0
      %v4098 = vpop.f32.mrb[0].mxu0
      %v4099 = vadd.f32 0.0, %v4098
      %v4100 = vpop.f32.mrb[0].mxu0
      %4101 = vmatprep.mubr.bf16.mxu0 0
      %4102 = vmatmul.mubr.bf16.gmra.mrb[0].mxu0 %v3974
      %v4103 = vpop.f32.mrb[0].mxu0
      %v4104 = vadd.f32 0.0, %v4103
      %v4105 = vpop.f32.mrb[0].mxu0
      %v4106 = vpop.f32.mrb[0].mxu0
      %v4107 = vadd.f32 0.0, %v4106
      %v4108 = vpop.f32.mrb[0].mxu0
      %4109 = vmatprep.mubr.bf16.mxu0 0
      %4110 = vmatmul.mubr.bf16.gmra.mrb[0].mxu0 %v3977
      %v4111 = vpop.f32.mrb[0].mxu0
      %v4112 = vadd.f32 0.0, %v4111
      %v4113 = vpop.f32.mrb[0].mxu0
      %v4114 = vpop.f32.mrb[0].mxu0
      %v4115 = vadd.f32 0.0, %v4114
      %v4116 = vpop.f32.mrb[0].mxu0
      %4117 = vmatprep.mubr.bf16.mxu0 0
      %4118 = vmatmul.mubr.bf16.gmra.mrb[0].mxu0 %v3980
      %v4119 = vpop.f32.mrb[0].mxu0
      %v4120 = vadd.f32 0.0, %v4119
      %v4121 = vpop.f32.mrb[0].mxu0
      %v4122 = vpop.f32.mrb[0].mxu0
      %v4123 = vadd.f32 0.0, %v4122
      %v4124 = vpop.f32.mrb[0].mxu0
      %4125 = vmatprep.mubr.bf16.mxu0 0
      %4126 = vmatmul.mubr.bf16.gmra.mrb[0].mxu0 %v3983
      %v4127 = vpop.f32.mrb[0].mxu0
      %v4128 = vadd.f32 0.0, %v4127
      %v4129 = vpop.f32.mrb[0].mxu0
      %v4130 = vpop.f32.mrb[0].mxu0
      %v4131 = vadd.f32 0.0, %v4130
      %v4132 = vpop.f32.mrb[0].mxu0
      %4133 = vmatprep.mubr.bf16.mxu0 0
      %4134 = vmatmul.mubr.bf16.gmra.mrb[0].mxu0 %v3986
      %v4135 = vpop.f32.mrb[0].mxu0
      %v4136 = vadd.f32 0.0, %v4135
      %v4137 = vpop.f32.mrb[0].mxu0
      %v4138 = vpop.f32.mrb[0].mxu0
      %v4139 = vadd.f32 0.0, %v4138
      %v4140 = vpop.f32.mrb[0].mxu0
      %4141 = vmatprep.mubr.bf16.mxu0 0
      %4142 = vmatmul.mubr.bf16.gmra.mrb[0].mxu0 %v3989
      %v4143 = vpop.f32.mrb[0].mxu0
      %v4144 = vadd.f32 0.0, %v4143
      %v4145 = vpop.f32.mrb[0].mxu0
      %v4146 = vpop.f32.mrb[0].mxu0
      %v4147 = vadd.f32 0.0, %v4146
      %v4148 = vpop.f32.mrb[0].mxu0
      %4149 = vmatprep.mubr.bf16.mxu0 0
      %4150 = vmatmul.mubr.bf16.gmra.mrb[0].mxu0 %v3992
      %v4151 = vpop.f32.mrb[0].mxu0
      %v4152 = vadd.f32 0.0, %v4151
      %v4153 = vpop.f32.mrb[0].mxu0
      %v4154 = vpop.f32.mrb[0].mxu0
      %v4155 = vadd.f32 0.0, %v4154
      %v4156 = vpop.f32.mrb[0].mxu0
      %4157 = vdwg.mxu0
      %v4158 = vadd.f32 %v3682, %v4032
      %v4159 = vadd.f32 %v3683, %v4035
      %v4160 = vadd.f32 %v3684, %v4040
      %v4161 = vadd.f32 %v3685, %v4043
      %v4162 = vadd.f32 %v3686, %v4048
      %v4163 = vadd.f32 %v3687, %v4051
      %v4164 = vadd.f32 %v3688, %v4056
      %v4165 = vadd.f32 %v3689, %v4059
      %v4166 = vadd.f32 %v3690, %v4064
      %v4167 = vadd.f32 %v3691, %v4067
      %v4168 = vadd.f32 %v3692, %v4072
      %v4169 = vadd.f32 %v3693, %v4075
      %v4170 = vadd.f32 %v3694, %v4080
      %v4171 = vadd.f32 %v3695, %v4083
      %v4172 = vadd.f32 %v3696, %v4088
      %v4173 = vadd.f32 %v3697, %v4091
      %v4174 = vadd.f32 %v3698, %v4096
      %v4175 = vadd.f32 %v3699, %v4099
      %v4176 = vadd.f32 %v3700, %v4104
      %v4177 = vadd.f32 %v3701, %v4107
      %v4178 = vadd.f32 %v3702, %v4112
      %v4179 = vadd.f32 %v3703, %v4115
      %v4180 = vadd.f32 %v3704, %v4120
      %v4181 = vadd.f32 %v3705, %v4123
      %v4182 = vadd.f32 %v3706, %v4128
      %v4183 = vadd.f32 %v3707, %v4131
      %v4184 = vadd.f32 %v3708, %v4136
      %v4185 = vadd.f32 %v3709, %v4139
      %v4186 = vadd.f32 %v3710, %v4144
      %v4187 = vadd.f32 %v3711, %v4147
      %v4188 = vadd.f32 %v3712, %v4152
      %v4189 = vadd.f32 %v3713, %v4155
      %s4190 = scalar_lea.vmem [#allocation2], 24
      %v4191 = vld [vmem:[%s4190] sm:$0xf]
      %v4192 = vld [vmem:[%s4190 + $0x4] sm:$0xf]
      %v4193 = vld [vmem:[%s4190 + $0xc] sm:$0xf]
      %v4194 = vld [vmem:[%s4190 + $0x10] sm:$0xf]
      %v4195 = vld [vmem:[%s4190 + $0x18] sm:$0xf]
      %v4196 = vld [vmem:[%s4190 + $0x1c] sm:$0xf]
      %v4197 = vld [vmem:[%s4190 + $0x24] sm:$0xf]
      %v4198 = vld [vmem:[%s4190 + $0x28] sm:$0xf]
      %v4199 = vld [vmem:[%s4190 + $0x30] sm:$0xf]
      %v4200 = vld [vmem:[%s4190 + $0x34] sm:$0xf]
      %v4201 = vld [vmem:[%s4190 + $0x3c] sm:$0xf]
      %v4202 = vld [vmem:[%s4190 + $0x40] sm:$0xf]
      %v4203 = vld [vmem:[%s4190 + $0x48] sm:$0xf]
      %v4204 = vld [vmem:[%s4190 + $0x4c] sm:$0xf]
      %v4205 = vld [vmem:[%s4190 + $0x54] sm:$0xf]
      %v4206 = vld [vmem:[%s4190 + $0x58] sm:$0xf]
      %v4207 = vld [vmem:[%s4190 + $0x60] sm:$0xf]
      %v4208 = vld [vmem:[%s4190 + $0x64] sm:$0xf]
      %v4209 = vld [vmem:[%s4190 + $0x6c] sm:$0xf]
      %v4210 = vld [vmem:[%s4190 + $0x70] sm:$0xf]
      %v4211 = vld [vmem:[%s4190 + $0x78] sm:$0xf]
      %v4212 = vld [vmem:[%s4190 + $0x7c] sm:$0xf]
      %v4213 = vld [vmem:[%s4190 + $0x84] sm:$0xf]
      %v4214 = vld [vmem:[%s4190 + $0x88] sm:$0xf]
      %v4215 = vld [vmem:[%s4190 + $0x90] sm:$0xf]
      %v4216 = vld [vmem:[%s4190 + $0x94] sm:$0xf]
      %v4217 = vld [vmem:[%s4190 + $0x9c] sm:$0xf]
      %v4218 = vld [vmem:[%s4190 + $0xa0] sm:$0xf]
      %v4219 = vld [vmem:[%s4190 + $0xa8] sm:$0xf]
      %v4220 = vld [vmem:[%s4190 + $0xac] sm:$0xf]
      %v4221 = vld [vmem:[%s4190 + $0xb4] sm:$0xf]
      %v4222 = vld [vmem:[%s4190 + $0xb8] sm:$0xf]
      %s4223 = scalar_lea.vmem %s295, 48
      %v4224 = vld [vmem:[%s4223] sm:$0xf]
      %v4225 = vld [vmem:[%s4223 + $0x4] sm:$0xf]
      %v4258 = vunpack.c.l.b16 %v4191
      %v4259 = vunpack.c.l.b16 %v4192
      %v4260 = vunpack.c.l.b16 %v4193
      %v4261 = vunpack.c.l.b16 %v4194
      %v4262 = vunpack.c.l.b16 %v4195
      %v4263 = vunpack.c.l.b16 %v4196
      %v4264 = vunpack.c.l.b16 %v4197
      %v4265 = vunpack.c.l.b16 %v4198
      %v4266 = vunpack.c.l.b16 %v4199
      %v4267 = vunpack.c.l.b16 %v4200
      %v4268 = vunpack.c.l.b16 %v4201
      %v4269 = vunpack.c.l.b16 %v4202
      %v4270 = vunpack.c.l.b16 %v4203
      %v4271 = vunpack.c.l.b16 %v4204
      %v4272 = vunpack.c.l.b16 %v4205
      %v4273 = vunpack.c.l.b16 %v4206
      %v4274 = vunpack.c.l.b16 %v4207
      %v4275 = vunpack.c.l.b16 %v4208
      %v4276 = vunpack.c.l.b16 %v4209
      %v4277 = vunpack.c.l.b16 %v4210
      %v4278 = vunpack.c.l.b16 %v4211
      %v4279 = vunpack.c.l.b16 %v4212
      %v4280 = vunpack.c.l.b16 %v4213
      %v4281 = vunpack.c.l.b16 %v4214
      %v4282 = vunpack.c.l.b16 %v4215
      %v4283 = vunpack.c.l.b16 %v4216
      %v4284 = vunpack.c.l.b16 %v4217
      %v4285 = vunpack.c.l.b16 %v4218
      %v4286 = vunpack.c.l.b16 %v4219
      %v4287 = vunpack.c.l.b16 %v4220
      %v4288 = vunpack.c.l.b16 %v4221
      %v4289 = vunpack.c.l.b16 %v4222
      %v4290 = vpack.c.b16 %v4259, %v4258
      %v4291 = vpack.c.b16 %v4261, %v4260
      %v4292 = vpack.c.b16 %v4263, %v4262
      %v4293 = vpack.c.b16 %v4265, %v4264
      %v4294 = vpack.c.b16 %v4267, %v4266
      %v4295 = vpack.c.b16 %v4269, %v4268
      %v4296 = vpack.c.b16 %v4271, %v4270
      %v4297 = vpack.c.b16 %v4273, %v4272
      %v4298 = vpack.c.b16 %v4275, %v4274
      %v4299 = vpack.c.b16 %v4277, %v4276
      %v4300 = vpack.c.b16 %v4279, %v4278
      %v4301 = vpack.c.b16 %v4281, %v4280
      %v4302 = vpack.c.b16 %v4283, %v4282
      %v4303 = vpack.c.b16 %v4285, %v4284
      %v4304 = vpack.c.b16 %v4287, %v4286
      %v4305 = vpack.c.b16 %v4289, %v4288
      %v4308 = vunpack.c.l.b16 %v4224
      %v4309 = vunpack.c.l.b16 %v4225
      %v4310 = vpack.c.b16 %v4309, %v4308
      %v4312 = vsel %vm1644, %v4290, 0
      %v4315 = vsel %vm1644, %v4291, 0
      %v4318 = vsel %vm1644, %v4292, 0
      %v4321 = vsel %vm1644, %v4293, 0
      %v4324 = vsel %vm1644, %v4294, 0
      %v4327 = vsel %vm1644, %v4295, 0
      %v4330 = vsel %vm1644, %v4296, 0
      %v4333 = vsel %vm1644, %v4297, 0
      %v4336 = vsel %vm1644, %v4298, 0
      %v4339 = vsel %vm1644, %v4299, 0
      %v4342 = vsel %vm1644, %v4300, 0
      %v4345 = vsel %vm1644, %v4301, 0
      %v4348 = vsel %vm1644, %v4302, 0
      %v4351 = vsel %vm1644, %v4303, 0
      %v4354 = vsel %vm1644, %v4304, 0
      %v4357 = vsel %vm1644, %v4305, 0
      %v4360 = vsel %vm1644, %v4310, 0
      %4362 = vmatprep.subr.bf16.mxu0 0
      %4363 = vmatpush1.bf16.xpose.msra.mxu0 %v4360
      %4364 = vmatprep.subr.bf16.mxu0 0
      %4365 = vmatpush1.bf16.xpose.msra.mxu0 0
      %4366 = vmatprep.subr.bf16.mxu0 0
      %4367 = vmatpush1.bf16.xpose.msra.mxu0 0
      %4368 = vmatprep.subr.bf16.mxu0 0
      %4369 = vmatpush1.bf16.xpose.msra.mxu0 0
      %4370 = vmatprep.subr.bf16.mxu0 0
      %4371 = vmatpush1.bf16.xpose.msra.mxu0 0
      %4372 = vmatprep.subr.bf16.mxu0 0
      %4373 = vmatpush1.bf16.xpose.msra.mxu0 0
      %4374 = vmatprep.subr.bf16.mxu0 0
      %4375 = vmatpush1.bf16.xpose.msra.mxu0 0
      %4376 = vmatprep.subr.bf16.mxu0 0
      %4377 = vmatpush1.bf16.xpose.msra.mxu0 0
      %4378 = vmatprep.subr.bf16.mxu0 0
      %4379 = vmatpush1.bf16.xpose.msra.mxu0 0
      %4380 = vmatprep.subr.bf16.mxu0 0
      %4381 = vmatpush1.bf16.xpose.msra.mxu0 0
      %4382 = vmatprep.subr.bf16.mxu0 0
      %4383 = vmatpush1.bf16.xpose.msra.mxu0 0
      %4384 = vmatprep.subr.bf16.mxu0 0
      %4385 = vmatpush1.bf16.xpose.msra.mxu0 0
      %4386 = vmatprep.subr.bf16.mxu0 0
      %4387 = vmatpush1.bf16.xpose.msra.mxu0 0
      %4388 = vmatprep.subr.bf16.mxu0 0
      %4389 = vmatpush1.bf16.xpose.msra.mxu0 0
      %4390 = vmatprep.subr.bf16.mxu0 0
      %4391 = vmatpush1.bf16.xpose.msra.mxu0 0
      %4392 = vmatprep.subr.bf16.mxu0 0
      %4393 = vmatpush1.bf16.xpose.msra.mxu0 0
      %4394 = vmatprep.mubr.bf16.mxu0 0
      %4395 = vmatmul.mubr.bf16.gmra.mrb[0].mxu0 %v4312
      %v4396 = vpop.f32.mrb[0].mxu0
      %v4397 = vadd.f32 0.0, %v4396
      %v4398 = vpop.f32.mrb[0].mxu0
      %v4399 = vpop.f32.mrb[0].mxu0
      %v4400 = vadd.f32 0.0, %v4399
      %v4401 = vpop.f32.mrb[0].mxu0
      %4402 = vmatprep.mubr.bf16.mxu0 0
      %4403 = vmatmul.mubr.bf16.gmra.mrb[0].mxu0 %v4315
      %v4404 = vpop.f32.mrb[0].mxu0
      %v4405 = vadd.f32 0.0, %v4404
      %v4406 = vpop.f32.mrb[0].mxu0
      %v4407 = vpop.f32.mrb[0].mxu0
      %v4408 = vadd.f32 0.0, %v4407
      %v4409 = vpop.f32.mrb[0].mxu0
      %4410 = vmatprep.mubr.bf16.mxu0 0
      %4411 = vmatmul.mubr.bf16.gmra.mrb[0].mxu0 %v4318
      %v4412 = vpop.f32.mrb[0].mxu0
      %v4413 = vadd.f32 0.0, %v4412
      %v4414 = vpop.f32.mrb[0].mxu0
      %v4415 = vpop.f32.mrb[0].mxu0
      %v4416 = vadd.f32 0.0, %v4415
      %v4417 = vpop.f32.mrb[0].mxu0
      %4418 = vmatprep.mubr.bf16.mxu0 0
      %4419 = vmatmul.mubr.bf16.gmra.mrb[0].mxu0 %v4321
      %v4420 = vpop.f32.mrb[0].mxu0
      %v4421 = vadd.f32 0.0, %v4420
      %v4422 = vpop.f32.mrb[0].mxu0
      %v4423 = vpop.f32.mrb[0].mxu0
      %v4424 = vadd.f32 0.0, %v4423
      %v4425 = vpop.f32.mrb[0].mxu0
      %4426 = vmatprep.mubr.bf16.mxu0 0
      %4427 = vmatmul.mubr.bf16.gmra.mrb[0].mxu0 %v4324
      %v4428 = vpop.f32.mrb[0].mxu0
      %v4429 = vadd.f32 0.0, %v4428
      %v4430 = vpop.f32.mrb[0].mxu0
      %v4431 = vpop.f32.mrb[0].mxu0
      %v4432 = vadd.f32 0.0, %v4431
      %v4433 = vpop.f32.mrb[0].mxu0
      %4434 = vmatprep.mubr.bf16.mxu0 0
      %4435 = vmatmul.mubr.bf16.gmra.mrb[0].mxu0 %v4327
      %v4436 = vpop.f32.mrb[0].mxu0
      %v4437 = vadd.f32 0.0, %v4436
      %v4438 = vpop.f32.mrb[0].mxu0
      %v4439 = vpop.f32.mrb[0].mxu0
      %v4440 = vadd.f32 0.0, %v4439
      %v4441 = vpop.f32.mrb[0].mxu0
      %4442 = vmatprep.mubr.bf16.mxu0 0
      %4443 = vmatmul.mubr.bf16.gmra.mrb[0].mxu0 %v4330
      %v4444 = vpop.f32.mrb[0].mxu0
      %v4445 = vadd.f32 0.0, %v4444
      %v4446 = vpop.f32.mrb[0].mxu0
      %v4447 = vpop.f32.mrb[0].mxu0
      %v4448 = vadd.f32 0.0, %v4447
      %v4449 = vpop.f32.mrb[0].mxu0
      %4450 = vmatprep.mubr.bf16.mxu0 0
      %4451 = vmatmul.mubr.bf16.gmra.mrb[0].mxu0 %v4333
      %v4452 = vpop.f32.mrb[0].mxu0
      %v4453 = vadd.f32 0.0, %v4452
      %v4454 = vpop.f32.mrb[0].mxu0
      %v4455 = vpop.f32.mrb[0].mxu0
      %v4456 = vadd.f32 0.0, %v4455
      %v4457 = vpop.f32.mrb[0].mxu0
      %4458 = vmatprep.mubr.bf16.mxu0 0
      %4459 = vmatmul.mubr.bf16.gmra.mrb[0].mxu0 %v4336
      %v4460 = vpop.f32.mrb[0].mxu0
      %v4461 = vadd.f32 0.0, %v4460
      %v4462 = vpop.f32.mrb[0].mxu0
      %v4463 = vpop.f32.mrb[0].mxu0
      %v4464 = vadd.f32 0.0, %v4463
      %v4465 = vpop.f32.mrb[0].mxu0
      %4466 = vmatprep.mubr.bf16.mxu0 0
      %4467 = vmatmul.mubr.bf16.gmra.mrb[0].mxu0 %v4339
      %v4468 = vpop.f32.mrb[0].mxu0
      %v4469 = vadd.f32 0.0, %v4468
      %v4470 = vpop.f32.mrb[0].mxu0
      %v4471 = vpop.f32.mrb[0].mxu0
      %v4472 = vadd.f32 0.0, %v4471
      %v4473 = vpop.f32.mrb[0].mxu0
      %4474 = vmatprep.mubr.bf16.mxu0 0
      %4475 = vmatmul.mubr.bf16.gmra.mrb[0].mxu0 %v4342
      %v4476 = vpop.f32.mrb[0].mxu0
      %v4477 = vadd.f32 0.0, %v4476
      %v4478 = vpop.f32.mrb[0].mxu0
      %v4479 = vpop.f32.mrb[0].mxu0
      %v4480 = vadd.f32 0.0, %v4479
      %v4481 = vpop.f32.mrb[0].mxu0
      %4482 = vmatprep.mubr.bf16.mxu0 0
      %4483 = vmatmul.mubr.bf16.gmra.mrb[0].mxu0 %v4345
      %v4484 = vpop.f32.mrb[0].mxu0
      %v4485 = vadd.f32 0.0, %v4484
      %v4486 = vpop.f32.mrb[0].mxu0
      %v4487 = vpop.f32.mrb[0].mxu0
      %v4488 = vadd.f32 0.0, %v4487
      %v4489 = vpop.f32.mrb[0].mxu0
      %4490 = vmatprep.mubr.bf16.mxu0 0
      %4491 = vmatmul.mubr.bf16.gmra.mrb[0].mxu0 %v4348
      %v4492 = vpop.f32.mrb[0].mxu0
      %v4493 = vadd.f32 0.0, %v4492
      %v4494 = vpop.f32.mrb[0].mxu0
      %v4495 = vpop.f32.mrb[0].mxu0
      %v4496 = vadd.f32 0.0, %v4495
      %v4497 = vpop.f32.mrb[0].mxu0
      %4498 = vmatprep.mubr.bf16.mxu0 0
      %4499 = vmatmul.mubr.bf16.gmra.mrb[0].mxu0 %v4351
      %v4500 = vpop.f32.mrb[0].mxu0
      %v4501 = vadd.f32 0.0, %v4500
      %v4502 = vpop.f32.mrb[0].mxu0
      %v4503 = vpop.f32.mrb[0].mxu0
      %v4504 = vadd.f32 0.0, %v4503
      %v4505 = vpop.f32.mrb[0].mxu0
      %4506 = vmatprep.mubr.bf16.mxu0 0
      %4507 = vmatmul.mubr.bf16.gmra.mrb[0].mxu0 %v4354
      %v4508 = vpop.f32.mrb[0].mxu0
      %v4509 = vadd.f32 0.0, %v4508
      %v4510 = vpop.f32.mrb[0].mxu0
      %v4511 = vpop.f32.mrb[0].mxu0
      %v4512 = vadd.f32 0.0, %v4511
      %v4513 = vpop.f32.mrb[0].mxu0
      %4514 = vmatprep.mubr.bf16.mxu0 0
      %4515 = vmatmul.mubr.bf16.gmra.mrb[0].mxu0 %v4357
      %v4516 = vpop.f32.mrb[0].mxu0
      %v4517 = vadd.f32 0.0, %v4516
      %v4518 = vpop.f32.mrb[0].mxu0
      %v4519 = vpop.f32.mrb[0].mxu0
      %v4520 = vadd.f32 0.0, %v4519
      %v4521 = vpop.f32.mrb[0].mxu0
      %4522 = vdwg.mxu0
      %v4523 = vadd.f32 %v4158, %v4397
      %v4524 = vadd.f32 %v4159, %v4400
      %v4525 = vadd.f32 %v4160, %v4405
      %v4526 = vadd.f32 %v4161, %v4408
      %v4527 = vadd.f32 %v4162, %v4413
      %v4528 = vadd.f32 %v4163, %v4416
      %v4529 = vadd.f32 %v4164, %v4421
      %v4530 = vadd.f32 %v4165, %v4424
      %v4531 = vadd.f32 %v4166, %v4429
      %v4532 = vadd.f32 %v4167, %v4432
      %v4533 = vadd.f32 %v4168, %v4437
      %v4534 = vadd.f32 %v4169, %v4440
      %v4535 = vadd.f32 %v4170, %v4445
      %v4536 = vadd.f32 %v4171, %v4448
      %v4537 = vadd.f32 %v4172, %v4453
      %v4538 = vadd.f32 %v4173, %v4456
      %v4539 = vadd.f32 %v4174, %v4461
      %v4540 = vadd.f32 %v4175, %v4464
      %v4541 = vadd.f32 %v4176, %v4469
      %v4542 = vadd.f32 %v4177, %v4472
      %v4543 = vadd.f32 %v4178, %v4477
      %v4544 = vadd.f32 %v4179, %v4480
      %v4545 = vadd.f32 %v4180, %v4485
      %v4546 = vadd.f32 %v4181, %v4488
      %v4547 = vadd.f32 %v4182, %v4493
      %v4548 = vadd.f32 %v4183, %v4496
      %v4549 = vadd.f32 %v4184, %v4501
      %v4550 = vadd.f32 %v4185, %v4504
      %v4551 = vadd.f32 %v4186, %v4509
      %v4552 = vadd.f32 %v4187, %v4512
      %v4553 = vadd.f32 %v4188, %v4517
      %v4554 = vadd.f32 %v4189, %v4520
      %v4555 = vld [vmem:[%s4190] sm:$0xf]
      %v4556 = vld [vmem:[%s4190 + $0x4] sm:$0xf]
      %v4557 = vld [vmem:[%s4190 + $0x8] sm:$0x1]
      %v4558 = vld [vmem:[%s4190 + $0xc] sm:$0xf]
      %v4559 = vld [vmem:[%s4190 + $0x10] sm:$0xf]
      %v4560 = vld [vmem:[%s4190 + $0x14] sm:$0x1]
      %v4561 = vld [vmem:[%s4190 + $0x18] sm:$0xf]
      %v4562 = vld [vmem:[%s4190 + $0x1c] sm:$0xf]
      %v4563 = vld [vmem:[%s4190 + $0x20] sm:$0x1]
      %v4564 = vld [vmem:[%s4190 + $0x24] sm:$0xf]
      %v4565 = vld [vmem:[%s4190 + $0x28] sm:$0xf]
      %v4566 = vld [vmem:[%s4190 + $0x2c] sm:$0x1]
      %v4567 = vld [vmem:[%s4190 + $0x30] sm:$0xf]
      %v4568 = vld [vmem:[%s4190 + $0x34] sm:$0xf]
      %v4569 = vld [vmem:[%s4190 + $0x38] sm:$0x1]
      %v4570 = vld [vmem:[%s4190 + $0x3c] sm:$0xf]
      %v4571 = vld [vmem:[%s4190 + $0x40] sm:$0xf]
      %v4572 = vld [vmem:[%s4190 + $0x44] sm:$0x1]
      %v4573 = vld [vmem:[%s4190 + $0x48] sm:$0xf]
      %v4574 = vld [vmem:[%s4190 + $0x4c] sm:$0xf]
      %v4575 = vld [vmem:[%s4190 + $0x50] sm:$0x1]
      %v4576 = vld [vmem:[%s4190 + $0x54] sm:$0xf]
      %v4577 = vld [vmem:[%s4190 + $0x58] sm:$0xf]
      %v4578 = vld [vmem:[%s4190 + $0x5c] sm:$0x1]
      %v4579 = vld [vmem:[%s4190 + $0x60] sm:$0xf]
      %v4580 = vld [vmem:[%s4190 + $0x64] sm:$0xf]
      %v4581 = vld [vmem:[%s4190 + $0x68] sm:$0x1]
      %v4582 = vld [vmem:[%s4190 + $0x6c] sm:$0xf]
      %v4583 = vld [vmem:[%s4190 + $0x70] sm:$0xf]
      %v4584 = vld [vmem:[%s4190 + $0x74] sm:$0x1]
      %v4585 = vld [vmem:[%s4190 + $0x78] sm:$0xf]
      %v4586 = vld [vmem:[%s4190 + $0x7c] sm:$0xf]
      %v4587 = vld [vmem:[%s4190 + $0x80] sm:$0x1]
      %v4588 = vld [vmem:[%s4190 + $0x84] sm:$0xf]
      %v4589 = vld [vmem:[%s4190 + $0x88] sm:$0xf]
      %v4590 = vld [vmem:[%s4190 + $0x8c] sm:$0x1]
      %v4591 = vld [vmem:[%s4190 + $0x90] sm:$0xf]
      %v4592 = vld [vmem:[%s4190 + $0x94] sm:$0xf]
      %v4593 = vld [vmem:[%s4190 + $0x98] sm:$0x1]
      %v4594 = vld [vmem:[%s4190 + $0x9c] sm:$0xf]
      %v4595 = vld [vmem:[%s4190 + $0xa0] sm:$0xf]
      %v4596 = vld [vmem:[%s4190 + $0xa4] sm:$0x1]
      %v4597 = vld [vmem:[%s4190 + $0xa8] sm:$0xf]
      %v4598 = vld [vmem:[%s4190 + $0xac] sm:$0xf]
      %v4599 = vld [vmem:[%s4190 + $0xb0] sm:$0x1]
      %v4600 = vld [vmem:[%s4190 + $0xb4] sm:$0xf]
      %v4601 = vld [vmem:[%s4190 + $0xb8] sm:$0xf]
      %v4602 = vld [vmem:[%s4190 + $0xbc] sm:$0x1]
      %v4604 = vshrl.u32 %v4555, 16
      %v4606 = vrot.slane %v4604, 4
      %v4607 = vshll.u32 %v4555, 16
      %v4609 = vrot.slane %v4607, 5
      %v4610 = vor.u32 %v4606, %v4609
      %v4611 = vrot.slane %v4610, 4
      %v4613 = vshll.u32 %v4556, 16
      %v4615 = vrot.slane %v4613, 5
      %v4616 = vsel %vm1203, %v4611, %v4615
      %v4617 = vshrl.u32 %v4556, 16
      %v4619 = vrot.slane %v4617, 4
      %v4620 = vor.u32 %v4619, %v4615
      %v4621 = vrot.slane %v4620, 4
      %v4623 = vshll.u32 %v4557, 16
      %v4625 = vrot.slane %v4623, 5
      %v4626 = vsel %vm1203, %v4621, %v4625
      %v4628 = vshrl.u32 %v4558, 16
      %v4630 = vrot.slane %v4628, 4
      %v4631 = vshll.u32 %v4558, 16
      %v4633 = vrot.slane %v4631, 5
      %v4634 = vor.u32 %v4630, %v4633
      %v4635 = vrot.slane %v4634, 4
      %v4637 = vshll.u32 %v4559, 16
      %v4639 = vrot.slane %v4637, 5
      %v4640 = vsel %vm1203, %v4635, %v4639
      %v4641 = vshrl.u32 %v4559, 16
      %v4643 = vrot.slane %v4641, 4
      %v4644 = vor.u32 %v4643, %v4639
      %v4645 = vrot.slane %v4644, 4
      %v4647 = vshll.u32 %v4560, 16
      %v4649 = vrot.slane %v4647, 5
      %v4650 = vsel %vm1203, %v4645, %v4649
      %v4652 = vshrl.u32 %v4561, 16
      %v4654 = vrot.slane %v4652, 4
      %v4655 = vshll.u32 %v4561, 16
      %v4657 = vrot.slane %v4655, 5
      %v4658 = vor.u32 %v4654, %v4657
      %v4659 = vrot.slane %v4658, 4
      %v4661 = vshll.u32 %v4562, 16
      %v4663 = vrot.slane %v4661, 5
      %v4664 = vsel %vm1203, %v4659, %v4663
      %v4665 = vshrl.u32 %v4562, 16
      %v4667 = vrot.slane %v4665, 4
      %v4668 = vor.u32 %v4667, %v4663
      %v4669 = vrot.slane %v4668, 4
      %v4671 = vshll.u32 %v4563, 16
      %v4673 = vrot.slane %v4671, 5
      %v4674 = vsel %vm1203, %v4669, %v4673
      %v4676 = vshrl.u32 %v4564, 16
      %v4678 = vrot.slane %v4676, 4
      %v4679 = vshll.u32 %v4564, 16
      %v4681 = vrot.slane %v4679, 5
      %v4682 = vor.u32 %v4678, %v4681
      %v4683 = vrot.slane %v4682, 4
      %v4685 = vshll.u32 %v4565, 16
      %v4687 = vrot.slane %v4685, 5
      %v4688 = vsel %vm1203, %v4683, %v4687
      %v4689 = vshrl.u32 %v4565, 16
      %v4691 = vrot.slane %v4689, 4
      %v4692 = vor.u32 %v4691, %v4687
      %v4693 = vrot.slane %v4692, 4
      %v4695 = vshll.u32 %v4566, 16
      %v4697 = vrot.slane %v4695, 5
      %v4698 = vsel %vm1203, %v4693, %v4697
      %v4700 = vshrl.u32 %v4567, 16
      %v4702 = vrot.slane %v4700, 4
      %v4703 = vshll.u32 %v4567, 16
      %v4705 = vrot.slane %v4703, 5
      %v4706 = vor.u32 %v4702, %v4705
      %v4707 = vrot.slane %v4706, 4
      %v4709 = vshll.u32 %v4568, 16
      %v4711 = vrot.slane %v4709, 5
      %v4712 = vsel %vm1203, %v4707, %v4711
      %v4713 = vshrl.u32 %v4568, 16
      %v4715 = vrot.slane %v4713, 4
      %v4716 = vor.u32 %v4715, %v4711
      %v4717 = vrot.slane %v4716, 4
      %v4719 = vshll.u32 %v4569, 16
      %v4721 = vrot.slane %v4719, 5
      %v4722 = vsel %vm1203, %v4717, %v4721
      %v4724 = vshrl.u32 %v4570, 16
      %v4726 = vrot.slane %v4724, 4
      %v4727 = vshll.u32 %v4570, 16
      %v4729 = vrot.slane %v4727, 5
      %v4730 = vor.u32 %v4726, %v4729
      %v4731 = vrot.slane %v4730, 4
      %v4733 = vshll.u32 %v4571, 16
      %v4735 = vrot.slane %v4733, 5
      %v4736 = vsel %vm1203, %v4731, %v4735
      %v4737 = vshrl.u32 %v4571, 16
      %v4739 = vrot.slane %v4737, 4
      %v4740 = vor.u32 %v4739, %v4735
      %v4741 = vrot.slane %v4740, 4
      %v4743 = vshll.u32 %v4572, 16
      %v4745 = vrot.slane %v4743, 5
      %v4746 = vsel %vm1203, %v4741, %v4745
      %v4748 = vshrl.u32 %v4573, 16
      %v4750 = vrot.slane %v4748, 4
      %v4751 = vshll.u32 %v4573, 16
      %v4753 = vrot.slane %v4751, 5
      %v4754 = vor.u32 %v4750, %v4753
      %v4755 = vrot.slane %v4754, 4
      %v4757 = vshll.u32 %v4574, 16
      %v4759 = vrot.slane %v4757, 5
      %v4760 = vsel %vm1203, %v4755, %v4759
      %v4761 = vshrl.u32 %v4574, 16
      %v4763 = vrot.slane %v4761, 4
      %v4764 = vor.u32 %v4763, %v4759
      %v4765 = vrot.slane %v4764, 4
      %v4767 = vshll.u32 %v4575, 16
      %v4769 = vrot.slane %v4767, 5
      %v4770 = vsel %vm1203, %v4765, %v4769
      %v4772 = vshrl.u32 %v4576, 16
      %v4774 = vrot.slane %v4772, 4
      %v4775 = vshll.u32 %v4576, 16
      %v4777 = vrot.slane %v4775, 5
      %v4778 = vor.u32 %v4774, %v4777
      %v4779 = vrot.slane %v4778, 4
      %v4781 = vshll.u32 %v4577, 16
      %v4783 = vrot.slane %v4781, 5
      %v4784 = vsel %vm1203, %v4779, %v4783
      %v4785 = vshrl.u32 %v4577, 16
      %v4787 = vrot.slane %v4785, 4
      %v4788 = vor.u32 %v4787, %v4783
      %v4789 = vrot.slane %v4788, 4
      %v4791 = vshll.u32 %v4578, 16
      %v4793 = vrot.slane %v4791, 5
      %v4794 = vsel %vm1203, %v4789, %v4793
      %v4796 = vshrl.u32 %v4579, 16
      %v4798 = vrot.slane %v4796, 4
      %v4799 = vshll.u32 %v4579, 16
      %v4801 = vrot.slane %v4799, 5
      %v4802 = vor.u32 %v4798, %v4801
      %v4803 = vrot.slane %v4802, 4
      %v4805 = vshll.u32 %v4580, 16
      %v4807 = vrot.slane %v4805, 5
      %v4808 = vsel %vm1203, %v4803, %v4807
      %v4809 = vshrl.u32 %v4580, 16
      %v4811 = vrot.slane %v4809, 4
      %v4812 = vor.u32 %v4811, %v4807
      %v4813 = vrot.slane %v4812, 4
      %v4815 = vshll.u32 %v4581, 16
      %v4817 = vrot.slane %v4815, 5
      %v4818 = vsel %vm1203, %v4813, %v4817
      %v4820 = vshrl.u32 %v4582, 16
      %v4822 = vrot.slane %v4820, 4
      %v4823 = vshll.u32 %v4582, 16
      %v4825 = vrot.slane %v4823, 5
      %v4826 = vor.u32 %v4822, %v4825
      %v4827 = vrot.slane %v4826, 4
      %v4829 = vshll.u32 %v4583, 16
      %v4831 = vrot.slane %v4829, 5
      %v4832 = vsel %vm1203, %v4827, %v4831
      %v4833 = vshrl.u32 %v4583, 16
      %v4835 = vrot.slane %v4833, 4
      %v4836 = vor.u32 %v4835, %v4831
      %v4837 = vrot.slane %v4836, 4
      %v4839 = vshll.u32 %v4584, 16
      %v4841 = vrot.slane %v4839, 5
      %v4842 = vsel %vm1203, %v4837, %v4841
      %v4844 = vshrl.u32 %v4585, 16
      %v4846 = vrot.slane %v4844, 4
      %v4847 = vshll.u32 %v4585, 16
      %v4849 = vrot.slane %v4847, 5
      %v4850 = vor.u32 %v4846, %v4849
      %v4851 = vrot.slane %v4850, 4
      %v4853 = vshll.u32 %v4586, 16
      %v4855 = vrot.slane %v4853, 5
      %v4856 = vsel %vm1203, %v4851, %v4855
      %v4857 = vshrl.u32 %v4586, 16
      %v4859 = vrot.slane %v4857, 4
      %v4860 = vor.u32 %v4859, %v4855
      %v4861 = vrot.slane %v4860, 4
      %v4863 = vshll.u32 %v4587, 16
      %v4865 = vrot.slane %v4863, 5
      %v4866 = vsel %vm1203, %v4861, %v4865
      %v4868 = vshrl.u32 %v4588, 16
      %v4870 = vrot.slane %v4868, 4
      %v4871 = vshll.u32 %v4588, 16
      %v4873 = vrot.slane %v4871, 5
      %v4874 = vor.u32 %v4870, %v4873
      %v4875 = vrot.slane %v4874, 4
      %v4877 = vshll.u32 %v4589, 16
      %v4879 = vrot.slane %v4877, 5
      %v4880 = vsel %vm1203, %v4875, %v4879
      %v4881 = vshrl.u32 %v4589, 16
      %v4883 = vrot.slane %v4881, 4
      %v4884 = vor.u32 %v4883, %v4879
      %v4885 = vrot.slane %v4884, 4
      %v4887 = vshll.u32 %v4590, 16
      %v4889 = vrot.slane %v4887, 5
      %v4890 = vsel %vm1203, %v4885, %v4889
      %v4892 = vshrl.u32 %v4591, 16
      %v4894 = vrot.slane %v4892, 4
      %v4895 = vshll.u32 %v4591, 16
      %v4897 = vrot.slane %v4895, 5
      %v4898 = vor.u32 %v4894, %v4897
      %v4899 = vrot.slane %v4898, 4
      %v4901 = vshll.u32 %v4592, 16
      %v4903 = vrot.slane %v4901, 5
      %v4904 = vsel %vm1203, %v4899, %v4903
      %v4905 = vshrl.u32 %v4592, 16
      %v4907 = vrot.slane %v4905, 4
      %v4908 = vor.u32 %v4907, %v4903
      %v4909 = vrot.slane %v4908, 4
      %v4911 = vshll.u32 %v4593, 16
      %v4913 = vrot.slane %v4911, 5
      %v4914 = vsel %vm1203, %v4909, %v4913
      %v4916 = vshrl.u32 %v4594, 16
      %v4918 = vrot.slane %v4916, 4
      %v4919 = vshll.u32 %v4594, 16
      %v4921 = vrot.slane %v4919, 5
      %v4922 = vor.u32 %v4918, %v4921
      %v4923 = vrot.slane %v4922, 4
      %v4925 = vshll.u32 %v4595, 16
      %v4927 = vrot.slane %v4925, 5
      %v4928 = vsel %vm1203, %v4923, %v4927
      %v4929 = vshrl.u32 %v4595, 16
      %v4931 = vrot.slane %v4929, 4
      %v4932 = vor.u32 %v4931, %v4927
      %v4933 = vrot.slane %v4932, 4
      %v4935 = vshll.u32 %v4596, 16
      %v4937 = vrot.slane %v4935, 5
      %v4938 = vsel %vm1203, %v4933, %v4937
      %v4940 = vshrl.u32 %v4597, 16
      %v4942 = vrot.slane %v4940, 4
      %v4943 = vshll.u32 %v4597, 16
      %v4945 = vrot.slane %v4943, 5
      %v4946 = vor.u32 %v4942, %v4945
      %v4947 = vrot.slane %v4946, 4
      %v4949 = vshll.u32 %v4598, 16
      %v4951 = vrot.slane %v4949, 5
      %v4952 = vsel %vm1203, %v4947, %v4951
      %v4953 = vshrl.u32 %v4598, 16
      %v4955 = vrot.slane %v4953, 4
      %v4956 = vor.u32 %v4955, %v4951
      %v4957 = vrot.slane %v4956, 4
      %v4959 = vshll.u32 %v4599, 16
      %v4961 = vrot.slane %v4959, 5
      %v4962 = vsel %vm1203, %v4957, %v4961
      %v4964 = vshrl.u32 %v4600, 16
      %v4966 = vrot.slane %v4964, 4
      %v4967 = vshll.u32 %v4600, 16
      %v4969 = vrot.slane %v4967, 5
      %v4970 = vor.u32 %v4966, %v4969
      %v4971 = vrot.slane %v4970, 4
      %v4973 = vshll.u32 %v4601, 16
      %v4975 = vrot.slane %v4973, 5
      %v4976 = vsel %vm1203, %v4971, %v4975
      %v4977 = vshrl.u32 %v4601, 16
      %v4979 = vrot.slane %v4977, 4
      %v4980 = vor.u32 %v4979, %v4975
      %v4981 = vrot.slane %v4980, 4
      %v4983 = vshll.u32 %v4602, 16
      %v4985 = vrot.slane %v4983, 5
      %v4986 = vsel %vm1203, %v4981, %v4985
      %s4987 = scalar_lea.vmem %s295, 56
      %v4988 = vld [vmem:[%s4987] sm:$0xf]
      %v4989 = vld [vmem:[%s4987 + $0x4] sm:$0xf]
      %v4990 = vunpack.c.l.b16 %v4616
      %v4991 = vunpack.c.l.b16 %v4626
      %v4992 = vunpack.c.l.b16 %v4640
      %v4993 = vunpack.c.l.b16 %v4650
      %v4994 = vunpack.c.l.b16 %v4664
      %v4995 = vunpack.c.l.b16 %v4674
      %v4996 = vunpack.c.l.b16 %v4688
      %v4997 = vunpack.c.l.b16 %v4698
      %v4998 = vunpack.c.l.b16 %v4712
      %v4999 = vunpack.c.l.b16 %v4722
      %v5000 = vunpack.c.l.b16 %v4736
      %v5001 = vunpack.c.l.b16 %v4746
      %v5002 = vunpack.c.l.b16 %v4760
      %v5003 = vunpack.c.l.b16 %v4770
      %v5004 = vunpack.c.l.b16 %v4784
      %v5005 = vunpack.c.l.b16 %v4794
      %v5006 = vunpack.c.l.b16 %v4808
      %v5007 = vunpack.c.l.b16 %v4818
      %v5008 = vunpack.c.l.b16 %v4832
      %v5009 = vunpack.c.l.b16 %v4842
      %v5010 = vunpack.c.l.b16 %v4856
      %v5011 = vunpack.c.l.b16 %v4866
      %v5012 = vunpack.c.l.b16 %v4880
      %v5013 = vunpack.c.l.b16 %v4890
      %v5014 = vunpack.c.l.b16 %v4904
      %v5015 = vunpack.c.l.b16 %v4914
      %v5016 = vunpack.c.l.b16 %v4928
      %v5017 = vunpack.c.l.b16 %v4938
      %v5018 = vunpack.c.l.b16 %v4952
      %v5019 = vunpack.c.l.b16 %v4962
      %v5020 = vunpack.c.l.b16 %v4976
      %v5021 = vunpack.c.l.b16 %v4986
      %v5022 = vpack.c.b16 %v4991, %v4990
      %v5023 = vpack.c.b16 %v4993, %v4992
      %v5024 = vpack.c.b16 %v4995, %v4994
      %v5025 = vpack.c.b16 %v4997, %v4996
      %v5026 = vpack.c.b16 %v4999, %v4998
      %v5027 = vpack.c.b16 %v5001, %v5000
      %v5028 = vpack.c.b16 %v5003, %v5002
      %v5029 = vpack.c.b16 %v5005, %v5004
      %v5030 = vpack.c.b16 %v5007, %v5006
      %v5031 = vpack.c.b16 %v5009, %v5008
      %v5032 = vpack.c.b16 %v5011, %v5010
      %v5033 = vpack.c.b16 %v5013, %v5012
      %v5034 = vpack.c.b16 %v5015, %v5014
      %v5035 = vpack.c.b16 %v5017, %v5016
      %v5036 = vpack.c.b16 %v5019, %v5018
      %v5037 = vpack.c.b16 %v5021, %v5020
      %v5040 = vunpack.c.l.b16 %v4988
      %v5041 = vunpack.c.l.b16 %v4989
      %v5042 = vpack.c.b16 %v5041, %v5040
      %v5044 = vsel %vm1644, %v5022, 0
      %v5047 = vsel %vm1644, %v5023, 0
      %v5050 = vsel %vm1644, %v5024, 0
      %v5053 = vsel %vm1644, %v5025, 0
      %v5056 = vsel %vm1644, %v5026, 0
      %v5059 = vsel %vm1644, %v5027, 0
      %v5062 = vsel %vm1644, %v5028, 0
      %v5065 = vsel %vm1644, %v5029, 0
      %v5068 = vsel %vm1644, %v5030, 0
      %v5071 = vsel %vm1644, %v5031, 0
      %v5074 = vsel %vm1644, %v5032, 0
      %v5077 = vsel %vm1644, %v5033, 0
      %v5080 = vsel %vm1644, %v5034, 0
      %v5083 = vsel %vm1644, %v5035, 0
      %v5086 = vsel %vm1644, %v5036, 0
      %v5089 = vsel %vm1644, %v5037, 0
      %v5092 = vsel %vm1644, %v5042, 0
      %5094 = vmatprep.subr.bf16.mxu0 0
      %5095 = vmatpush1.bf16.xpose.msra.mxu0 %v5092
      %5096 = vmatprep.subr.bf16.mxu0 0
      %5097 = vmatpush1.bf16.xpose.msra.mxu0 0
      %5098 = vmatprep.subr.bf16.mxu0 0
      %5099 = vmatpush1.bf16.xpose.msra.mxu0 0
      %5100 = vmatprep.subr.bf16.mxu0 0
      %5101 = vmatpush1.bf16.xpose.msra.mxu0 0
      %5102 = vmatprep.subr.bf16.mxu0 0
      %5103 = vmatpush1.bf16.xpose.msra.mxu0 0
      %5104 = vmatprep.subr.bf16.mxu0 0
      %5105 = vmatpush1.bf16.xpose.msra.mxu0 0
      %5106 = vmatprep.subr.bf16.mxu0 0
      %5107 = vmatpush1.bf16.xpose.msra.mxu0 0
      %5108 = vmatprep.subr.bf16.mxu0 0
      %5109 = vmatpush1.bf16.xpose.msra.mxu0 0
      %5110 = vmatprep.subr.bf16.mxu0 0
      %5111 = vmatpush1.bf16.xpose.msra.mxu0 0
      %5112 = vmatprep.subr.bf16.mxu0 0
      %5113 = vmatpush1.bf16.xpose.msra.mxu0 0
      %5114 = vmatprep.subr.bf16.mxu0 0
      %5115 = vmatpush1.bf16.xpose.msra.mxu0 0
      %5116 = vmatprep.subr.bf16.mxu0 0
      %5117 = vmatpush1.bf16.xpose.msra.mxu0 0
      %5118 = vmatprep.subr.bf16.mxu0 0
      %5119 = vmatpush1.bf16.xpose.msra.mxu0 0
      %5120 = vmatprep.subr.bf16.mxu0 0
      %5121 = vmatpush1.bf16.xpose.msra.mxu0 0
      %5122 = vmatprep.subr.bf16.mxu0 0
      %5123 = vmatpush1.bf16.xpose.msra.mxu0 0
      %5124 = vmatprep.subr.bf16.mxu0 0
      %5125 = vmatpush1.bf16.xpose.msra.mxu0 0
      %5126 = vmatprep.mubr.bf16.mxu0 0
      %5127 = vmatmul.mubr.bf16.gmra.mrb[0].mxu0 %v5044
      %v5128 = vpop.f32.mrb[0].mxu0
      %v5129 = vadd.f32 0.0, %v5128
      %v5130 = vpop.f32.mrb[0].mxu0
      %v5131 = vpop.f32.mrb[0].mxu0
      %v5132 = vadd.f32 0.0, %v5131
      %v5133 = vpop.f32.mrb[0].mxu0
      %5134 = vmatprep.mubr.bf16.mxu0 0
      %5135 = vmatmul.mubr.bf16.gmra.mrb[0].mxu0 %v5047
      %v5136 = vpop.f32.mrb[0].mxu0
      %v5137 = vadd.f32 0.0, %v5136
      %v5138 = vpop.f32.mrb[0].mxu0
      %v5139 = vpop.f32.mrb[0].mxu0
      %v5140 = vadd.f32 0.0, %v5139
      %v5141 = vpop.f32.mrb[0].mxu0
      %5142 = vmatprep.mubr.bf16.mxu0 0
      %5143 = vmatmul.mubr.bf16.gmra.mrb[0].mxu0 %v5050
      %v5144 = vpop.f32.mrb[0].mxu0
      %v5145 = vadd.f32 0.0, %v5144
      %v5146 = vpop.f32.mrb[0].mxu0
      %v5147 = vpop.f32.mrb[0].mxu0
      %v5148 = vadd.f32 0.0, %v5147
      %v5149 = vpop.f32.mrb[0].mxu0
      %5150 = vmatprep.mubr.bf16.mxu0 0
      %5151 = vmatmul.mubr.bf16.gmra.mrb[0].mxu0 %v5053
      %v5152 = vpop.f32.mrb[0].mxu0
      %v5153 = vadd.f32 0.0, %v5152
      %v5154 = vpop.f32.mrb[0].mxu0
      %v5155 = vpop.f32.mrb[0].mxu0
      %v5156 = vadd.f32 0.0, %v5155
      %v5157 = vpop.f32.mrb[0].mxu0
      %5158 = vmatprep.mubr.bf16.mxu0 0
      %5159 = vmatmul.mubr.bf16.gmra.mrb[0].mxu0 %v5056
      %v5160 = vpop.f32.mrb[0].mxu0
      %v5161 = vadd.f32 0.0, %v5160
      %v5162 = vpop.f32.mrb[0].mxu0
      %v5163 = vpop.f32.mrb[0].mxu0
      %v5164 = vadd.f32 0.0, %v5163
      %v5165 = vpop.f32.mrb[0].mxu0
      %5166 = vmatprep.mubr.bf16.mxu0 0
      %5167 = vmatmul.mubr.bf16.gmra.mrb[0].mxu0 %v5059
      %v5168 = vpop.f32.mrb[0].mxu0
      %v5169 = vadd.f32 0.0, %v5168
      %v5170 = vpop.f32.mrb[0].mxu0
      %v5171 = vpop.f32.mrb[0].mxu0
      %v5172 = vadd.f32 0.0, %v5171
      %v5173 = vpop.f32.mrb[0].mxu0
      %5174 = vmatprep.mubr.bf16.mxu0 0
      %5175 = vmatmul.mubr.bf16.gmra.mrb[0].mxu0 %v5062
      %v5176 = vpop.f32.mrb[0].mxu0
      %v5177 = vadd.f32 0.0, %v5176
      %v5178 = vpop.f32.mrb[0].mxu0
      %v5179 = vpop.f32.mrb[0].mxu0
      %v5180 = vadd.f32 0.0, %v5179
      %v5181 = vpop.f32.mrb[0].mxu0
      %5182 = vmatprep.mubr.bf16.mxu0 0
      %5183 = vmatmul.mubr.bf16.gmra.mrb[0].mxu0 %v5065
      %v5184 = vpop.f32.mrb[0].mxu0
      %v5185 = vadd.f32 0.0, %v5184
      %v5186 = vpop.f32.mrb[0].mxu0
      %v5187 = vpop.f32.mrb[0].mxu0
      %v5188 = vadd.f32 0.0, %v5187
      %v5189 = vpop.f32.mrb[0].mxu0
      %5190 = vmatprep.mubr.bf16.mxu0 0
      %5191 = vmatmul.mubr.bf16.gmra.mrb[0].mxu0 %v5068
      %v5192 = vpop.f32.mrb[0].mxu0
      %v5193 = vadd.f32 0.0, %v5192
      %v5194 = vpop.f32.mrb[0].mxu0
      %v5195 = vpop.f32.mrb[0].mxu0
      %v5196 = vadd.f32 0.0, %v5195
      %v5197 = vpop.f32.mrb[0].mxu0
      %5198 = vmatprep.mubr.bf16.mxu0 0
      %5199 = vmatmul.mubr.bf16.gmra.mrb[0].mxu0 %v5071
      %v5200 = vpop.f32.mrb[0].mxu0
      %v5201 = vadd.f32 0.0, %v5200
      %v5202 = vpop.f32.mrb[0].mxu0
      %v5203 = vpop.f32.mrb[0].mxu0
      %v5204 = vadd.f32 0.0, %v5203
      %v5205 = vpop.f32.mrb[0].mxu0
      %5206 = vmatprep.mubr.bf16.mxu0 0
      %5207 = vmatmul.mubr.bf16.gmra.mrb[0].mxu0 %v5074
      %v5208 = vpop.f32.mrb[0].mxu0
      %v5209 = vadd.f32 0.0, %v5208
      %v5210 = vpop.f32.mrb[0].mxu0
      %v5211 = vpop.f32.mrb[0].mxu0
      %v5212 = vadd.f32 0.0, %v5211
      %v5213 = vpop.f32.mrb[0].mxu0
      %5214 = vmatprep.mubr.bf16.mxu0 0
      %5215 = vmatmul.mubr.bf16.gmra.mrb[0].mxu0 %v5077
      %v5216 = vpop.f32.mrb[0].mxu0
      %v5217 = vadd.f32 0.0, %v5216
      %v5218 = vpop.f32.mrb[0].mxu0
      %v5219 = vpop.f32.mrb[0].mxu0
      %v5220 = vadd.f32 0.0, %v5219
      %v5221 = vpop.f32.mrb[0].mxu0
      %5222 = vmatprep.mubr.bf16.mxu0 0
      %5223 = vmatmul.mubr.bf16.gmra.mrb[0].mxu0 %v5080
      %v5224 = vpop.f32.mrb[0].mxu0
      %v5225 = vadd.f32 0.0, %v5224
      %v5226 = vpop.f32.mrb[0].mxu0
      %v5227 = vpop.f32.mrb[0].mxu0
      %v5228 = vadd.f32 0.0, %v5227
      %v5229 = vpop.f32.mrb[0].mxu0
      %5230 = vmatprep.mubr.bf16.mxu0 0
      %5231 = vmatmul.mubr.bf16.gmra.mrb[0].mxu0 %v5083
      %v5232 = vpop.f32.mrb[0].mxu0
      %v5233 = vadd.f32 0.0, %v5232
      %v5234 = vpop.f32.mrb[0].mxu0
      %v5235 = vpop.f32.mrb[0].mxu0
      %v5236 = vadd.f32 0.0, %v5235
      %v5237 = vpop.f32.mrb[0].mxu0
      %5238 = vmatprep.mubr.bf16.mxu0 0
      %5239 = vmatmul.mubr.bf16.gmra.mrb[0].mxu0 %v5086
      %v5240 = vpop.f32.mrb[0].mxu0
      %v5241 = vadd.f32 0.0, %v5240
      %v5242 = vpop.f32.mrb[0].mxu0
      %v5243 = vpop.f32.mrb[0].mxu0
      %v5244 = vadd.f32 0.0, %v5243
      %v5245 = vpop.f32.mrb[0].mxu0
      %5246 = vmatprep.mubr.bf16.mxu0 0
      %5247 = vmatmul.mubr.bf16.gmra.mrb[0].mxu0 %v5089
      %v5248 = vpop.f32.mrb[0].mxu0
      %v5249 = vadd.f32 0.0, %v5248
      %v5250 = vpop.f32.mrb[0].mxu0
      %v5251 = vpop.f32.mrb[0].mxu0
      %v5252 = vadd.f32 0.0, %v5251
      %v5253 = vpop.f32.mrb[0].mxu0
      %5254 = vdwg.mxu0
      %v5255 = vadd.f32 %v4523, %v5129
      %v5256 = vadd.f32 %v4524, %v5132
      %v5257 = vadd.f32 %v4525, %v5137
      %v5258 = vadd.f32 %v4526, %v5140
      %v5259 = vadd.f32 %v4527, %v5145
      %v5260 = vadd.f32 %v4528, %v5148
      %v5261 = vadd.f32 %v4529, %v5153
      %v5262 = vadd.f32 %v4530, %v5156
      %v5263 = vadd.f32 %v4531, %v5161
      %v5264 = vadd.f32 %v4532, %v5164
      %v5265 = vadd.f32 %v4533, %v5169
      %v5266 = vadd.f32 %v4534, %v5172
      %v5267 = vadd.f32 %v4535, %v5177
      %v5268 = vadd.f32 %v4536, %v5180
      %v5269 = vadd.f32 %v4537, %v5185
      %v5270 = vadd.f32 %v4538, %v5188
      %v5271 = vadd.f32 %v4539, %v5193
      %v5272 = vadd.f32 %v4540, %v5196
      %v5273 = vadd.f32 %v4541, %v5201
      %v5274 = vadd.f32 %v4542, %v5204
      %v5275 = vadd.f32 %v4543, %v5209
      %v5276 = vadd.f32 %v4544, %v5212
      %v5277 = vadd.f32 %v4545, %v5217
      %v5278 = vadd.f32 %v4546, %v5220
      %v5279 = vadd.f32 %v4547, %v5225
      %v5280 = vadd.f32 %v4548, %v5228
      %v5281 = vadd.f32 %v4549, %v5233
      %v5282 = vadd.f32 %v4550, %v5236
      %v5283 = vadd.f32 %v4551, %v5241
      %v5284 = vadd.f32 %v4552, %v5244
      %v5285 = vadd.f32 %v4553, %v5249
      %v5286 = vadd.f32 %v4554, %v5252
      %v5287 = vld [vmem:[%s4190] sm:$0xe]
      %v5288 = vld [vmem:[%s4190 + $0xc] sm:$0xe]
      %v5289 = vld [vmem:[%s4190 + $0x18] sm:$0xe]
      %v5290 = vld [vmem:[%s4190 + $0x24] sm:$0xe]
      %v5291 = vld [vmem:[%s4190 + $0x30] sm:$0xe]
      %v5292 = vld [vmem:[%s4190 + $0x3c] sm:$0xe]
      %v5293 = vld [vmem:[%s4190 + $0x48] sm:$0xe]
      %v5294 = vld [vmem:[%s4190 + $0x54] sm:$0xe]
      %v5295 = vld [vmem:[%s4190 + $0x60] sm:$0xe]
      %v5296 = vld [vmem:[%s4190 + $0x6c] sm:$0xe]
      %v5297 = vld [vmem:[%s4190 + $0x78] sm:$0xe]
      %v5298 = vld [vmem:[%s4190 + $0x84] sm:$0xe]
      %v5299 = vld [vmem:[%s4190 + $0x90] sm:$0xe]
      %v5300 = vld [vmem:[%s4190 + $0x9c] sm:$0xe]
      %v5301 = vld [vmem:[%s4190 + $0xa8] sm:$0xe]
      %v5302 = vld [vmem:[%s4190 + $0xb4] sm:$0xe]
      %v5351 = vrot.slane %v5287, 5
      %v5352 = vrot.slane %v5351, 4
      %v5353 = vrot.slane %v4556, 5
      %v5354 = vsel %vm2204, %v5352, %v5353
      %v5355 = vrot.slane %v5353, 4
      %v5356 = vrot.slane %v4557, 5
      %v5357 = vsel %vm2204, %v5355, %v5356
      %v5358 = vrot.slane %v5288, 5
      %v5359 = vrot.slane %v5358, 4
      %v5360 = vrot.slane %v4559, 5
      %v5361 = vsel %vm2204, %v5359, %v5360
      %v5362 = vrot.slane %v5360, 4
      %v5363 = vrot.slane %v4560, 5
      %v5364 = vsel %vm2204, %v5362, %v5363
      %v5365 = vrot.slane %v5289, 5
      %v5366 = vrot.slane %v5365, 4
      %v5367 = vrot.slane %v4562, 5
      %v5368 = vsel %vm2204, %v5366, %v5367
      %v5369 = vrot.slane %v5367, 4
      %v5370 = vrot.slane %v4563, 5
      %v5371 = vsel %vm2204, %v5369, %v5370
      %v5372 = vrot.slane %v5290, 5
      %v5373 = vrot.slane %v5372, 4
      %v5374 = vrot.slane %v4565, 5
      %v5375 = vsel %vm2204, %v5373, %v5374
      %v5376 = vrot.slane %v5374, 4
      %v5377 = vrot.slane %v4566, 5
      %v5378 = vsel %vm2204, %v5376, %v5377
      %v5379 = vrot.slane %v5291, 5
      %v5380 = vrot.slane %v5379, 4
      %v5381 = vrot.slane %v4568, 5
      %v5382 = vsel %vm2204, %v5380, %v5381
      %v5383 = vrot.slane %v5381, 4
      %v5384 = vrot.slane %v4569, 5
      %v5385 = vsel %vm2204, %v5383, %v5384
      %v5386 = vrot.slane %v5292, 5
      %v5387 = vrot.slane %v5386, 4
      %v5388 = vrot.slane %v4571, 5
      %v5389 = vsel %vm2204, %v5387, %v5388
      %v5390 = vrot.slane %v5388, 4
      %v5391 = vrot.slane %v4572, 5
      %v5392 = vsel %vm2204, %v5390, %v5391
      %v5393 = vrot.slane %v5293, 5
      %v5394 = vrot.slane %v5393, 4
      %v5395 = vrot.slane %v4574, 5
      %v5396 = vsel %vm2204, %v5394, %v5395
      %v5397 = vrot.slane %v5395, 4
      %v5398 = vrot.slane %v4575, 5
      %v5399 = vsel %vm2204, %v5397, %v5398
      %v5400 = vrot.slane %v5294, 5
      %v5401 = vrot.slane %v5400, 4
      %v5402 = vrot.slane %v4577, 5
      %v5403 = vsel %vm2204, %v5401, %v5402
      %v5404 = vrot.slane %v5402, 4
      %v5405 = vrot.slane %v4578, 5
      %v5406 = vsel %vm2204, %v5404, %v5405
      %v5407 = vrot.slane %v5295, 5
      %v5408 = vrot.slane %v5407, 4
      %v5409 = vrot.slane %v4580, 5
      %v5410 = vsel %vm2204, %v5408, %v5409
      %v5411 = vrot.slane %v5409, 4
      %v5412 = vrot.slane %v4581, 5
      %v5413 = vsel %vm2204, %v5411, %v5412
      %v5414 = vrot.slane %v5296, 5
      %v5415 = vrot.slane %v5414, 4
      %v5416 = vrot.slane %v4583, 5
      %v5417 = vsel %vm2204, %v5415, %v5416
      %v5418 = vrot.slane %v5416, 4
      %v5419 = vrot.slane %v4584, 5
      %v5420 = vsel %vm2204, %v5418, %v5419
      %v5421 = vrot.slane %v5297, 5
      %v5422 = vrot.slane %v5421, 4
      %v5423 = vrot.slane %v4586, 5
      %v5424 = vsel %vm2204, %v5422, %v5423
      %v5425 = vrot.slane %v5423, 4
      %v5426 = vrot.slane %v4587, 5
      %v5427 = vsel %vm2204, %v5425, %v5426
      %v5428 = vrot.slane %v5298, 5
      %v5429 = vrot.slane %v5428, 4
      %v5430 = vrot.slane %v4589, 5
      %v5431 = vsel %vm2204, %v5429, %v5430
      %v5432 = vrot.slane %v5430, 4
      %v5433 = vrot.slane %v4590, 5
      %v5434 = vsel %vm2204, %v5432, %v5433
      %v5435 = vrot.slane %v5299, 5
      %v5436 = vrot.slane %v5435, 4
      %v5437 = vrot.slane %v4592, 5
      %v5438 = vsel %vm2204, %v5436, %v5437
      %v5439 = vrot.slane %v5437, 4
      %v5440 = vrot.slane %v4593, 5
      %v5441 = vsel %vm2204, %v5439, %v5440
      %v5442 = vrot.slane %v5300, 5
      %v5443 = vrot.slane %v5442, 4
      %v5444 = vrot.slane %v4595, 5
      %v5445 = vsel %vm2204, %v5443, %v5444
      %v5446 = vrot.slane %v5444, 4
      %v5447 = vrot.slane %v4596, 5
      %v5448 = vsel %vm2204, %v5446, %v5447
      %v5449 = vrot.slane %v5301, 5
      %v5450 = vrot.slane %v5449, 4
      %v5451 = vrot.slane %v4598, 5
      %v5452 = vsel %vm2204, %v5450, %v5451
      %v5453 = vrot.slane %v5451, 4
      %v5454 = vrot.slane %v4599, 5
      %v5455 = vsel %vm2204, %v5453, %v5454
      %v5456 = vrot.slane %v5302, 5
      %v5457 = vrot.slane %v5456, 4
      %v5458 = vrot.slane %v4601, 5
      %v5459 = vsel %vm2204, %v5457, %v5458
      %v5460 = vrot.slane %v5458, 4
      %v5461 = vrot.slane %v4602, 5
      %v5462 = vsel %vm2204, %v5460, %v5461
      %s5463 = scalar_lea.vmem %s295, 64
      %v5464 = vld [vmem:[%s5463] sm:$0xf]
      %v5465 = vld [vmem:[%s5463 + $0x4] sm:$0xf]
      %v5466 = vunpack.c.l.b16 %v5354
      %v5467 = vunpack.c.l.b16 %v5357
      %v5468 = vunpack.c.l.b16 %v5361
      %v5469 = vunpack.c.l.b16 %v5364
      %v5470 = vunpack.c.l.b16 %v5368
      %v5471 = vunpack.c.l.b16 %v5371
      %v5472 = vunpack.c.l.b16 %v5375
      %v5473 = vunpack.c.l.b16 %v5378
      %v5474 = vunpack.c.l.b16 %v5382
      %v5475 = vunpack.c.l.b16 %v5385
      %v5476 = vunpack.c.l.b16 %v5389
      %v5477 = vunpack.c.l.b16 %v5392
      %v5478 = vunpack.c.l.b16 %v5396
      %v5479 = vunpack.c.l.b16 %v5399
      %v5480 = vunpack.c.l.b16 %v5403
      %v5481 = vunpack.c.l.b16 %v5406
      %v5482 = vunpack.c.l.b16 %v5410
      %v5483 = vunpack.c.l.b16 %v5413
      %v5484 = vunpack.c.l.b16 %v5417
      %v5485 = vunpack.c.l.b16 %v5420
      %v5486 = vunpack.c.l.b16 %v5424
      %v5487 = vunpack.c.l.b16 %v5427
      %v5488 = vunpack.c.l.b16 %v5431
      %v5489 = vunpack.c.l.b16 %v5434
      %v5490 = vunpack.c.l.b16 %v5438
      %v5491 = vunpack.c.l.b16 %v5441
      %v5492 = vunpack.c.l.b16 %v5445
      %v5493 = vunpack.c.l.b16 %v5448
      %v5494 = vunpack.c.l.b16 %v5452
      %v5495 = vunpack.c.l.b16 %v5455
      %v5496 = vunpack.c.l.b16 %v5459
      %v5497 = vunpack.c.l.b16 %v5462
      %v5498 = vpack.c.b16 %v5467, %v5466
      %v5499 = vpack.c.b16 %v5469, %v5468
      %v5500 = vpack.c.b16 %v5471, %v5470
      %v5501 = vpack.c.b16 %v5473, %v5472
      %v5502 = vpack.c.b16 %v5475, %v5474
      %v5503 = vpack.c.b16 %v5477, %v5476
      %v5504 = vpack.c.b16 %v5479, %v5478
      %v5505 = vpack.c.b16 %v5481, %v5480
      %v5506 = vpack.c.b16 %v5483, %v5482
      %v5507 = vpack.c.b16 %v5485, %v5484
      %v5508 = vpack.c.b16 %v5487, %v5486
      %v5509 = vpack.c.b16 %v5489, %v5488
      %v5510 = vpack.c.b16 %v5491, %v5490
      %v5511 = vpack.c.b16 %v5493, %v5492
      %v5512 = vpack.c.b16 %v5495, %v5494
      %v5513 = vpack.c.b16 %v5497, %v5496
      %v5516 = vunpack.c.l.b16 %v5464
      %v5517 = vunpack.c.l.b16 %v5465
      %v5518 = vpack.c.b16 %v5517, %v5516
      %v5520 = vsel %vm1644, %v5498, 0
      %v5523 = vsel %vm1644, %v5499, 0
      %v5526 = vsel %vm1644, %v5500, 0
      %v5529 = vsel %vm1644, %v5501, 0
      %v5532 = vsel %vm1644, %v5502, 0
      %v5535 = vsel %vm1644, %v5503, 0
      %v5538 = vsel %vm1644, %v5504, 0
      %v5541 = vsel %vm1644, %v5505, 0
      %v5544 = vsel %vm1644, %v5506, 0
      %v5547 = vsel %vm1644, %v5507, 0
      %v5550 = vsel %vm1644, %v5508, 0
      %v5553 = vsel %vm1644, %v5509, 0
      %v5556 = vsel %vm1644, %v5510, 0
      %v5559 = vsel %vm1644, %v5511, 0
      %v5562 = vsel %vm1644, %v5512, 0
      %v5565 = vsel %vm1644, %v5513, 0
      %v5568 = vsel %vm1644, %v5518, 0
      %5570 = vmatprep.subr.bf16.mxu0 0
      %5571 = vmatpush1.bf16.xpose.msra.mxu0 %v5568
      %5572 = vmatprep.subr.bf16.mxu0 0
      %5573 = vmatpush1.bf16.xpose.msra.mxu0 0
      %5574 = vmatprep.subr.bf16.mxu0 0
      %5575 = vmatpush1.bf16.xpose.msra.mxu0 0
      %5576 = vmatprep.subr.bf16.mxu0 0
      %5577 = vmatpush1.bf16.xpose.msra.mxu0 0
      %5578 = vmatprep.subr.bf16.mxu0 0
      %5579 = vmatpush1.bf16.xpose.msra.mxu0 0
      %5580 = vmatprep.subr.bf16.mxu0 0
      %5581 = vmatpush1.bf16.xpose.msra.mxu0 0
      %5582 = vmatprep.subr.bf16.mxu0 0
      %5583 = vmatpush1.bf16.xpose.msra.mxu0 0
      %5584 = vmatprep.subr.bf16.mxu0 0
      %5585 = vmatpush1.bf16.xpose.msra.mxu0 0
      %5586 = vmatprep.subr.bf16.mxu0 0
      %5587 = vmatpush1.bf16.xpose.msra.mxu0 0
      %5588 = vmatprep.subr.bf16.mxu0 0
      %5589 = vmatpush1.bf16.xpose.msra.mxu0 0
      %5590 = vmatprep.subr.bf16.mxu0 0
      %5591 = vmatpush1.bf16.xpose.msra.mxu0 0
      %5592 = vmatprep.subr.bf16.mxu0 0
      %5593 = vmatpush1.bf16.xpose.msra.mxu0 0
      %5594 = vmatprep.subr.bf16.mxu0 0
      %5595 = vmatpush1.bf16.xpose.msra.mxu0 0
      %5596 = vmatprep.subr.bf16.mxu0 0
      %5597 = vmatpush1.bf16.xpose.msra.mxu0 0
      %5598 = vmatprep.subr.bf16.mxu0 0
      %5599 = vmatpush1.bf16.xpose.msra.mxu0 0
      %5600 = vmatprep.subr.bf16.mxu0 0
      %5601 = vmatpush1.bf16.xpose.msra.mxu0 0
      %5602 = vmatprep.mubr.bf16.mxu0 0
      %5603 = vmatmul.mubr.bf16.gmra.mrb[0].mxu0 %v5520
      %v5604 = vpop.f32.mrb[0].mxu0
      %v5605 = vadd.f32 0.0, %v5604
      %v5606 = vpop.f32.mrb[0].mxu0
      %v5607 = vpop.f32.mrb[0].mxu0
      %v5608 = vadd.f32 0.0, %v5607
      %v5609 = vpop.f32.mrb[0].mxu0
      %5610 = vmatprep.mubr.bf16.mxu0 0
      %5611 = vmatmul.mubr.bf16.gmra.mrb[0].mxu0 %v5523
      %v5612 = vpop.f32.mrb[0].mxu0
      %v5613 = vadd.f32 0.0, %v5612
      %v5614 = vpop.f32.mrb[0].mxu0
      %v5615 = vpop.f32.mrb[0].mxu0
      %v5616 = vadd.f32 0.0, %v5615
      %v5617 = vpop.f32.mrb[0].mxu0
      %5618 = vmatprep.mubr.bf16.mxu0 0
      %5619 = vmatmul.mubr.bf16.gmra.mrb[0].mxu0 %v5526
      %v5620 = vpop.f32.mrb[0].mxu0
      %v5621 = vadd.f32 0.0, %v5620
      %v5622 = vpop.f32.mrb[0].mxu0
      %v5623 = vpop.f32.mrb[0].mxu0
      %v5624 = vadd.f32 0.0, %v5623
      %v5625 = vpop.f32.mrb[0].mxu0
      %5626 = vmatprep.mubr.bf16.mxu0 0
      %5627 = vmatmul.mubr.bf16.gmra.mrb[0].mxu0 %v5529
      %v5628 = vpop.f32.mrb[0].mxu0
      %v5629 = vadd.f32 0.0, %v5628
      %v5630 = vpop.f32.mrb[0].mxu0
      %v5631 = vpop.f32.mrb[0].mxu0
      %v5632 = vadd.f32 0.0, %v5631
      %v5633 = vpop.f32.mrb[0].mxu0
      %5634 = vmatprep.mubr.bf16.mxu0 0
      %5635 = vmatmul.mubr.bf16.gmra.mrb[0].mxu0 %v5532
      %v5636 = vpop.f32.mrb[0].mxu0
      %v5637 = vadd.f32 0.0, %v5636
      %v5638 = vpop.f32.mrb[0].mxu0
      %v5639 = vpop.f32.mrb[0].mxu0
      %v5640 = vadd.f32 0.0, %v5639
      %v5641 = vpop.f32.mrb[0].mxu0
      %5642 = vmatprep.mubr.bf16.mxu0 0
      %5643 = vmatmul.mubr.bf16.gmra.mrb[0].mxu0 %v5535
      %v5644 = vpop.f32.mrb[0].mxu0
      %v5645 = vadd.f32 0.0, %v5644
      %v5646 = vpop.f32.mrb[0].mxu0
      %v5647 = vpop.f32.mrb[0].mxu0
      %v5648 = vadd.f32 0.0, %v5647
      %v5649 = vpop.f32.mrb[0].mxu0
      %5650 = vmatprep.mubr.bf16.mxu0 0
      %5651 = vmatmul.mubr.bf16.gmra.mrb[0].mxu0 %v5538
      %v5652 = vpop.f32.mrb[0].mxu0
      %v5653 = vadd.f32 0.0, %v5652
      %v5654 = vpop.f32.mrb[0].mxu0
      %v5655 = vpop.f32.mrb[0].mxu0
      %v5656 = vadd.f32 0.0, %v5655
      %v5657 = vpop.f32.mrb[0].mxu0
      %5658 = vmatprep.mubr.bf16.mxu0 0
      %5659 = vmatmul.mubr.bf16.gmra.mrb[0].mxu0 %v5541
      %v5660 = vpop.f32.mrb[0].mxu0
      %v5661 = vadd.f32 0.0, %v5660
      %v5662 = vpop.f32.mrb[0].mxu0
      %v5663 = vpop.f32.mrb[0].mxu0
      %v5664 = vadd.f32 0.0, %v5663
      %v5665 = vpop.f32.mrb[0].mxu0
      %5666 = vmatprep.mubr.bf16.mxu0 0
      %5667 = vmatmul.mubr.bf16.gmra.mrb[0].mxu0 %v5544
      %v5668 = vpop.f32.mrb[0].mxu0
      %v5669 = vadd.f32 0.0, %v5668
      %v5670 = vpop.f32.mrb[0].mxu0
      %v5671 = vpop.f32.mrb[0].mxu0
      %v5672 = vadd.f32 0.0, %v5671
      %v5673 = vpop.f32.mrb[0].mxu0
      %5674 = vmatprep.mubr.bf16.mxu0 0
      %5675 = vmatmul.mubr.bf16.gmra.mrb[0].mxu0 %v5547
      %v5676 = vpop.f32.mrb[0].mxu0
      %v5677 = vadd.f32 0.0, %v5676
      %v5678 = vpop.f32.mrb[0].mxu0
      %v5679 = vpop.f32.mrb[0].mxu0
      %v5680 = vadd.f32 0.0, %v5679
      %v5681 = vpop.f32.mrb[0].mxu0
      %5682 = vmatprep.mubr.bf16.mxu0 0
      %5683 = vmatmul.mubr.bf16.gmra.mrb[0].mxu0 %v5550
      %v5684 = vpop.f32.mrb[0].mxu0
      %v5685 = vadd.f32 0.0, %v5684
      %v5686 = vpop.f32.mrb[0].mxu0
      %v5687 = vpop.f32.mrb[0].mxu0
      %v5688 = vadd.f32 0.0, %v5687
      %v5689 = vpop.f32.mrb[0].mxu0
      %5690 = vmatprep.mubr.bf16.mxu0 0
      %5691 = vmatmul.mubr.bf16.gmra.mrb[0].mxu0 %v5553
      %v5692 = vpop.f32.mrb[0].mxu0
      %v5693 = vadd.f32 0.0, %v5692
      %v5694 = vpop.f32.mrb[0].mxu0
      %v5695 = vpop.f32.mrb[0].mxu0
      %v5696 = vadd.f32 0.0, %v5695
      %v5697 = vpop.f32.mrb[0].mxu0
      %5698 = vmatprep.mubr.bf16.mxu0 0
      %5699 = vmatmul.mubr.bf16.gmra.mrb[0].mxu0 %v5556
      %v5700 = vpop.f32.mrb[0].mxu0
      %v5701 = vadd.f32 0.0, %v5700
      %v5702 = vpop.f32.mrb[0].mxu0
      %v5703 = vpop.f32.mrb[0].mxu0
      %v5704 = vadd.f32 0.0, %v5703
      %v5705 = vpop.f32.mrb[0].mxu0
      %5706 = vmatprep.mubr.bf16.mxu0 0
      %5707 = vmatmul.mubr.bf16.gmra.mrb[0].mxu0 %v5559
      %v5708 = vpop.f32.mrb[0].mxu0
      %v5709 = vadd.f32 0.0, %v5708
      %v5710 = vpop.f32.mrb[0].mxu0
      %v5711 = vpop.f32.mrb[0].mxu0
      %v5712 = vadd.f32 0.0, %v5711
      %v5713 = vpop.f32.mrb[0].mxu0
      %5714 = vmatprep.mubr.bf16.mxu0 0
      %5715 = vmatmul.mubr.bf16.gmra.mrb[0].mxu0 %v5562
      %v5716 = vpop.f32.mrb[0].mxu0
      %v5717 = vadd.f32 0.0, %v5716
      %v5718 = vpop.f32.mrb[0].mxu0
      %v5719 = vpop.f32.mrb[0].mxu0
      %v5720 = vadd.f32 0.0, %v5719
      %v5721 = vpop.f32.mrb[0].mxu0
      %5722 = vmatprep.mubr.bf16.mxu0 0
      %5723 = vmatmul.mubr.bf16.gmra.mrb[0].mxu0 %v5565
      %v5724 = vpop.f32.mrb[0].mxu0
      %v5725 = vadd.f32 0.0, %v5724
      %v5726 = vpop.f32.mrb[0].mxu0
      %v5727 = vpop.f32.mrb[0].mxu0
      %v5728 = vadd.f32 0.0, %v5727
      %v5729 = vpop.f32.mrb[0].mxu0
      %5730 = vdwg.mxu0
      %v5731 = vadd.f32 %v5255, %v5605
      %v5732 = vadd.f32 %v5256, %v5608
      %v5733 = vadd.f32 %v5257, %v5613
      %v5734 = vadd.f32 %v5258, %v5616
      %v5735 = vadd.f32 %v5259, %v5621
      %v5736 = vadd.f32 %v5260, %v5624
      %v5737 = vadd.f32 %v5261, %v5629
      %v5738 = vadd.f32 %v5262, %v5632
      %v5739 = vadd.f32 %v5263, %v5637
      %v5740 = vadd.f32 %v5264, %v5640
      %v5741 = vadd.f32 %v5265, %v5645
      %v5742 = vadd.f32 %v5266, %v5648
      %v5743 = vadd.f32 %v5267, %v5653
      %v5744 = vadd.f32 %v5268, %v5656
      %v5745 = vadd.f32 %v5269, %v5661
      %v5746 = vadd.f32 %v5270, %v5664
      %v5747 = vadd.f32 %v5271, %v5669
      %v5748 = vadd.f32 %v5272, %v5672
      %v5749 = vadd.f32 %v5273, %v5677
      %v5750 = vadd.f32 %v5274, %v5680
      %v5751 = vadd.f32 %v5275, %v5685
      %v5752 = vadd.f32 %v5276, %v5688
      %v5753 = vadd.f32 %v5277, %v5693
      %v5754 = vadd.f32 %v5278, %v5696
      %v5755 = vadd.f32 %v5279, %v5701
      %v5756 = vadd.f32 %v5280, %v5704
      %v5757 = vadd.f32 %v5281, %v5709
      %v5758 = vadd.f32 %v5282, %v5712
      %v5759 = vadd.f32 %v5283, %v5717
      %v5760 = vadd.f32 %v5284, %v5720
      %v5761 = vadd.f32 %v5285, %v5725
      %v5762 = vadd.f32 %v5286, %v5728
      %v5763 = vld [vmem:[%s299] sm:$0x1]
      %v5765 = vlaneseq
      %v5766 = vshrl.u32 %v5765, 7
      %v5767 = vsub.s32 0, %v5766
      %v5768 = vrot.slane %v5763, %v5767
      %v5770 = vadd.f32 %v5731, %v5768
      %v5771 = vadd.f32 %v5732, %v5768
      %v5772 = vadd.f32 %v5733, %v5768
      %v5773 = vadd.f32 %v5734, %v5768
      %v5774 = vadd.f32 %v5735, %v5768
      %v5775 = vadd.f32 %v5736, %v5768
      %v5776 = vadd.f32 %v5737, %v5768
      %v5777 = vadd.f32 %v5738, %v5768
      %v5778 = vadd.f32 %v5739, %v5768
      %v5779 = vadd.f32 %v5740, %v5768
      %v5780 = vadd.f32 %v5741, %v5768
      %v5781 = vadd.f32 %v5742, %v5768
      %v5782 = vadd.f32 %v5743, %v5768
      %v5783 = vadd.f32 %v5744, %v5768
      %v5784 = vadd.f32 %v5745, %v5768
      %v5785 = vadd.f32 %v5746, %v5768
      %v5786 = vadd.f32 %v5747, %v5768
      %v5787 = vadd.f32 %v5748, %v5768
      %v5788 = vadd.f32 %v5749, %v5768
      %v5789 = vadd.f32 %v5750, %v5768
      %v5790 = vadd.f32 %v5751, %v5768
      %v5791 = vadd.f32 %v5752, %v5768
      %v5792 = vadd.f32 %v5753, %v5768
      %v5793 = vadd.f32 %v5754, %v5768
      %v5794 = vadd.f32 %v5755, %v5768
      %v5795 = vadd.f32 %v5756, %v5768
      %v5796 = vadd.f32 %v5757, %v5768
      %v5797 = vadd.f32 %v5758, %v5768
      %v5798 = vadd.f32 %v5759, %v5768
      %v5799 = vadd.f32 %v5760, %v5768
      %v5800 = vadd.f32 %v5761, %v5768
      %v5801 = vadd.f32 %v5762, %v5768
      %vm5802 = vcmask 130048
      %5803 = vst.msk [vmem:[%s307] sm:$0xff] %vm5802, %v5770
      %5804 = vst.msk [vmem:[%s307 + $0x8] sm:$0xff] %vm5802, %v5771
      %5805 = vst.msk [vmem:[%s307 + $0x10] sm:$0xff] %vm5802, %v5772
      %5806 = vst.msk [vmem:[%s307 + $0x18] sm:$0xff] %vm5802, %v5773
      %5807 = vst.msk [vmem:[%s307 + $0x20] sm:$0xff] %vm5802, %v5774
      %5808 = vst.msk [vmem:[%s307 + $0x28] sm:$0xff] %vm5802, %v5775
      %5809 = vst.msk [vmem:[%s307 + $0x30] sm:$0xff] %vm5802, %v5776
      %5810 = vst.msk [vmem:[%s307 + $0x38] sm:$0xff] %vm5802, %v5777
      %5811 = vst.msk [vmem:[%s307 + $0x40] sm:$0xff] %vm5802, %v5778
      %5812 = vst.msk [vmem:[%s307 + $0x48] sm:$0xff] %vm5802, %v5779
      %5813 = vst.msk [vmem:[%s307 + $0x50] sm:$0xff] %vm5802, %v5780
      %5814 = vst.msk [vmem:[%s307 + $0x58] sm:$0xff] %vm5802, %v5781
      %5815 = vst.msk [vmem:[%s307 + $0x60] sm:$0xff] %vm5802, %v5782
      %5816 = vst.msk [vmem:[%s307 + $0x68] sm:$0xff] %vm5802, %v5783
      %5817 = vst.msk [vmem:[%s307 + $0x70] sm:$0xff] %vm5802, %v5784
      %5818 = vst.msk [vmem:[%s307 + $0x78] sm:$0xff] %vm5802, %v5785
      %5819 = vst.msk [vmem:[%s307 + $0x80] sm:$0xff] %vm5802, %v5786
      %5820 = vst.msk [vmem:[%s307 + $0x88] sm:$0xff] %vm5802, %v5787
      %5821 = vst.msk [vmem:[%s307 + $0x90] sm:$0xff] %vm5802, %v5788
      %5822 = vst.msk [vmem:[%s307 + $0x98] sm:$0xff] %vm5802, %v5789
      %5823 = vst.msk [vmem:[%s307 + $0xa0] sm:$0xff] %vm5802, %v5790
      %5824 = vst.msk [vmem:[%s307 + $0xa8] sm:$0xff] %vm5802, %v5791
      %5825 = vst.msk [vmem:[%s307 + $0xb0] sm:$0xff] %vm5802, %v5792
      %5826 = vst.msk [vmem:[%s307 + $0xb8] sm:$0xff] %vm5802, %v5793
      %5827 = vst.msk [vmem:[%s307 + $0xc0] sm:$0xff] %vm5802, %v5794
      %5828 = vst.msk [vmem:[%s307 + $0xc8] sm:$0xff] %vm5802, %v5795
      %5829 = vst.msk [vmem:[%s307 + $0xd0] sm:$0xff] %vm5802, %v5796
      %5830 = vst.msk [vmem:[%s307 + $0xd8] sm:$0xff] %vm5802, %v5797
      %5831 = vst.msk [vmem:[%s307 + $0xe0] sm:$0xff] %vm5802, %v5798
      %5832 = vst.msk [vmem:[%s307 + $0xe8] sm:$0xff] %vm5802, %v5799
      %5833 = vst.msk [vmem:[%s307 + $0xf0] sm:$0xff] %vm5802, %v5800
      %5834 = vst.msk [vmem:[%s307 + $0xf8] sm:$0xff] %vm5802, %v5801
      %p5835 = scmp.lt.s32.totalorder %s21, 3
      %s5836 = scalar_select %p5835, %s21, 3
      %p5837 = scmp.lt.s32.totalorder %s22, 0
      %s5838 = scalar_select %p5837, %s22, 0
      %s5839 = smul.addr %s5836, 32
      %s5840 = sadd.s32 %s5838, %s5839
      %s5841 = smul.addr %s5840, 8
      %s5842 = scalar_lea.vmem %s6, %s5841
      // Predicated region
      $region49: #{tpu_custom_call.1} parent=43 // pred_check
        %p5843 = pneg %p190
      $region50: #{tpu_custom_call.1} parent=43 // pred_check_branch
        %5845 = sbr.rel (%p5843) target = $region52
      $region51: #{tpu_custom_call.1} parent=43 // pred_region
        _
      $region52: #{tpu_custom_call.1} parent=43 // pred_fallthru
        _
    $region44: #{tpu_custom_call.1} parent=5 // pred_fallthru
      _
    %p5846 = scmp.le.s32.totalorder 2, %s12
    // Predicated region
    $region53: #{tpu_custom_call.1} parent=5 // pred_check
      %p5847 = pneg %p5846
    $region54: #{tpu_custom_call.1} parent=5 // pred_check_branch
      %5849 = sbr.rel (%p5847) target = $region56
    $region55: #{tpu_custom_call.1} parent=5 // pred_region
      %s5850 = ssub.s32 %s12, 2
      // Predicated region
      $region57: #{tpu_custom_call.1} parent=55 // pred_check
        %p5851 = pneg %p196
      $region58: #{tpu_custom_call.1} parent=55 // pred_check_branch
        %5853 = sbr.rel (%p5851) target = $region60
      $region59: #{tpu_custom_call.1} parent=55 // pred_region
        %p5854 = scmp.lt.s32.totalorder %s23, 3
        %s5855 = scalar_select %p5854, %s23, 3
        %p5856 = scmp.lt.s32.totalorder %s24, 0
        %s5857 = scalar_select %p5856, %s24, 0
        %s5858 = smul.addr %s5855, 32
        %s5859 = sadd.s32 %s5857, %s5858
        %s5860 = smul.addr %s5859, 8
        %s5861 = scalar_lea.vmem %s6, %s5860
      $region60: #{tpu_custom_call.1} parent=55 // pred_fallthru
        _
    $region56: #{tpu_custom_call.1} parent=5 // pred_fallthru
      _
  $region6: #{tpu_custom_call.1} parent=0 // loop_footer
    %s16 = sadd.s32 1, %s12
  $region7: #{tpu_custom_call.1} parent=0 // loop_footer_branch
    %11 = sbr.rel target = $region3
  $region8: #{tpu_custom_call.1} parent=0 // loop_exit
    _

</llo_original>
